<compile_context>
chip_gen: v7x
topology: tpu7x:2x2x1
jax: 0.10.0
libtpu: 0.0.40
codegen_flags: <defaults>
</compile_context>

<pallas_src>
import jax
import jax.numpy as jnp
from jax import lax
from jax.experimental import pallas as pl
from jax.experimental.pallas import tpu as pltpu

# ----------------------------- config (small) --------------------------------
BATCH = 2
FRAMES = 4                                  # sequence length fed to the LSTM
IMG_C, IMG_H, IMG_W = 3, 16, 16
PATCH = 4
P = (IMG_H // PATCH) * (IMG_W // PATCH)     # spatial positions after the trunk
DP = IMG_C * PATCH * PATCH                  # raw patch feature dim (48)
LANE = 128
DP_PAD = 128                                # zero-padded patch dim (MXU-aligned K)
TRUNK_C = 1280                              # efficientnet_b1 feature channels (module-fixed)
FEAT = 128                                  # 1x1-conv output / LSTM input (module-fixed)
HIDDEN = 128                                # nn.LSTM hidden (module default 512, shrunk for small test)
FC1 = 64
NUM_CLASSES = 1
BN_EPS = 1e-5


# ----------------------------- fused kernel ----------------------------------
def fused_kernel(patch_ref, pool_ref, wtrunk_ref, whead_ref, bnb_ref,
                 wih0_ref, whh0_ref, b0_ref, w1cat_ref, b1_ref,
                 fc1w_ref, fc1b_ref, fc2w_ref, fc2b_ref, out_ref):
    H = HIDDEN
    B = BATCH
    T = FRAMES

    # ---------------- CNN head (trunk stand-in + module head) ----------------
    # TODO(synk): pretrained EfficientNet-B1 trunk not implemented; patch-linear
    # projection + Swish stand-in producing the 1280-channel feature map.
    t = jnp.dot(patch_ref[...], wtrunk_ref[...],
                preferred_element_type=jnp.float32)              # (T*B*P, 1280)
    t = t * jax.nn.sigmoid(t)                                    # Swish
    # 1x1 Conv2d(1280->128, bias=False) with BatchNorm2d folded in (weight scaled
    # at init; single fused bias here).
    y = jnp.dot(t.astype(jnp.bfloat16), whead_ref[...],
                preferred_element_type=jnp.float32)              # (T*B*P, 128)
    y = y + bnb_ref[...]
    y = y * jax.nn.sigmoid(y)                                    # Swish
    # AdaptiveAvgPool2d((1,1)) as a block-averaging matmul; rows come out
    # time-major: row = t*B + b.
    feat = jnp.dot(pool_ref[...], y.astype(jnp.bfloat16),
                   preferred_element_type=jnp.float32)           # (T*B, 128)

    # ------------- 2-layer LSTM; only top-layer h at the last step -----------
    # Layer-0 input projection for all time steps in one matmul (off the
    # serial recurrence path).  Gate order i, f, g, o (PyTorch).
    x_proj = (jnp.dot(feat.astype(jnp.bfloat16), wih0_ref[...],
                      preferred_element_type=jnp.float32)
              + b0_ref[...])                                     # (T*B, 4H)

    # Hoist recurrent weights / biases out of the unrolled loop.
    whh0 = whh0_ref[...]                                         # (H, 4H) bf16
    w1cat = w1cat_ref[...]                                       # (2H, 4H) bf16
    b1 = b1_ref[...]                                             # (1, 4H) f32

    def gates(g, c_prev):
        i = jax.nn.sigmoid(g[:, 0 * H:1 * H])
        f = jax.nn.sigmoid(g[:, 1 * H:2 * H])
        gg = jnp.tanh(g[:, 2 * H:3 * H])
        o = jax.nn.sigmoid(g[:, 3 * H:4 * H])
        c_new = f * c_prev + i * gg
        h_new = o * jnp.tanh(c_new)
        return h_new, c_new

    z = jnp.zeros((B, H), jnp.float32)
    h0, c0, h1, c1 = z, z, z, z
    for ti in range(T):                                          # static unroll (T=4)
        # layer 0: only the recurrent matmul is on the serial path
        g0 = (x_proj[ti * B:(ti + 1) * B, :]
              + jnp.dot(h0.astype(jnp.bfloat16), whh0,
                        preferred_element_type=jnp.float32))
        h0, c0 = gates(g0, c0)
        # layer 1: single K=256 matmul on [h0, h1_prev]
        hcat = jnp.concatenate([h0, h1], axis=1).astype(jnp.bfloat16)   # (B, 2H)
        g1 = jnp.dot(hcat, w1cat, preferred_element_type=jnp.float32) + b1
        h1, c1 = gates(g1, c1)

    # -------- FC head: Linear(H,64) -> ReLU -> Linear(64,1), lane-padded -----
    zz = (jnp.dot(h1.astype(jnp.bfloat16), fc1w_ref[...],
                  preferred_element_type=jnp.float32) + fc1b_ref[...])   # (B, 128)
    zz = jnp.maximum(zz, 0.0)
    out_ref[...] = (jnp.dot(zz.astype(jnp.bfloat16), fc2w_ref[...],
                            preferred_element_type=jnp.float32)
                    + fc2b_ref[...])                                     # (B, 128)


def fused_call(patches, params):
    n_in = 14
    return pl.pallas_call(
        fused_kernel,
        out_shape=jax.ShapeDtypeStruct((BATCH, LANE), jnp.float32),
        in_specs=[pl.BlockSpec(memory_space=pltpu.MemorySpace.VMEM)] * n_in,
        out_specs=pl.BlockSpec(memory_space=pltpu.MemorySpace.VMEM),
    )(patches, params["pool"], params["w_trunk"], params["w_head"],
      params["bn_bias"],
      params["wih0"], params["whh0"], params["b0"],
      params["w1cat"], params["b1"],
      params["fc1_w"], params["fc1_b"], params["fc2_w"], params["fc2_b"])


# ----------------------------- glue -------------------------------------------
def patchify(x):
    # x: (B, F, C, H, W) NCHW -> time-major, lane-dense patches (F*B*P, DP_PAD) bf16
    B, F, C, H, W = x.shape
    x = jnp.transpose(x, (1, 0, 2, 3, 4))                        # (F, B, C, H, W)
    x = x.reshape(F * B, C, H // PATCH, PATCH, W // PATCH, PATCH)
    x = jnp.transpose(x, (0, 2, 4, 1, 3, 5))                     # (FB, Hp, Wp, C, ph, pw)
    x = x.reshape(F * B * P, DP)
    x = jnp.pad(x, ((0, 0), (0, DP_PAD - DP)))                   # zero-pad K to 128
    return x.astype(jnp.bfloat16)


def init_params(key):
    ks = jax.random.split(key, 12)
    scale = 0.05
    f32 = jnp.float32
    bf16 = jnp.bfloat16

    # ---- backbone stand-in + module head ----
    w_trunk = scale * jax.random.normal(ks[0], (DP_PAD, TRUNK_C), f32)
    w_head = scale * jax.random.normal(ks[1], (TRUNK_C, FEAT), f32)
    bn_gamma = jnp.ones((FEAT,), f32)
    bn_beta = jnp.zeros((FEAT,), f32)
    bn_mean = jnp.zeros((FEAT,), f32)
    bn_var = jnp.ones((FEAT,), f32)
    # Fold BatchNorm (eval form, running stats) into the 1x1-conv weight + bias.
    bn_scale = bn_gamma * lax.rsqrt(bn_var + BN_EPS)
    w_head_f = w_head * bn_scale[None, :]
    bn_bias = (bn_beta - bn_mean * bn_scale)[None, :]

    # AdaptiveAvgPool2d((1,1)) as block-averaging matrix (time-major frame rows).
    pool = jnp.kron(jnp.eye(FRAMES * BATCH, dtype=f32),
                    jnp.full((1, P), 1.0 / P, f32))              # (FB, FB*P)

    # ---- LSTM (weights stored transposed vs. PyTorch: (in, 4H); b_ih+b_hh folded)
    wih0 = scale * jax.random.normal(ks[2], (FEAT, 4 * HIDDEN), f32)
    whh0 = scale * jax.random.normal(ks[3], (HIDDEN, 4 * HIDDEN), f32)
    b0 = scale * jax.random.normal(ks[4], (1, 4 * HIDDEN), f32)
    wih1 = scale * jax.random.normal(ks[5], (HIDDEN, 4 * HIDDEN), f32)
    whh1 = scale * jax.random.normal(ks[6], (HIDDEN, 4 * HIDDEN), f32)
    w1cat = jnp.concatenate([wih1, whh1], axis=0)                # (2H, 4H), acts on [h0, h1_prev]
    b1 = scale * jax.random.normal(ks[7], (1, 4 * HIDDEN), f32)

    # ---- FC head, lane-padded to 128 (padding is mathematically inert) ----
    fc1_w = scale * jax.random.normal(ks[8], (HIDDEN, FC1), f32)
    fc1_b = scale * jax.random.normal(ks[9], (1, FC1), f32)
    fc2_w = scale * jax.random.normal(ks[10], (FC1, NUM_CLASSES), f32)
    fc2_b = scale * jax.random.normal(ks[11], (1, NUM_CLASSES), f32)
    fc1_w_p = jnp.zeros((HIDDEN, LANE), f32).at[:, :FC1].set(fc1_w)
    fc1_b_p = jnp.zeros((1, LANE), f32).at[:, :FC1].set(fc1_b)
    fc2_w_p = jnp.zeros((LANE, LANE), f32).at[:FC1, :NUM_CLASSES].set(fc2_w)
    fc2_b_p = jnp.zeros((1, LANE), f32).at[:, :NUM_CLASSES].set(fc2_b)

    return {
        # bf16 for MXU operands, f32 for biases
        "w_trunk": w_trunk.astype(bf16),
        "w_head": w_head_f.astype(bf16),
        "bn_bias": bn_bias,
        "pool": pool.astype(bf16),
        "wih0": wih0.astype(bf16),
        "whh0": whh0.astype(bf16),
        "b0": b0,
        "w1cat": w1cat.astype(bf16),
        "b1": b1,
        "fc1_w": fc1_w_p.astype(bf16),
        "fc1_b": fc1_b_p,
        "fc2_w": fc2_w_p.astype(bf16),
        "fc2_b": fc2_b_p,
    }


@jax.jit
def forward(x, params):
    patches = patchify(x.astype(jnp.float32))                    # (F*B*P, 128) bf16
    out_pad = fused_call(patches, params)                        # (B, 128) lane-dense
    return out_pad[:, :NUM_CLASSES]                              # (B, 1)


if __name__ == "__main__":
    key = jax.random.PRNGKey(0)
    kx, kp = jax.random.split(key)
    x = jax.random.normal(kx, (BATCH, FRAMES, IMG_C, IMG_H, IMG_W), jnp.float32)
    params = init_params(kp)

    result = forward(x, params)
    jax.block_until_ready(result)
    assert result.shape == (BATCH, NUM_CLASSES), result.shape
    print("KERNEL_OK")
</pallas_src>

<mosaic_0001>
module attributes {stable_mosaic.version = 11 : i64} {
  func.func @fused_kernel(%arg0: memref<128x128xbf16, #tpu.memory_space<vmem>>, %arg1: memref<8x128xbf16, #tpu.memory_space<vmem>>, %arg2: memref<128x1280xbf16, #tpu.memory_space<vmem>>, %arg3: memref<1280x128xbf16, #tpu.memory_space<vmem>>, %arg4: memref<1x128xf32, #tpu.memory_space<vmem>>, %arg5: memref<128x512xbf16, #tpu.memory_space<vmem>>, %arg6: memref<128x512xbf16, #tpu.memory_space<vmem>>, %arg7: memref<1x512xf32, #tpu.memory_space<vmem>>, %arg8: memref<256x512xbf16, #tpu.memory_space<vmem>>, %arg9: memref<1x512xf32, #tpu.memory_space<vmem>>, %arg10: memref<128x128xbf16, #tpu.memory_space<vmem>>, %arg11: memref<1x128xf32, #tpu.memory_space<vmem>>, %arg12: memref<128x128xbf16, #tpu.memory_space<vmem>>, %arg13: memref<1x128xf32, #tpu.memory_space<vmem>>, %arg14: memref<2x128xf32, #tpu.memory_space<vmem>>) attributes {dimension_semantics = [], scalar_prefetch = 0 : i64, scratch_operands = 0 : i64, tpu.core_type = #tpu.core_type<tc>} {
    %c0 = arith.constant 0 : index
    %c0_0 = arith.constant 0 : index
    %0 = vector.load %arg0[%c0, %c0_0] : memref<128x128xbf16, #tpu.memory_space<vmem>>, vector<128x128xbf16>
    %c0_1 = arith.constant 0 : index
    %c0_2 = arith.constant 0 : index
    %1 = vector.load %arg2[%c0_1, %c0_2] : memref<128x1280xbf16, #tpu.memory_space<vmem>>, vector<128x1280xbf16>
    %cst = arith.constant dense<0.000000e+00> : vector<128x1280xf32>
    %2 = tpu.matmul %0, %1, %cst {dimension_numbers = #tpu.dot_dimension_numbers<[1], [0], [0], [1], [0, 0, 1, 1], [], []>} : vector<128x128xbf16>, vector<128x1280xbf16>, vector<128x1280xf32> -> vector<128x1280xf32>
    %3 = arith.negf %2 : vector<128x1280xf32>
    %4 = math.exp %3 : vector<128x1280xf32>
    %cst_3 = arith.constant 1.000000e+00 : f32
    %5 = vector.broadcast %cst_3 : f32 to vector<128x1280xf32>
    %6 = arith.addf %5, %4 : vector<128x1280xf32>
    %7 = arith.divf %5, %6 : vector<128x1280xf32>
    %8 = arith.mulf %2, %7 : vector<128x1280xf32>
    %9 = arith.truncf %8 : vector<128x1280xf32> to vector<128x1280xbf16>
    %c0_4 = arith.constant 0 : index
    %c0_5 = arith.constant 0 : index
    %10 = vector.load %arg3[%c0_4, %c0_5] : memref<1280x128xbf16, #tpu.memory_space<vmem>>, vector<1280x128xbf16>
    %cst_6 = arith.constant dense<0.000000e+00> : vector<128x128xf32>
    %11 = tpu.matmul %9, %10, %cst_6 {dimension_numbers = #tpu.dot_dimension_numbers<[1], [0], [0], [1], [0, 0, 1, 1], [], []>} : vector<128x1280xbf16>, vector<1280x128xbf16>, vector<128x128xf32> -> vector<128x128xf32>
    %c0_7 = arith.constant 0 : index
    %c0_8 = arith.constant 0 : index
    %12 = vector.load %arg4[%c0_7, %c0_8] : memref<1x128xf32, #tpu.memory_space<vmem>>, vector<1x128xf32>
    %13 = vector.broadcast %12 : vector<1x128xf32> to vector<128x128xf32>
    %14 = arith.addf %11, %13 : vector<128x128xf32>
    %15 = arith.negf %14 : vector<128x128xf32>
    %16 = math.exp %15 : vector<128x128xf32>
    %cst_9 = arith.constant 1.000000e+00 : f32
    %17 = vector.broadcast %cst_9 : f32 to vector<128x128xf32>
    %18 = arith.addf %17, %16 : vector<128x128xf32>
    %19 = arith.divf %17, %18 : vector<128x128xf32>
    %20 = arith.mulf %14, %19 : vector<128x128xf32>
    %c0_10 = arith.constant 0 : index
    %c0_11 = arith.constant 0 : index
    %21 = vector.load %arg1[%c0_10, %c0_11] : memref<8x128xbf16, #tpu.memory_space<vmem>>, vector<8x128xbf16>
    %22 = arith.truncf %20 : vector<128x128xf32> to vector<128x128xbf16>
    %cst_12 = arith.constant dense<0.000000e+00> : vector<8x128xf32>
    %23 = tpu.matmul %21, %22, %cst_12 {dimension_numbers = #tpu.dot_dimension_numbers<[1], [0], [0], [1], [0, 0, 1, 1], [], []>} : vector<8x128xbf16>, vector<128x128xbf16>, vector<8x128xf32> -> vector<8x128xf32>
    %24 = arith.truncf %23 : vector<8x128xf32> to vector<8x128xbf16>
    %c0_13 = arith.constant 0 : index
    %c0_14 = arith.constant 0 : index
    %25 = vector.load %arg5[%c0_13, %c0_14] : memref<128x512xbf16, #tpu.memory_space<vmem>>, vector<128x512xbf16>
    %cst_15 = arith.constant dense<0.000000e+00> : vector<8x512xf32>
    %26 = tpu.matmul %24, %25, %cst_15 {dimension_numbers = #tpu.dot_dimension_numbers<[1], [0], [0], [1], [0, 0, 1, 1], [], []>} : vector<8x128xbf16>, vector<128x512xbf16>, vector<8x512xf32> -> vector<8x512xf32>
    %c0_16 = arith.constant 0 : index
    %c0_17 = arith.constant 0 : index
    %27 = vector.load %arg7[%c0_16, %c0_17] : memref<1x512xf32, #tpu.memory_space<vmem>>, vector<1x512xf32>
    %28 = vector.broadcast %27 : vector<1x512xf32> to vector<8x512xf32>
    %29 = arith.addf %26, %28 : vector<8x512xf32>
    %c0_18 = arith.constant 0 : index
    %c0_19 = arith.constant 0 : index
    %30 = vector.load %arg6[%c0_18, %c0_19] : memref<128x512xbf16, #tpu.memory_space<vmem>>, vector<128x512xbf16>
    %c0_20 = arith.constant 0 : index
    %c0_21 = arith.constant 0 : index
    %31 = vector.load %arg8[%c0_20, %c0_21] : memref<256x512xbf16, #tpu.memory_space<vmem>>, vector<256x512xbf16>
    %c0_22 = arith.constant 0 : index
    %c0_23 = arith.constant 0 : index
    %32 = vector.load %arg9[%c0_22, %c0_23] : memref<1x512xf32, #tpu.memory_space<vmem>>, vector<1x512xf32>
    %cst_24 = arith.constant 0.000000e+00 : f32
    %33 = vector.broadcast %cst_24 : f32 to vector<2x128xf32>
    %34 = vector.extract_strided_slice %29 {offsets = [0, 0], sizes = [2, 512], strides = [1, 1]} : vector<8x512xf32> to vector<2x512xf32>
    %35 = arith.truncf %33 : vector<2x128xf32> to vector<2x128xbf16>
    %cst_25 = arith.constant dense<0.000000e+00> : vector<2x512xf32>
    %36 = tpu.matmul %35, %30, %cst_25 {dimension_numbers = #tpu.dot_dimension_numbers<[1], [0], [0], [1], [0, 0, 1, 1], [], []>} : vector<2x128xbf16>, vector<128x512xbf16>, vector<2x512xf32> -> vector<2x512xf32>
    %37 = arith.addf %34, %36 : vector<2x512xf32>
    %38 = vector.extract_strided_slice %37 {offsets = [0, 0], sizes = [2, 128], strides = [1, 1]} : vector<2x512xf32> to vector<2x128xf32>
    %39 = arith.negf %38 : vector<2x128xf32>
    %40 = math.exp %39 : vector<2x128xf32>
    %cst_26 = arith.constant 1.000000e+00 : f32
    %41 = vector.broadcast %cst_26 : f32 to vector<2x128xf32>
    %42 = arith.addf %41, %40 : vector<2x128xf32>
    %43 = arith.divf %41, %42 : vector<2x128xf32>
    %44 = vector.extract_strided_slice %37 {offsets = [0, 128], sizes = [2, 128], strides = [1, 1]} : vector<2x512xf32> to vector<2x128xf32>
    %45 = arith.negf %44 : vector<2x128xf32>
    %46 = math.exp %45 : vector<2x128xf32>
    %cst_27 = arith.constant 1.000000e+00 : f32
    %47 = vector.broadcast %cst_27 : f32 to vector<2x128xf32>
    %48 = arith.addf %47, %46 : vector<2x128xf32>
    %49 = arith.divf %47, %48 : vector<2x128xf32>
    %50 = vector.extract_strided_slice %37 {offsets = [0, 256], sizes = [2, 128], strides = [1, 1]} : vector<2x512xf32> to vector<2x128xf32>
    %51 = math.tanh %50 : vector<2x128xf32>
    %52 = vector.extract_strided_slice %37 {offsets = [0, 384], sizes = [2, 128], strides = [1, 1]} : vector<2x512xf32> to vector<2x128xf32>
    %53 = arith.negf %52 : vector<2x128xf32>
    %54 = math.exp %53 : vector<2x128xf32>
    %cst_28 = arith.constant 1.000000e+00 : f32
    %55 = vector.broadcast %cst_28 : f32 to vector<2x128xf32>
    %56 = arith.addf %55, %54 : vector<2x128xf32>
    %57 = arith.divf %55, %56 : vector<2x128xf32>
    %58 = arith.mulf %49, %33 : vector<2x128xf32>
    %59 = arith.mulf %43, %51 : vector<2x128xf32>
    %60 = arith.addf %58, %59 : vector<2x128xf32>
    %61 = math.tanh %60 : vector<2x128xf32>
    %62 = arith.mulf %57, %61 : vector<2x128xf32>
    %63 = tpu.concatenate %62, %33 in 1 : vector<2x128xf32>, vector<2x128xf32> -> vector<2x256xf32>
    %64 = arith.truncf %63 : vector<2x256xf32> to vector<2x256xbf16>
    %cst_29 = arith.constant dense<0.000000e+00> : vector<2x512xf32>
    %65 = tpu.matmul %64, %31, %cst_29 {dimension_numbers = #tpu.dot_dimension_numbers<[1], [0], [0], [1], [0, 0, 1, 1], [], []>} : vector<2x256xbf16>, vector<256x512xbf16>, vector<2x512xf32> -> vector<2x512xf32>
    %66 = vector.broadcast %32 : vector<1x512xf32> to vector<2x512xf32>
    %67 = arith.addf %65, %66 : vector<2x512xf32>
    %68 = vector.extract_strided_slice %67 {offsets = [0, 0], sizes = [2, 128], strides = [1, 1]} : vector<2x512xf32> to vector<2x128xf32>
    %69 = arith.negf %68 : vector<2x128xf32>
    %70 = math.exp %69 : vector<2x128xf32>
    %cst_30 = arith.constant 1.000000e+00 : f32
    %71 = vector.broadcast %cst_30 : f32 to vector<2x128xf32>
    %72 = arith.addf %71, %70 : vector<2x128xf32>
    %73 = arith.divf %71, %72 : vector<2x128xf32>
    %74 = vector.extract_strided_slice %67 {offsets = [0, 128], sizes = [2, 128], strides = [1, 1]} : vector<2x512xf32> to vector<2x128xf32>
    %75 = arith.negf %74 : vector<2x128xf32>
    %76 = math.exp %75 : vector<2x128xf32>
    %cst_31 = arith.constant 1.000000e+00 : f32
    %77 = vector.broadcast %cst_31 : f32 to vector<2x128xf32>
    %78 = arith.addf %77, %76 : vector<2x128xf32>
    %79 = arith.divf %77, %78 : vector<2x128xf32>
    %80 = vector.extract_strided_slice %67 {offsets = [0, 256], sizes = [2, 128], strides = [1, 1]} : vector<2x512xf32> to vector<2x128xf32>
    %81 = math.tanh %80 : vector<2x128xf32>
    %82 = vector.extract_strided_slice %67 {offsets = [0, 384], sizes = [2, 128], strides = [1, 1]} : vector<2x512xf32> to vector<2x128xf32>
    %83 = arith.negf %82 : vector<2x128xf32>
    %84 = math.exp %83 : vector<2x128xf32>
    %cst_32 = arith.constant 1.000000e+00 : f32
    %85 = vector.broadcast %cst_32 : f32 to vector<2x128xf32>
    %86 = arith.addf %85, %84 : vector<2x128xf32>
    %87 = arith.divf %85, %86 : vector<2x128xf32>
    %88 = arith.mulf %79, %33 : vector<2x128xf32>
    %89 = arith.mulf %73, %81 : vector<2x128xf32>
    %90 = arith.addf %88, %89 : vector<2x128xf32>
    %91 = math.tanh %90 : vector<2x128xf32>
    %92 = arith.mulf %87, %91 : vector<2x128xf32>
    %93 = vector.extract_strided_slice %29 {offsets = [2, 0], sizes = [2, 512], strides = [1, 1]} : vector<8x512xf32> to vector<2x512xf32>
    %94 = arith.truncf %62 : vector<2x128xf32> to vector<2x128xbf16>
    %cst_33 = arith.constant dense<0.000000e+00> : vector<2x512xf32>
    %95 = tpu.matmul %94, %30, %cst_33 {dimension_numbers = #tpu.dot_dimension_numbers<[1], [0], [0], [1], [0, 0, 1, 1], [], []>} : vector<2x128xbf16>, vector<128x512xbf16>, vector<2x512xf32> -> vector<2x512xf32>
    %96 = arith.addf %93, %95 : vector<2x512xf32>
    %97 = vector.extract_strided_slice %96 {offsets = [0, 0], sizes = [2, 128], strides = [1, 1]} : vector<2x512xf32> to vector<2x128xf32>
    %98 = arith.negf %97 : vector<2x128xf32>
    %99 = math.exp %98 : vector<2x128xf32>
    %cst_34 = arith.constant 1.000000e+00 : f32
    %100 = vector.broadcast %cst_34 : f32 to vector<2x128xf32>
    %101 = arith.addf %100, %99 : vector<2x128xf32>
    %102 = arith.divf %100, %101 : vector<2x128xf32>
    %103 = vector.extract_strided_slice %96 {offsets = [0, 128], sizes = [2, 128], strides = [1, 1]} : vector<2x512xf32> to vector<2x128xf32>
    %104 = arith.negf %103 : vector<2x128xf32>
    %105 = math.exp %104 : vector<2x128xf32>
    %cst_35 = arith.constant 1.000000e+00 : f32
    %106 = vector.broadcast %cst_35 : f32 to vector<2x128xf32>
    %107 = arith.addf %106, %105 : vector<2x128xf32>
    %108 = arith.divf %106, %107 : vector<2x128xf32>
    %109 = vector.extract_strided_slice %96 {offsets = [0, 256], sizes = [2, 128], strides = [1, 1]} : vector<2x512xf32> to vector<2x128xf32>
    %110 = math.tanh %109 : vector<2x128xf32>
    %111 = vector.extract_strided_slice %96 {offsets = [0, 384], sizes = [2, 128], strides = [1, 1]} : vector<2x512xf32> to vector<2x128xf32>
    %112 = arith.negf %111 : vector<2x128xf32>
    %113 = math.exp %112 : vector<2x128xf32>
    %cst_36 = arith.constant 1.000000e+00 : f32
    %114 = vector.broadcast %cst_36 : f32 to vector<2x128xf32>
    %115 = arith.addf %114, %113 : vector<2x128xf32>
    %116 = arith.divf %114, %115 : vector<2x128xf32>
    %117 = arith.mulf %108, %60 : vector<2x128xf32>
    %118 = arith.mulf %102, %110 : vector<2x128xf32>
    %119 = arith.addf %117, %118 : vector<2x128xf32>
    %120 = math.tanh %119 : vector<2x128xf32>
    %121 = arith.mulf %116, %120 : vector<2x128xf32>
    %122 = tpu.concatenate %121, %92 in 1 : vector<2x128xf32>, vector<2x128xf32> -> vector<2x256xf32>
    %123 = arith.truncf %122 : vector<2x256xf32> to vector<2x256xbf16>
    %cst_37 = arith.constant dense<0.000000e+00> : vector<2x512xf32>
    %124 = tpu.matmul %123, %31, %cst_37 {dimension_numbers = #tpu.dot_dimension_numbers<[1], [0], [0], [1], [0, 0, 1, 1], [], []>} : vector<2x256xbf16>, vector<256x512xbf16>, vector<2x512xf32> -> vector<2x512xf32>
    %125 = vector.broadcast %32 : vector<1x512xf32> to vector<2x512xf32>
    %126 = arith.addf %124, %125 : vector<2x512xf32>
    %127 = vector.extract_strided_slice %126 {offsets = [0, 0], sizes = [2, 128], strides = [1, 1]} : vector<2x512xf32> to vector<2x128xf32>
    %128 = arith.negf %127 : vector<2x128xf32>
    %129 = math.exp %128 : vector<2x128xf32>
    %cst_38 = arith.constant 1.000000e+00 : f32
    %130 = vector.broadcast %cst_38 : f32 to vector<2x128xf32>
    %131 = arith.addf %130, %129 : vector<2x128xf32>
    %132 = arith.divf %130, %131 : vector<2x128xf32>
    %133 = vector.extract_strided_slice %126 {offsets = [0, 128], sizes = [2, 128], strides = [1, 1]} : vector<2x512xf32> to vector<2x128xf32>
    %134 = arith.negf %133 : vector<2x128xf32>
    %135 = math.exp %134 : vector<2x128xf32>
    %cst_39 = arith.constant 1.000000e+00 : f32
    %136 = vector.broadcast %cst_39 : f32 to vector<2x128xf32>
    %137 = arith.addf %136, %135 : vector<2x128xf32>
    %138 = arith.divf %136, %137 : vector<2x128xf32>
    %139 = vector.extract_strided_slice %126 {offsets = [0, 256], sizes = [2, 128], strides = [1, 1]} : vector<2x512xf32> to vector<2x128xf32>
    %140 = math.tanh %139 : vector<2x128xf32>
    %141 = vector.extract_strided_slice %126 {offsets = [0, 384], sizes = [2, 128], strides = [1, 1]} : vector<2x512xf32> to vector<2x128xf32>
    %142 = arith.negf %141 : vector<2x128xf32>
    %143 = math.exp %142 : vector<2x128xf32>
    %cst_40 = arith.constant 1.000000e+00 : f32
    %144 = vector.broadcast %cst_40 : f32 to vector<2x128xf32>
    %145 = arith.addf %144, %143 : vector<2x128xf32>
    %146 = arith.divf %144, %145 : vector<2x128xf32>
    %147 = arith.mulf %138, %90 : vector<2x128xf32>
    %148 = arith.mulf %132, %140 : vector<2x128xf32>
    %149 = arith.addf %147, %148 : vector<2x128xf32>
    %150 = math.tanh %149 : vector<2x128xf32>
    %151 = arith.mulf %146, %150 : vector<2x128xf32>
    %152 = vector.extract_strided_slice %29 {offsets = [4, 0], sizes = [2, 512], strides = [1, 1]} : vector<8x512xf32> to vector<2x512xf32>
    %153 = arith.truncf %121 : vector<2x128xf32> to vector<2x128xbf16>
    %cst_41 = arith.constant dense<0.000000e+00> : vector<2x512xf32>
    %154 = tpu.matmul %153, %30, %cst_41 {dimension_numbers = #tpu.dot_dimension_numbers<[1], [0], [0], [1], [0, 0, 1, 1], [], []>} : vector<2x128xbf16>, vector<128x512xbf16>, vector<2x512xf32> -> vector<2x512xf32>
    %155 = arith.addf %152, %154 : vector<2x512xf32>
    %156 = vector.extract_strided_slice %155 {offsets = [0, 0], sizes = [2, 128], strides = [1, 1]} : vector<2x512xf32> to vector<2x128xf32>
    %157 = arith.negf %156 : vector<2x128xf32>
    %158 = math.exp %157 : vector<2x128xf32>
    %cst_42 = arith.constant 1.000000e+00 : f32
    %159 = vector.broadcast %cst_42 : f32 to vector<2x128xf32>
    %160 = arith.addf %159, %158 : vector<2x128xf32>
    %161 = arith.divf %159, %160 : vector<2x128xf32>
    %162 = vector.extract_strided_slice %155 {offsets = [0, 128], sizes = [2, 128], strides = [1, 1]} : vector<2x512xf32> to vector<2x128xf32>
    %163 = arith.negf %162 : vector<2x128xf32>
    %164 = math.exp %163 : vector<2x128xf32>
    %cst_43 = arith.constant 1.000000e+00 : f32
    %165 = vector.broadcast %cst_43 : f32 to vector<2x128xf32>
    %166 = arith.addf %165, %164 : vector<2x128xf32>
    %167 = arith.divf %165, %166 : vector<2x128xf32>
    %168 = vector.extract_strided_slice %155 {offsets = [0, 256], sizes = [2, 128], strides = [1, 1]} : vector<2x512xf32> to vector<2x128xf32>
    %169 = math.tanh %168 : vector<2x128xf32>
    %170 = vector.extract_strided_slice %155 {offsets = [0, 384], sizes = [2, 128], strides = [1, 1]} : vector<2x512xf32> to vector<2x128xf32>
    %171 = arith.negf %170 : vector<2x128xf32>
    %172 = math.exp %171 : vector<2x128xf32>
    %cst_44 = arith.constant 1.000000e+00 : f32
    %173 = vector.broadcast %cst_44 : f32 to vector<2x128xf32>
    %174 = arith.addf %173, %172 : vector<2x128xf32>
    %175 = arith.divf %173, %174 : vector<2x128xf32>
    %176 = arith.mulf %167, %119 : vector<2x128xf32>
    %177 = arith.mulf %161, %169 : vector<2x128xf32>
    %178 = arith.addf %176, %177 : vector<2x128xf32>
    %179 = math.tanh %178 : vector<2x128xf32>
    %180 = arith.mulf %175, %179 : vector<2x128xf32>
    %181 = tpu.concatenate %180, %151 in 1 : vector<2x128xf32>, vector<2x128xf32> -> vector<2x256xf32>
    %182 = arith.truncf %181 : vector<2x256xf32> to vector<2x256xbf16>
    %cst_45 = arith.constant dense<0.000000e+00> : vector<2x512xf32>
    %183 = tpu.matmul %182, %31, %cst_45 {dimension_numbers = #tpu.dot_dimension_numbers<[1], [0], [0], [1], [0, 0, 1, 1], [], []>} : vector<2x256xbf16>, vector<256x512xbf16>, vector<2x512xf32> -> vector<2x512xf32>
    %184 = vector.broadcast %32 : vector<1x512xf32> to vector<2x512xf32>
    %185 = arith.addf %183, %184 : vector<2x512xf32>
    %186 = vector.extract_strided_slice %185 {offsets = [0, 0], sizes = [2, 128], strides = [1, 1]} : vector<2x512xf32> to vector<2x128xf32>
    %187 = arith.negf %186 : vector<2x128xf32>
    %188 = math.exp %187 : vector<2x128xf32>
    %cst_46 = arith.constant 1.000000e+00 : f32
    %189 = vector.broadcast %cst_46 : f32 to vector<2x128xf32>
    %190 = arith.addf %189, %188 : vector<2x128xf32>
    %191 = arith.divf %189, %190 : vector<2x128xf32>
    %192 = vector.extract_strided_slice %185 {offsets = [0, 128], sizes = [2, 128], strides = [1, 1]} : vector<2x512xf32> to vector<2x128xf32>
    %193 = arith.negf %192 : vector<2x128xf32>
    %194 = math.exp %193 : vector<2x128xf32>
    %cst_47 = arith.constant 1.000000e+00 : f32
    %195 = vector.broadcast %cst_47 : f32 to vector<2x128xf32>
    %196 = arith.addf %195, %194 : vector<2x128xf32>
    %197 = arith.divf %195, %196 : vector<2x128xf32>
    %198 = vector.extract_strided_slice %185 {offsets = [0, 256], sizes = [2, 128], strides = [1, 1]} : vector<2x512xf32> to vector<2x128xf32>
    %199 = math.tanh %198 : vector<2x128xf32>
    %200 = vector.extract_strided_slice %185 {offsets = [0, 384], sizes = [2, 128], strides = [1, 1]} : vector<2x512xf32> to vector<2x128xf32>
    %201 = arith.negf %200 : vector<2x128xf32>
    %202 = math.exp %201 : vector<2x128xf32>
    %cst_48 = arith.constant 1.000000e+00 : f32
    %203 = vector.broadcast %cst_48 : f32 to vector<2x128xf32>
    %204 = arith.addf %203, %202 : vector<2x128xf32>
    %205 = arith.divf %203, %204 : vector<2x128xf32>
    %206 = arith.mulf %197, %149 : vector<2x128xf32>
    %207 = arith.mulf %191, %199 : vector<2x128xf32>
    %208 = arith.addf %206, %207 : vector<2x128xf32>
    %209 = math.tanh %208 : vector<2x128xf32>
    %210 = arith.mulf %205, %209 : vector<2x128xf32>
    %211 = vector.extract_strided_slice %29 {offsets = [6, 0], sizes = [2, 512], strides = [1, 1]} : vector<8x512xf32> to vector<2x512xf32>
    %212 = arith.truncf %180 : vector<2x128xf32> to vector<2x128xbf16>
    %cst_49 = arith.constant dense<0.000000e+00> : vector<2x512xf32>
    %213 = tpu.matmul %212, %30, %cst_49 {dimension_numbers = #tpu.dot_dimension_numbers<[1], [0], [0], [1], [0, 0, 1, 1], [], []>} : vector<2x128xbf16>, vector<128x512xbf16>, vector<2x512xf32> -> vector<2x512xf32>
    %214 = arith.addf %211, %213 : vector<2x512xf32>
    %215 = vector.extract_strided_slice %214 {offsets = [0, 0], sizes = [2, 128], strides = [1, 1]} : vector<2x512xf32> to vector<2x128xf32>
    %216 = arith.negf %215 : vector<2x128xf32>
    %217 = math.exp %216 : vector<2x128xf32>
    %cst_50 = arith.constant 1.000000e+00 : f32
    %218 = vector.broadcast %cst_50 : f32 to vector<2x128xf32>
    %219 = arith.addf %218, %217 : vector<2x128xf32>
    %220 = arith.divf %218, %219 : vector<2x128xf32>
    %221 = vector.extract_strided_slice %214 {offsets = [0, 128], sizes = [2, 128], strides = [1, 1]} : vector<2x512xf32> to vector<2x128xf32>
    %222 = arith.negf %221 : vector<2x128xf32>
    %223 = math.exp %222 : vector<2x128xf32>
    %cst_51 = arith.constant 1.000000e+00 : f32
    %224 = vector.broadcast %cst_51 : f32 to vector<2x128xf32>
    %225 = arith.addf %224, %223 : vector<2x128xf32>
    %226 = arith.divf %224, %225 : vector<2x128xf32>
    %227 = vector.extract_strided_slice %214 {offsets = [0, 256], sizes = [2, 128], strides = [1, 1]} : vector<2x512xf32> to vector<2x128xf32>
    %228 = math.tanh %227 : vector<2x128xf32>
    %229 = vector.extract_strided_slice %214 {offsets = [0, 384], sizes = [2, 128], strides = [1, 1]} : vector<2x512xf32> to vector<2x128xf32>
    %230 = arith.negf %229 : vector<2x128xf32>
    %231 = math.exp %230 : vector<2x128xf32>
    %cst_52 = arith.constant 1.000000e+00 : f32
    %232 = vector.broadcast %cst_52 : f32 to vector<2x128xf32>
    %233 = arith.addf %232, %231 : vector<2x128xf32>
    %234 = arith.divf %232, %233 : vector<2x128xf32>
    %235 = arith.mulf %226, %178 : vector<2x128xf32>
    %236 = arith.mulf %220, %228 : vector<2x128xf32>
    %237 = arith.addf %235, %236 : vector<2x128xf32>
    %238 = math.tanh %237 : vector<2x128xf32>
    %239 = arith.mulf %234, %238 : vector<2x128xf32>
    %240 = tpu.concatenate %239, %210 in 1 : vector<2x128xf32>, vector<2x128xf32> -> vector<2x256xf32>
    %241 = arith.truncf %240 : vector<2x256xf32> to vector<2x256xbf16>
    %cst_53 = arith.constant dense<0.000000e+00> : vector<2x512xf32>
    %242 = tpu.matmul %241, %31, %cst_53 {dimension_numbers = #tpu.dot_dimension_numbers<[1], [0], [0], [1], [0, 0, 1, 1], [], []>} : vector<2x256xbf16>, vector<256x512xbf16>, vector<2x512xf32> -> vector<2x512xf32>
    %243 = vector.broadcast %32 : vector<1x512xf32> to vector<2x512xf32>
    %244 = arith.addf %242, %243 : vector<2x512xf32>
    %245 = vector.extract_strided_slice %244 {offsets = [0, 0], sizes = [2, 128], strides = [1, 1]} : vector<2x512xf32> to vector<2x128xf32>
    %246 = arith.negf %245 : vector<2x128xf32>
    %247 = math.exp %246 : vector<2x128xf32>
    %cst_54 = arith.constant 1.000000e+00 : f32
    %248 = vector.broadcast %cst_54 : f32 to vector<2x128xf32>
    %249 = arith.addf %248, %247 : vector<2x128xf32>
    %250 = arith.divf %248, %249 : vector<2x128xf32>
    %251 = vector.extract_strided_slice %244 {offsets = [0, 128], sizes = [2, 128], strides = [1, 1]} : vector<2x512xf32> to vector<2x128xf32>
    %252 = arith.negf %251 : vector<2x128xf32>
    %253 = math.exp %252 : vector<2x128xf32>
    %cst_55 = arith.constant 1.000000e+00 : f32
    %254 = vector.broadcast %cst_55 : f32 to vector<2x128xf32>
    %255 = arith.addf %254, %253 : vector<2x128xf32>
    %256 = arith.divf %254, %255 : vector<2x128xf32>
    %257 = vector.extract_strided_slice %244 {offsets = [0, 256], sizes = [2, 128], strides = [1, 1]} : vector<2x512xf32> to vector<2x128xf32>
    %258 = math.tanh %257 : vector<2x128xf32>
    %259 = vector.extract_strided_slice %244 {offsets = [0, 384], sizes = [2, 128], strides = [1, 1]} : vector<2x512xf32> to vector<2x128xf32>
    %260 = arith.negf %259 : vector<2x128xf32>
    %261 = math.exp %260 : vector<2x128xf32>
    %cst_56 = arith.constant 1.000000e+00 : f32
    %262 = vector.broadcast %cst_56 : f32 to vector<2x128xf32>
    %263 = arith.addf %262, %261 : vector<2x128xf32>
    %264 = arith.divf %262, %263 : vector<2x128xf32>
    %265 = arith.mulf %256, %208 : vector<2x128xf32>
    %266 = arith.mulf %250, %258 : vector<2x128xf32>
    %267 = arith.addf %265, %266 : vector<2x128xf32>
    %268 = math.tanh %267 : vector<2x128xf32>
    %269 = arith.mulf %264, %268 : vector<2x128xf32>
    %270 = arith.truncf %269 : vector<2x128xf32> to vector<2x128xbf16>
    %c0_57 = arith.constant 0 : index
    %c0_58 = arith.constant 0 : index
    %271 = vector.load %arg10[%c0_57, %c0_58] : memref<128x128xbf16, #tpu.memory_space<vmem>>, vector<128x128xbf16>
    %cst_59 = arith.constant dense<0.000000e+00> : vector<2x128xf32>
    %272 = tpu.matmul %270, %271, %cst_59 {dimension_numbers = #tpu.dot_dimension_numbers<[1], [0], [0], [1], [0, 0, 1, 1], [], []>} : vector<2x128xbf16>, vector<128x128xbf16>, vector<2x128xf32> -> vector<2x128xf32>
    %c0_60 = arith.constant 0 : index
    %c0_61 = arith.constant 0 : index
    %273 = vector.load %arg11[%c0_60, %c0_61] : memref<1x128xf32, #tpu.memory_space<vmem>>, vector<1x128xf32>
    %274 = vector.broadcast %273 : vector<1x128xf32> to vector<2x128xf32>
    %275 = arith.addf %272, %274 : vector<2x128xf32>
    %cst_62 = arith.constant 0.000000e+00 : f32
    %276 = vector.broadcast %cst_62 : f32 to vector<2x128xf32>
    %277 = arith.maximumf %275, %276 : vector<2x128xf32>
    %278 = arith.truncf %277 : vector<2x128xf32> to vector<2x128xbf16>
    %c0_63 = arith.constant 0 : index
    %c0_64 = arith.constant 0 : index
    %279 = vector.load %arg12[%c0_63, %c0_64] : memref<128x128xbf16, #tpu.memory_space<vmem>>, vector<128x128xbf16>
    %cst_65 = arith.constant dense<0.000000e+00> : vector<2x128xf32>
    %280 = tpu.matmul %278, %279, %cst_65 {dimension_numbers = #tpu.dot_dimension_numbers<[1], [0], [0], [1], [0, 0, 1, 1], [], []>} : vector<2x128xbf16>, vector<128x128xbf16>, vector<2x128xf32> -> vector<2x128xf32>
    %c0_66 = arith.constant 0 : index
    %c0_67 = arith.constant 0 : index
    %281 = vector.load %arg13[%c0_66, %c0_67] : memref<1x128xf32, #tpu.memory_space<vmem>>, vector<1x128xf32>
    %282 = vector.broadcast %281 : vector<1x128xf32> to vector<2x128xf32>
    %283 = arith.addf %280, %282 : vector<2x128xf32>
    %c0_68 = arith.constant 0 : index
    %c0_69 = arith.constant 0 : index
    %284 = vector.load %arg14[%c0_68, %c0_69] : memref<2x128xf32, #tpu.memory_space<vmem>>, vector<2x128xf32>
    tpu.vector_store %arg14[%c0_68, %c0_69], %283 {strides = array<i32>} : memref<2x128xf32, #tpu.memory_space<vmem>>, vector<2x128xf32>,
    return
  }
}

</mosaic_0001>

<llo_original>
// kernel: forward.1
$region0: #{forward.1}
  #allocation0 [shape = 'u32[]', space=smem, size = 0x4, offset = 0x4, fixed_abs, tag = 'smem constant byte address 0x4 - core index']
  #allocation1 [shape = 'u32[144,128]{1,0:T(1,128)}', space=vmem, size = 0x12000, scoped, tag = 'internal scratch']
  %s0 = inlined_call_operand.vmem [shape: bf16[128,128], index: 0, kind: input, shape index: {}]
  %s1 = inlined_call_operand.vmem [shape: bf16[8,128], index: 1, kind: input, shape index: {}]
  %s2 = inlined_call_operand.vmem [shape: bf16[128,1280], index: 2, kind: input, shape index: {}]
  %s3 = inlined_call_operand.vmem [shape: bf16[1280,128], index: 3, kind: input, shape index: {}]
  %s4 = inlined_call_operand.vmem [shape: f32[1,128], index: 4, kind: input, shape index: {}]
  %s5 = inlined_call_operand.vmem [shape: bf16[128,512], index: 5, kind: input, shape index: {}]
  %s6 = inlined_call_operand.vmem [shape: bf16[128,512], index: 6, kind: input, shape index: {}]
  %s7 = inlined_call_operand.vmem [shape: f32[1,512], index: 7, kind: input, shape index: {}]
  %s8 = inlined_call_operand.vmem [shape: bf16[256,512], index: 8, kind: input, shape index: {}]
  %s9 = inlined_call_operand.vmem [shape: f32[1,512], index: 9, kind: input, shape index: {}]
  %s10 = inlined_call_operand.vmem [shape: bf16[128,128], index: 10, kind: input, shape index: {}]
  %s11 = inlined_call_operand.vmem [shape: f32[1,128], index: 11, kind: input, shape index: {}]
  %s12 = inlined_call_operand.vmem [shape: bf16[128,128], index: 12, kind: input, shape index: {}]
  %s13 = inlined_call_operand.vmem [shape: f32[1,128], index: 13, kind: input, shape index: {}]
  %s14 = inlined_call_operand.vmem [shape: f32[2,128], index: 14, kind: output, shape index: {}]
  %s15 = sld [smem:[#allocation0]]
  $region66: #{forward.1} parent=0
    _
  %s17 = ssub.s32 1, %s15
  %s18 = scalar_select 0, %s17, %s15
  // Predicated region
  $region2: #{forward.1} parent=0 // pred_check
    _
  $region3: #{forward.1} parent=0 // pred_check_branch
    %20 = sbr.rel (0) target = $region5
  $region4: #{forward.1} parent=0 // pred_region
    _
  $region5: #{forward.1} parent=0 // pred_fallthru
    _
  // Predicated region
  $region6: #{forward.1} parent=0 // pred_check
    _
  $region7: #{forward.1} parent=0 // pred_check_branch
    %22 = sbr.rel (0) target = $region9
  $region8: #{forward.1} parent=0 // pred_region
    _
  $region9: #{forward.1} parent=0 // pred_fallthru
    _
  // Predicated region
  $region10: #{forward.1} parent=0 // pred_check
    _
  $region11: #{forward.1} parent=0 // pred_check_branch
    %24 = sbr.rel (0) target = $region13
  $region12: #{forward.1} parent=0 // pred_region
    _
  $region13: #{forward.1} parent=0 // pred_fallthru
    _
  // Predicated region
  $region14: #{forward.1} parent=0 // pred_check
    _
  $region15: #{forward.1} parent=0 // pred_check_branch
    %26 = sbr.rel (0) target = $region17
  $region16: #{forward.1} parent=0 // pred_region
    _
  $region17: #{forward.1} parent=0 // pred_fallthru
    _
  // Predicated region
  $region18: #{forward.1} parent=0 // pred_check
    _
  $region19: #{forward.1} parent=0 // pred_check_branch
    %28 = sbr.rel (0) target = $region21
  $region20: #{forward.1} parent=0 // pred_region
    _
  $region21: #{forward.1} parent=0 // pred_fallthru
    _
  // Predicated region
  $region22: #{forward.1} parent=0 // pred_check
    _
  $region23: #{forward.1} parent=0 // pred_check_branch
    %30 = sbr.rel (0) target = $region25
  $region24: #{forward.1} parent=0 // pred_region
    _
  $region25: #{forward.1} parent=0 // pred_fallthru
    _
  // Predicated region
  $region26: #{forward.1} parent=0 // pred_check
    _
  $region27: #{forward.1} parent=0 // pred_check_branch
    %32 = sbr.rel (0) target = $region29
  $region28: #{forward.1} parent=0 // pred_region
    _
  $region29: #{forward.1} parent=0 // pred_fallthru
    _
  // Predicated region
  $region30: #{forward.1} parent=0 // pred_check
    _
  $region31: #{forward.1} parent=0 // pred_check_branch
    %34 = sbr.rel (0) target = $region33
  $region32: #{forward.1} parent=0 // pred_region
    _
  $region33: #{forward.1} parent=0 // pred_fallthru
    _
  // Predicated region
  $region34: #{forward.1} parent=0 // pred_check
    _
  $region35: #{forward.1} parent=0 // pred_check_branch
    %36 = sbr.rel (0) target = $region37
  $region36: #{forward.1} parent=0 // pred_region
    _
  $region37: #{forward.1} parent=0 // pred_fallthru
    _
  // Predicated region
  $region38: #{forward.1} parent=0 // pred_check
    _
  $region39: #{forward.1} parent=0 // pred_check_branch
    %38 = sbr.rel (0) target = $region41
  $region40: #{forward.1} parent=0 // pred_region
    _
  $region41: #{forward.1} parent=0 // pred_fallthru
    _
  // Predicated region
  $region42: #{forward.1} parent=0 // pred_check
    _
  $region43: #{forward.1} parent=0 // pred_check_branch
    %40 = sbr.rel (0) target = $region45
  $region44: #{forward.1} parent=0 // pred_region
    _
  $region45: #{forward.1} parent=0 // pred_fallthru
    _
  // Predicated region
  $region46: #{forward.1} parent=0 // pred_check
    _
  $region47: #{forward.1} parent=0 // pred_check_branch
    %42 = sbr.rel (0) target = $region49
  $region48: #{forward.1} parent=0 // pred_region
    _
  $region49: #{forward.1} parent=0 // pred_fallthru
    _
  // Predicated region
  $region50: #{forward.1} parent=0 // pred_check
    _
  $region51: #{forward.1} parent=0 // pred_check_branch
    %44 = sbr.rel (0) target = $region53
  $region52: #{forward.1} parent=0 // pred_region
    _
  $region53: #{forward.1} parent=0 // pred_fallthru
    _
  // Predicated region
  $region54: #{forward.1} parent=0 // pred_check
    _
  $region55: #{forward.1} parent=0 // pred_check_branch
    %46 = sbr.rel (0) target = $region57
  $region56: #{forward.1} parent=0 // pred_region
    _
  $region57: #{forward.1} parent=0 // pred_fallthru
    _
  %v48 = vld [vmem:[%s0] sm:$0xf]
  %v49 = vld [vmem:[%s0 + $0x4] sm:$0xf]
  %v50 = vld [vmem:[%s0 + $0x8] sm:$0xf]
  %v51 = vld [vmem:[%s0 + $0xc] sm:$0xf]
  %v52 = vld [vmem:[%s0 + $0x10] sm:$0xf]
  %v53 = vld [vmem:[%s0 + $0x14] sm:$0xf]
  %v54 = vld [vmem:[%s0 + $0x18] sm:$0xf]
  %v55 = vld [vmem:[%s0 + $0x1c] sm:$0xf]
  %v56 = vld [vmem:[%s0 + $0x20] sm:$0xf]
  %v57 = vld [vmem:[%s0 + $0x24] sm:$0xf]
  %v58 = vld [vmem:[%s0 + $0x28] sm:$0xf]
  %v59 = vld [vmem:[%s0 + $0x2c] sm:$0xf]
  %v60 = vld [vmem:[%s0 + $0x30] sm:$0xf]
  %v61 = vld [vmem:[%s0 + $0x34] sm:$0xf]
  %v62 = vld [vmem:[%s0 + $0x38] sm:$0xf]
  %v63 = vld [vmem:[%s0 + $0x3c] sm:$0xf]
  %v64 = vld [vmem:[%s2] sm:$0xff]
  %v65 = vld [vmem:[%s2 + $0x8] sm:$0xff]
  %v66 = vld [vmem:[%s2 + $0x10] sm:$0xff]
  %v67 = vld [vmem:[%s2 + $0x18] sm:$0xff]
  %v68 = vld [vmem:[%s2 + $0x20] sm:$0xff]
  %v69 = vld [vmem:[%s2 + $0x28] sm:$0xff]
  %v70 = vld [vmem:[%s2 + $0x30] sm:$0xff]
  %v71 = vld [vmem:[%s2 + $0x38] sm:$0xff]
  %v72 = vld [vmem:[%s2 + $0x40] sm:$0xff]
  %v73 = vld [vmem:[%s2 + $0x48] sm:$0xff]
  %v74 = vld [vmem:[%s2 + $0x50] sm:$0xff]
  %v75 = vld [vmem:[%s2 + $0x58] sm:$0xff]
  %v76 = vld [vmem:[%s2 + $0x60] sm:$0xff]
  %v77 = vld [vmem:[%s2 + $0x68] sm:$0xff]
  %v78 = vld [vmem:[%s2 + $0x70] sm:$0xff]
  %v79 = vld [vmem:[%s2 + $0x78] sm:$0xff]
  %v80 = vld [vmem:[%s2 + $0x80] sm:$0xff]
  %v81 = vld [vmem:[%s2 + $0x88] sm:$0xff]
  %v82 = vld [vmem:[%s2 + $0x90] sm:$0xff]
  %v83 = vld [vmem:[%s2 + $0x98] sm:$0xff]
  %v84 = vld [vmem:[%s2 + $0xa0] sm:$0xff]
  %v85 = vld [vmem:[%s2 + $0xa8] sm:$0xff]
  %v86 = vld [vmem:[%s2 + $0xb0] sm:$0xff]
  %v87 = vld [vmem:[%s2 + $0xb8] sm:$0xff]
  %v88 = vld [vmem:[%s2 + $0xc0] sm:$0xff]
  %v89 = vld [vmem:[%s2 + $0xc8] sm:$0xff]
  %v90 = vld [vmem:[%s2 + $0xd0] sm:$0xff]
  %v91 = vld [vmem:[%s2 + $0xd8] sm:$0xff]
  %v92 = vld [vmem:[%s2 + $0xe0] sm:$0xff]
  %v93 = vld [vmem:[%s2 + $0xe8] sm:$0xff]
  %v94 = vld [vmem:[%s2 + $0xf0] sm:$0xff]
  %v95 = vld [vmem:[%s2 + $0xf8] sm:$0xff]
  %v96 = vld [vmem:[%s2 + $0x100] sm:$0xff]
  %v97 = vld [vmem:[%s2 + $0x108] sm:$0xff]
  %v98 = vld [vmem:[%s2 + $0x110] sm:$0xff]
  %v99 = vld [vmem:[%s2 + $0x118] sm:$0xff]
  %v100 = vld [vmem:[%s2 + $0x120] sm:$0xff]
  %v101 = vld [vmem:[%s2 + $0x128] sm:$0xff]
  %v102 = vld [vmem:[%s2 + $0x130] sm:$0xff]
  %v103 = vld [vmem:[%s2 + $0x138] sm:$0xff]
  %v104 = vld [vmem:[%s2 + $0x140] sm:$0xff]
  %v105 = vld [vmem:[%s2 + $0x148] sm:$0xff]
  %v106 = vld [vmem:[%s2 + $0x150] sm:$0xff]
  %v107 = vld [vmem:[%s2 + $0x158] sm:$0xff]
  %v108 = vld [vmem:[%s2 + $0x160] sm:$0xff]
  %v109 = vld [vmem:[%s2 + $0x168] sm:$0xff]
  %v110 = vld [vmem:[%s2 + $0x170] sm:$0xff]
  %v111 = vld [vmem:[%s2 + $0x178] sm:$0xff]
  %v112 = vld [vmem:[%s2 + $0x180] sm:$0xff]
  %v113 = vld [vmem:[%s2 + $0x188] sm:$0xff]
  %v114 = vld [vmem:[%s2 + $0x190] sm:$0xff]
  %v115 = vld [vmem:[%s2 + $0x198] sm:$0xff]
  %v116 = vld [vmem:[%s2 + $0x1a0] sm:$0xff]
  %v117 = vld [vmem:[%s2 + $0x1a8] sm:$0xff]
  %v118 = vld [vmem:[%s2 + $0x1b0] sm:$0xff]
  %v119 = vld [vmem:[%s2 + $0x1b8] sm:$0xff]
  %v120 = vld [vmem:[%s2 + $0x1c0] sm:$0xff]
  %v121 = vld [vmem:[%s2 + $0x1c8] sm:$0xff]
  %v122 = vld [vmem:[%s2 + $0x1d0] sm:$0xff]
  %v123 = vld [vmem:[%s2 + $0x1d8] sm:$0xff]
  %v124 = vld [vmem:[%s2 + $0x1e0] sm:$0xff]
  %v125 = vld [vmem:[%s2 + $0x1e8] sm:$0xff]
  %v126 = vld [vmem:[%s2 + $0x1f0] sm:$0xff]
  %v127 = vld [vmem:[%s2 + $0x1f8] sm:$0xff]
  %v128 = vld [vmem:[%s2 + $0x200] sm:$0xff]
  %v129 = vld [vmem:[%s2 + $0x208] sm:$0xff]
  %v130 = vld [vmem:[%s2 + $0x210] sm:$0xff]
  %v131 = vld [vmem:[%s2 + $0x218] sm:$0xff]
  %v132 = vld [vmem:[%s2 + $0x220] sm:$0xff]
  %v133 = vld [vmem:[%s2 + $0x228] sm:$0xff]
  %v134 = vld [vmem:[%s2 + $0x230] sm:$0xff]
  %v135 = vld [vmem:[%s2 + $0x238] sm:$0xff]
  %v136 = vld [vmem:[%s2 + $0x240] sm:$0xff]
  %v137 = vld [vmem:[%s2 + $0x248] sm:$0xff]
  %v138 = vld [vmem:[%s2 + $0x250] sm:$0xff]
  %v139 = vld [vmem:[%s2 + $0x258] sm:$0xff]
  %v140 = vld [vmem:[%s2 + $0x260] sm:$0xff]
  %v141 = vld [vmem:[%s2 + $0x268] sm:$0xff]
  %v142 = vld [vmem:[%s2 + $0x270] sm:$0xff]
  %v143 = vld [vmem:[%s2 + $0x278] sm:$0xff]
  %v160 = vunpack.c.l.b16 %v48
  %v161 = vunpack.c.l.b16 %v49
  %v162 = vunpack.c.l.b16 %v50
  %v163 = vunpack.c.l.b16 %v51
  %v164 = vunpack.c.l.b16 %v52
  %v165 = vunpack.c.l.b16 %v53
  %v166 = vunpack.c.l.b16 %v54
  %v167 = vunpack.c.l.b16 %v55
  %v168 = vunpack.c.l.b16 %v56
  %v169 = vunpack.c.l.b16 %v57
  %v170 = vunpack.c.l.b16 %v58
  %v171 = vunpack.c.l.b16 %v59
  %v172 = vunpack.c.l.b16 %v60
  %v173 = vunpack.c.l.b16 %v61
  %v174 = vunpack.c.l.b16 %v62
  %v175 = vunpack.c.l.b16 %v63
  %v176 = vpack.c.b16 %v161, %v160
  %v177 = vpack.c.b16 %v163, %v162
  %v178 = vpack.c.b16 %v165, %v164
  %v179 = vpack.c.b16 %v167, %v166
  %v180 = vpack.c.b16 %v169, %v168
  %v181 = vpack.c.b16 %v171, %v170
  %v182 = vpack.c.b16 %v173, %v172
  %v183 = vpack.c.b16 %v175, %v174
  %v272 = vunpack.c.l.b16 %v64
  %v273 = vunpack.c.h.b16 %v64
  %v274 = vunpack.c.l.b16 %v65
  %v275 = vunpack.c.h.b16 %v65
  %v276 = vunpack.c.l.b16 %v66
  %v277 = vunpack.c.h.b16 %v66
  %v278 = vunpack.c.l.b16 %v67
  %v279 = vunpack.c.h.b16 %v67
  %v280 = vunpack.c.l.b16 %v68
  %v281 = vunpack.c.h.b16 %v68
  %v282 = vunpack.c.l.b16 %v69
  %v283 = vunpack.c.h.b16 %v69
  %v284 = vunpack.c.l.b16 %v70
  %v285 = vunpack.c.h.b16 %v70
  %v286 = vunpack.c.l.b16 %v71
  %v287 = vunpack.c.h.b16 %v71
  %v288 = vunpack.c.l.b16 %v72
  %v289 = vunpack.c.h.b16 %v72
  %v290 = vunpack.c.l.b16 %v73
  %v291 = vunpack.c.h.b16 %v73
  %v292 = vunpack.c.l.b16 %v74
  %v293 = vunpack.c.h.b16 %v74
  %v294 = vunpack.c.l.b16 %v75
  %v295 = vunpack.c.h.b16 %v75
  %v296 = vunpack.c.l.b16 %v76
  %v297 = vunpack.c.h.b16 %v76
  %v298 = vunpack.c.l.b16 %v77
  %v299 = vunpack.c.h.b16 %v77
  %v300 = vunpack.c.l.b16 %v78
  %v301 = vunpack.c.h.b16 %v78
  %v302 = vunpack.c.l.b16 %v79
  %v303 = vunpack.c.h.b16 %v79
  %v304 = vunpack.c.l.b16 %v80
  %v305 = vunpack.c.h.b16 %v80
  %v306 = vunpack.c.l.b16 %v81
  %v307 = vunpack.c.h.b16 %v81
  %v308 = vunpack.c.l.b16 %v82
  %v309 = vunpack.c.h.b16 %v82
  %v310 = vunpack.c.l.b16 %v83
  %v311 = vunpack.c.h.b16 %v83
  %v312 = vunpack.c.l.b16 %v84
  %v313 = vunpack.c.h.b16 %v84
  %v314 = vunpack.c.l.b16 %v85
  %v315 = vunpack.c.h.b16 %v85
  %v316 = vunpack.c.l.b16 %v86
  %v317 = vunpack.c.h.b16 %v86
  %v318 = vunpack.c.l.b16 %v87
  %v319 = vunpack.c.h.b16 %v87
  %v320 = vunpack.c.l.b16 %v88
  %v321 = vunpack.c.h.b16 %v88
  %v322 = vunpack.c.l.b16 %v89
  %v323 = vunpack.c.h.b16 %v89
  %v324 = vunpack.c.l.b16 %v90
  %v325 = vunpack.c.h.b16 %v90
  %v326 = vunpack.c.l.b16 %v91
  %v327 = vunpack.c.h.b16 %v91
  %v328 = vunpack.c.l.b16 %v92
  %v329 = vunpack.c.h.b16 %v92
  %v330 = vunpack.c.l.b16 %v93
  %v331 = vunpack.c.h.b16 %v93
  %v332 = vunpack.c.l.b16 %v94
  %v333 = vunpack.c.h.b16 %v94
  %v334 = vunpack.c.l.b16 %v95
  %v335 = vunpack.c.h.b16 %v95
  %v336 = vunpack.c.l.b16 %v96
  %v337 = vunpack.c.h.b16 %v96
  %v338 = vunpack.c.l.b16 %v97
  %v339 = vunpack.c.h.b16 %v97
  %v340 = vunpack.c.l.b16 %v98
  %v341 = vunpack.c.h.b16 %v98
  %v342 = vunpack.c.l.b16 %v99
  %v343 = vunpack.c.h.b16 %v99
  %v344 = vunpack.c.l.b16 %v100
  %v345 = vunpack.c.h.b16 %v100
  %v346 = vunpack.c.l.b16 %v101
  %v347 = vunpack.c.h.b16 %v101
  %v348 = vunpack.c.l.b16 %v102
  %v349 = vunpack.c.h.b16 %v102
  %v350 = vunpack.c.l.b16 %v103
  %v351 = vunpack.c.h.b16 %v103
  %v352 = vunpack.c.l.b16 %v104
  %v353 = vunpack.c.h.b16 %v104
  %v354 = vunpack.c.l.b16 %v105
  %v355 = vunpack.c.h.b16 %v105
  %v356 = vunpack.c.l.b16 %v106
  %v357 = vunpack.c.h.b16 %v106
  %v358 = vunpack.c.l.b16 %v107
  %v359 = vunpack.c.h.b16 %v107
  %v360 = vunpack.c.l.b16 %v108
  %v361 = vunpack.c.h.b16 %v108
  %v362 = vunpack.c.l.b16 %v109
  %v363 = vunpack.c.h.b16 %v109
  %v364 = vunpack.c.l.b16 %v110
  %v365 = vunpack.c.h.b16 %v110
  %v366 = vunpack.c.l.b16 %v111
  %v367 = vunpack.c.h.b16 %v111
  %v368 = vunpack.c.l.b16 %v112
  %v369 = vunpack.c.h.b16 %v112
  %v370 = vunpack.c.l.b16 %v113
  %v371 = vunpack.c.h.b16 %v113
  %v372 = vunpack.c.l.b16 %v114
  %v373 = vunpack.c.h.b16 %v114
  %v374 = vunpack.c.l.b16 %v115
  %v375 = vunpack.c.h.b16 %v115
  %v376 = vunpack.c.l.b16 %v116
  %v377 = vunpack.c.h.b16 %v116
  %v378 = vunpack.c.l.b16 %v117
  %v379 = vunpack.c.h.b16 %v117
  %v380 = vunpack.c.l.b16 %v118
  %v381 = vunpack.c.h.b16 %v118
  %v382 = vunpack.c.l.b16 %v119
  %v383 = vunpack.c.h.b16 %v119
  %v384 = vunpack.c.l.b16 %v120
  %v385 = vunpack.c.h.b16 %v120
  %v386 = vunpack.c.l.b16 %v121
  %v387 = vunpack.c.h.b16 %v121
  %v388 = vunpack.c.l.b16 %v122
  %v389 = vunpack.c.h.b16 %v122
  %v390 = vunpack.c.l.b16 %v123
  %v391 = vunpack.c.h.b16 %v123
  %v392 = vunpack.c.l.b16 %v124
  %v393 = vunpack.c.h.b16 %v124
  %v394 = vunpack.c.l.b16 %v125
  %v395 = vunpack.c.h.b16 %v125
  %v396 = vunpack.c.l.b16 %v126
  %v397 = vunpack.c.h.b16 %v126
  %v398 = vunpack.c.l.b16 %v127
  %v399 = vunpack.c.h.b16 %v127
  %v400 = vunpack.c.l.b16 %v128
  %v401 = vunpack.c.h.b16 %v128
  %v402 = vunpack.c.l.b16 %v129
  %v403 = vunpack.c.h.b16 %v129
  %v404 = vunpack.c.l.b16 %v130
  %v405 = vunpack.c.h.b16 %v130
  %v406 = vunpack.c.l.b16 %v131
  %v407 = vunpack.c.h.b16 %v131
  %v408 = vunpack.c.l.b16 %v132
  %v409 = vunpack.c.h.b16 %v132
  %v410 = vunpack.c.l.b16 %v133
  %v411 = vunpack.c.h.b16 %v133
  %v412 = vunpack.c.l.b16 %v134
  %v413 = vunpack.c.h.b16 %v134
  %v414 = vunpack.c.l.b16 %v135
  %v415 = vunpack.c.h.b16 %v135
  %v416 = vunpack.c.l.b16 %v136
  %v417 = vunpack.c.h.b16 %v136
  %v418 = vunpack.c.l.b16 %v137
  %v419 = vunpack.c.h.b16 %v137
  %v420 = vunpack.c.l.b16 %v138
  %v421 = vunpack.c.h.b16 %v138
  %v422 = vunpack.c.l.b16 %v139
  %v423 = vunpack.c.h.b16 %v139
  %v424 = vunpack.c.l.b16 %v140
  %v425 = vunpack.c.h.b16 %v140
  %v426 = vunpack.c.l.b16 %v141
  %v427 = vunpack.c.h.b16 %v141
  %v428 = vunpack.c.l.b16 %v142
  %v429 = vunpack.c.h.b16 %v142
  %v430 = vunpack.c.l.b16 %v143
  %v431 = vunpack.c.h.b16 %v143
  %v432 = vpack.c.b16 %v282, %v272
  %v433 = vpack.c.b16 %v283, %v273
  %v434 = vpack.c.b16 %v284, %v274
  %v435 = vpack.c.b16 %v285, %v275
  %v436 = vpack.c.b16 %v286, %v276
  %v437 = vpack.c.b16 %v287, %v277
  %v438 = vpack.c.b16 %v288, %v278
  %v439 = vpack.c.b16 %v289, %v279
  %v440 = vpack.c.b16 %v290, %v280
  %v441 = vpack.c.b16 %v291, %v281
  %v442 = vpack.c.b16 %v302, %v292
  %v443 = vpack.c.b16 %v303, %v293
  %v444 = vpack.c.b16 %v304, %v294
  %v445 = vpack.c.b16 %v305, %v295
  %v446 = vpack.c.b16 %v306, %v296
  %v447 = vpack.c.b16 %v307, %v297
  %v448 = vpack.c.b16 %v308, %v298
  %v449 = vpack.c.b16 %v309, %v299
  %v450 = vpack.c.b16 %v310, %v300
  %v451 = vpack.c.b16 %v311, %v301
  %v452 = vpack.c.b16 %v322, %v312
  %v453 = vpack.c.b16 %v323, %v313
  %v454 = vpack.c.b16 %v324, %v314
  %v455 = vpack.c.b16 %v325, %v315
  %v456 = vpack.c.b16 %v326, %v316
  %v457 = vpack.c.b16 %v327, %v317
  %v458 = vpack.c.b16 %v328, %v318
  %v459 = vpack.c.b16 %v329, %v319
  %v460 = vpack.c.b16 %v330, %v320
  %v461 = vpack.c.b16 %v331, %v321
  %v462 = vpack.c.b16 %v342, %v332
  %v463 = vpack.c.b16 %v343, %v333
  %v464 = vpack.c.b16 %v344, %v334
  %v465 = vpack.c.b16 %v345, %v335
  %v466 = vpack.c.b16 %v346, %v336
  %v467 = vpack.c.b16 %v347, %v337
  %v468 = vpack.c.b16 %v348, %v338
  %v469 = vpack.c.b16 %v349, %v339
  %v470 = vpack.c.b16 %v350, %v340
  %v471 = vpack.c.b16 %v351, %v341
  %v472 = vpack.c.b16 %v362, %v352
  %v473 = vpack.c.b16 %v363, %v353
  %v474 = vpack.c.b16 %v364, %v354
  %v475 = vpack.c.b16 %v365, %v355
  %v476 = vpack.c.b16 %v366, %v356
  %v477 = vpack.c.b16 %v367, %v357
  %v478 = vpack.c.b16 %v368, %v358
  %v479 = vpack.c.b16 %v369, %v359
  %v480 = vpack.c.b16 %v370, %v360
  %v481 = vpack.c.b16 %v371, %v361
  %v482 = vpack.c.b16 %v382, %v372
  %v483 = vpack.c.b16 %v383, %v373
  %v484 = vpack.c.b16 %v384, %v374
  %v485 = vpack.c.b16 %v385, %v375
  %v486 = vpack.c.b16 %v386, %v376
  %v487 = vpack.c.b16 %v387, %v377
  %v488 = vpack.c.b16 %v388, %v378
  %v489 = vpack.c.b16 %v389, %v379
  %v490 = vpack.c.b16 %v390, %v380
  %v491 = vpack.c.b16 %v391, %v381
  %v492 = vpack.c.b16 %v402, %v392
  %v493 = vpack.c.b16 %v403, %v393
  %v494 = vpack.c.b16 %v404, %v394
  %v495 = vpack.c.b16 %v405, %v395
  %v496 = vpack.c.b16 %v406, %v396
  %v497 = vpack.c.b16 %v407, %v397
  %v498 = vpack.c.b16 %v408, %v398
  %v499 = vpack.c.b16 %v409, %v399
  %v500 = vpack.c.b16 %v410, %v400
  %v501 = vpack.c.b16 %v411, %v401
  %v502 = vpack.c.b16 %v422, %v412
  %v503 = vpack.c.b16 %v423, %v413
  %v504 = vpack.c.b16 %v424, %v414
  %v505 = vpack.c.b16 %v425, %v415
  %v506 = vpack.c.b16 %v426, %v416
  %v507 = vpack.c.b16 %v427, %v417
  %v508 = vpack.c.b16 %v428, %v418
  %v509 = vpack.c.b16 %v429, %v419
  %v510 = vpack.c.b16 %v430, %v420
  %v511 = vpack.c.b16 %v431, %v421
  %592 = vmatprep.subr.bf16.mxu0 %v433
  %593 = vmatpush1.bf16.msra.mxu0 %v432
  %594 = vmatprep.subr.bf16.mxu0 %v443
  %595 = vmatpush1.bf16.msra.mxu0 %v442
  %596 = vmatprep.subr.bf16.mxu0 %v453
  %597 = vmatpush1.bf16.msra.mxu0 %v452
  %598 = vmatprep.subr.bf16.mxu0 %v463
  %599 = vmatpush1.bf16.msra.mxu0 %v462
  %600 = vmatprep.subr.bf16.mxu0 %v473
  %601 = vmatpush1.bf16.msra.mxu0 %v472
  %602 = vmatprep.subr.bf16.mxu0 %v483
  %603 = vmatpush1.bf16.msra.mxu0 %v482
  %604 = vmatprep.subr.bf16.mxu0 %v493
  %605 = vmatpush1.bf16.msra.mxu0 %v492
  %606 = vmatprep.subr.bf16.mxu0 %v503
  %607 = vmatpush1.bf16.msra.mxu0 %v502
  %608 = vmatprep.subr.bf16.mxu0 0
  %609 = vmatpush1.bf16.msra.mxu0 0
  %610 = vmatprep.subr.bf16.mxu0 0
  %611 = vmatpush1.bf16.msra.mxu0 0
  %612 = vmatprep.subr.bf16.mxu0 0
  %613 = vmatpush1.bf16.msra.mxu0 0
  %614 = vmatprep.subr.bf16.mxu0 0
  %615 = vmatpush1.bf16.msra.mxu0 0
  %616 = vmatprep.subr.bf16.mxu0 0
  %617 = vmatpush1.bf16.msra.mxu0 0
  %618 = vmatprep.subr.bf16.mxu0 0
  %619 = vmatpush1.bf16.msra.mxu0 0
  %620 = vmatprep.subr.bf16.mxu0 0
  %621 = vmatpush1.bf16.msra.mxu0 0
  %622 = vmatprep.subr.bf16.mxu0 0
  %623 = vmatpush1.bf16.msra.mxu0 0
  %624 = vmatprep.mubr.bf16.mxu0 0
  %625 = vmatmul.mubr.bf16.gmra.mrb[0].mxu0 %v176
  %v626 = vpop.f32.mrb[0].mxu0
  %v627 = vadd.f32 0.0, %v626
  %v628 = vpop.f32.mrb[0].mxu0
  %v629 = vadd.f32 0.0, %v628
  %v630 = vpop.f32.mrb[0].mxu0
  %v631 = vadd.f32 0.0, %v630
  %v632 = vpop.f32.mrb[0].mxu0
  %v633 = vadd.f32 0.0, %v632
  %634 = vmatprep.mubr.bf16.mxu0 0
  %635 = vmatmul.mubr.bf16.gmra.mrb[0].mxu0 %v177
  %v636 = vpop.f32.mrb[0].mxu0
  %v637 = vadd.f32 0.0, %v636
  %v638 = vpop.f32.mrb[0].mxu0
  %v639 = vadd.f32 0.0, %v638
  %v640 = vpop.f32.mrb[0].mxu0
  %v641 = vadd.f32 0.0, %v640
  %v642 = vpop.f32.mrb[0].mxu0
  %v643 = vadd.f32 0.0, %v642
  %644 = vmatprep.mubr.bf16.mxu0 0
  %645 = vmatmul.mubr.bf16.gmra.mrb[0].mxu0 %v178
  %v646 = vpop.f32.mrb[0].mxu0
  %v647 = vadd.f32 0.0, %v646
  %v648 = vpop.f32.mrb[0].mxu0
  %v649 = vadd.f32 0.0, %v648
  %v650 = vpop.f32.mrb[0].mxu0
  %v651 = vadd.f32 0.0, %v650
  %v652 = vpop.f32.mrb[0].mxu0
  %v653 = vadd.f32 0.0, %v652
  %654 = vmatprep.mubr.bf16.mxu0 0
  %655 = vmatmul.mubr.bf16.gmra.mrb[0].mxu0 %v179
  %v656 = vpop.f32.mrb[0].mxu0
  %v657 = vadd.f32 0.0, %v656
  %v658 = vpop.f32.mrb[0].mxu0
  %v659 = vadd.f32 0.0, %v658
  %v660 = vpop.f32.mrb[0].mxu0
  %v661 = vadd.f32 0.0, %v660
  %v662 = vpop.f32.mrb[0].mxu0
  %v663 = vadd.f32 0.0, %v662
  %664 = vmatprep.mubr.bf16.mxu0 0
  %665 = vmatmul.mubr.bf16.gmra.mrb[0].mxu0 %v180
  %v666 = vpop.f32.mrb[0].mxu0
  %v667 = vadd.f32 0.0, %v666
  %v668 = vpop.f32.mrb[0].mxu0
  %v669 = vadd.f32 0.0, %v668
  %v670 = vpop.f32.mrb[0].mxu0
  %v671 = vadd.f32 0.0, %v670
  %v672 = vpop.f32.mrb[0].mxu0
  %v673 = vadd.f32 0.0, %v672
  %674 = vmatprep.mubr.bf16.mxu0 0
  %675 = vmatmul.mubr.bf16.gmra.mrb[0].mxu0 %v181
  %v676 = vpop.f32.mrb[0].mxu0
  %v677 = vadd.f32 0.0, %v676
  %v678 = vpop.f32.mrb[0].mxu0
  %v679 = vadd.f32 0.0, %v678
  %v680 = vpop.f32.mrb[0].mxu0
  %v681 = vadd.f32 0.0, %v680
  %v682 = vpop.f32.mrb[0].mxu0
  %v683 = vadd.f32 0.0, %v682
  %684 = vmatprep.mubr.bf16.mxu0 0
  %685 = vmatmul.mubr.bf16.gmra.mrb[0].mxu0 %v182
  %v686 = vpop.f32.mrb[0].mxu0
  %v687 = vadd.f32 0.0, %v686
  %v688 = vpop.f32.mrb[0].mxu0
  %v689 = vadd.f32 0.0, %v688
  %v690 = vpop.f32.mrb[0].mxu0
  %v691 = vadd.f32 0.0, %v690
  %v692 = vpop.f32.mrb[0].mxu0
  %v693 = vadd.f32 0.0, %v692
  %694 = vmatprep.mubr.bf16.mxu0 0
  %695 = vmatmul.mubr.bf16.gmra.mrb[0].mxu0 %v183
  %v696 = vpop.f32.mrb[0].mxu0
  %v697 = vadd.f32 0.0, %v696
  %v698 = vpop.f32.mrb[0].mxu0
  %v699 = vadd.f32 0.0, %v698
  %v700 = vpop.f32.mrb[0].mxu0
  %v701 = vadd.f32 0.0, %v700
  %v702 = vpop.f32.mrb[0].mxu0
  %v703 = vadd.f32 0.0, %v702
  %704 = vdwg.mxu0
  %705 = vmatprep.subr.bf16.mxu0 %v435
  %706 = vmatpush1.bf16.msra.mxu0 %v434
  %707 = vmatprep.subr.bf16.mxu0 %v445
  %708 = vmatpush1.bf16.msra.mxu0 %v444
  %709 = vmatprep.subr.bf16.mxu0 %v455
  %710 = vmatpush1.bf16.msra.mxu0 %v454
  %711 = vmatprep.subr.bf16.mxu0 %v465
  %712 = vmatpush1.bf16.msra.mxu0 %v464
  %713 = vmatprep.subr.bf16.mxu0 %v475
  %714 = vmatpush1.bf16.msra.mxu0 %v474
  %715 = vmatprep.subr.bf16.mxu0 %v485
  %716 = vmatpush1.bf16.msra.mxu0 %v484
  %717 = vmatprep.subr.bf16.mxu0 %v495
  %718 = vmatpush1.bf16.msra.mxu0 %v494
  %719 = vmatprep.subr.bf16.mxu0 %v505
  %720 = vmatpush1.bf16.msra.mxu0 %v504
  %721 = vmatprep.subr.bf16.mxu0 0
  %722 = vmatpush1.bf16.msra.mxu0 0
  %723 = vmatprep.subr.bf16.mxu0 0
  %724 = vmatpush1.bf16.msra.mxu0 0
  %725 = vmatprep.subr.bf16.mxu0 0
  %726 = vmatpush1.bf16.msra.mxu0 0
  %727 = vmatprep.subr.bf16.mxu0 0
  %728 = vmatpush1.bf16.msra.mxu0 0
  %729 = vmatprep.subr.bf16.mxu0 0
  %730 = vmatpush1.bf16.msra.mxu0 0
  %731 = vmatprep.subr.bf16.mxu0 0
  %732 = vmatpush1.bf16.msra.mxu0 0
  %733 = vmatprep.subr.bf16.mxu0 0
  %734 = vmatpush1.bf16.msra.mxu0 0
  %735 = vmatprep.subr.bf16.mxu0 0
  %736 = vmatpush1.bf16.msra.mxu0 0
  %737 = vmatprep.mubr.bf16.mxu0 0
  %738 = vmatmul.mubr.bf16.gmra.mrb[0].mxu0 %v176
  %v739 = vpop.f32.mrb[0].mxu0
  %v740 = vadd.f32 0.0, %v739
  %v741 = vpop.f32.mrb[0].mxu0
  %v742 = vadd.f32 0.0, %v741
  %v743 = vpop.f32.mrb[0].mxu0
  %v744 = vadd.f32 0.0, %v743
  %v745 = vpop.f32.mrb[0].mxu0
  %v746 = vadd.f32 0.0, %v745
  %747 = vmatprep.mubr.bf16.mxu0 0
  %748 = vmatmul.mubr.bf16.gmra.mrb[0].mxu0 %v177
  %v749 = vpop.f32.mrb[0].mxu0
  %v750 = vadd.f32 0.0, %v749
  %v751 = vpop.f32.mrb[0].mxu0
  %v752 = vadd.f32 0.0, %v751
  %v753 = vpop.f32.mrb[0].mxu0
  %v754 = vadd.f32 0.0, %v753
  %v755 = vpop.f32.mrb[0].mxu0
  %v756 = vadd.f32 0.0, %v755
  %757 = vmatprep.mubr.bf16.mxu0 0
  %758 = vmatmul.mubr.bf16.gmra.mrb[0].mxu0 %v178
  %v759 = vpop.f32.mrb[0].mxu0
  %v760 = vadd.f32 0.0, %v759
  %v761 = vpop.f32.mrb[0].mxu0
  %v762 = vadd.f32 0.0, %v761
  %v763 = vpop.f32.mrb[0].mxu0
  %v764 = vadd.f32 0.0, %v763
  %v765 = vpop.f32.mrb[0].mxu0
  %v766 = vadd.f32 0.0, %v765
  %767 = vmatprep.mubr.bf16.mxu0 0
  %768 = vmatmul.mubr.bf16.gmra.mrb[0].mxu0 %v179
  %v769 = vpop.f32.mrb[0].mxu0
  %v770 = vadd.f32 0.0, %v769
  %v771 = vpop.f32.mrb[0].mxu0
  %v772 = vadd.f32 0.0, %v771
  %v773 = vpop.f32.mrb[0].mxu0
  %v774 = vadd.f32 0.0, %v773
  %v775 = vpop.f32.mrb[0].mxu0
  %v776 = vadd.f32 0.0, %v775
  %777 = vmatprep.mubr.bf16.mxu0 0
  %778 = vmatmul.mubr.bf16.gmra.mrb[0].mxu0 %v180
  %v779 = vpop.f32.mrb[0].mxu0
  %v780 = vadd.f32 0.0, %v779
  %v781 = vpop.f32.mrb[0].mxu0
  %v782 = vadd.f32 0.0, %v781
  %v783 = vpop.f32.mrb[0].mxu0
  %v784 = vadd.f32 0.0, %v783
  %v785 = vpop.f32.mrb[0].mxu0
  %v786 = vadd.f32 0.0, %v785
  %787 = vmatprep.mubr.bf16.mxu0 0
  %788 = vmatmul.mubr.bf16.gmra.mrb[0].mxu0 %v181
  %v789 = vpop.f32.mrb[0].mxu0
  %v790 = vadd.f32 0.0, %v789
  %v791 = vpop.f32.mrb[0].mxu0
  %v792 = vadd.f32 0.0, %v791
  %v793 = vpop.f32.mrb[0].mxu0
  %v794 = vadd.f32 0.0, %v793
  %v795 = vpop.f32.mrb[0].mxu0
  %v796 = vadd.f32 0.0, %v795
  %797 = vmatprep.mubr.bf16.mxu0 0
  %798 = vmatmul.mubr.bf16.gmra.mrb[0].mxu0 %v182
  %v799 = vpop.f32.mrb[0].mxu0
  %v800 = vadd.f32 0.0, %v799
  %v801 = vpop.f32.mrb[0].mxu0
  %v802 = vadd.f32 0.0, %v801
  %v803 = vpop.f32.mrb[0].mxu0
  %v804 = vadd.f32 0.0, %v803
  %v805 = vpop.f32.mrb[0].mxu0
  %v806 = vadd.f32 0.0, %v805
  %807 = vmatprep.mubr.bf16.mxu0 0
  %808 = vmatmul.mubr.bf16.gmra.mrb[0].mxu0 %v183
  %v809 = vpop.f32.mrb[0].mxu0
  %v810 = vadd.f32 0.0, %v809
  %v811 = vpop.f32.mrb[0].mxu0
  %v812 = vadd.f32 0.0, %v811
  %v813 = vpop.f32.mrb[0].mxu0
  %v814 = vadd.f32 0.0, %v813
  %v815 = vpop.f32.mrb[0].mxu0
  %v816 = vadd.f32 0.0, %v815
  %817 = vdwg.mxu0
  %818 = vmatprep.subr.bf16.mxu0 %v437
  %819 = vmatpush1.bf16.msra.mxu0 %v436
  %820 = vmatprep.subr.bf16.mxu0 %v447
  %821 = vmatpush1.bf16.msra.mxu0 %v446
  %822 = vmatprep.subr.bf16.mxu0 %v457
  %823 = vmatpush1.bf16.msra.mxu0 %v456
  %824 = vmatprep.subr.bf16.mxu0 %v467
  %825 = vmatpush1.bf16.msra.mxu0 %v466
  %826 = vmatprep.subr.bf16.mxu0 %v477
  %827 = vmatpush1.bf16.msra.mxu0 %v476
  %828 = vmatprep.subr.bf16.mxu0 %v487
  %829 = vmatpush1.bf16.msra.mxu0 %v486
  %830 = vmatprep.subr.bf16.mxu0 %v497
  %831 = vmatpush1.bf16.msra.mxu0 %v496
  %832 = vmatprep.subr.bf16.mxu0 %v507
  %833 = vmatpush1.bf16.msra.mxu0 %v506
  %834 = vmatprep.subr.bf16.mxu0 0
  %835 = vmatpush1.bf16.msra.mxu0 0
  %836 = vmatprep.subr.bf16.mxu0 0
  %837 = vmatpush1.bf16.msra.mxu0 0
  %838 = vmatprep.subr.bf16.mxu0 0
  %839 = vmatpush1.bf16.msra.mxu0 0
  %840 = vmatprep.subr.bf16.mxu0 0
  %841 = vmatpush1.bf16.msra.mxu0 0
  %842 = vmatprep.subr.bf16.mxu0 0
  %843 = vmatpush1.bf16.msra.mxu0 0
  %844 = vmatprep.subr.bf16.mxu0 0
  %845 = vmatpush1.bf16.msra.mxu0 0
  %846 = vmatprep.subr.bf16.mxu0 0
  %847 = vmatpush1.bf16.msra.mxu0 0
  %848 = vmatprep.subr.bf16.mxu0 0
  %849 = vmatpush1.bf16.msra.mxu0 0
  %850 = vmatprep.mubr.bf16.mxu0 0
  %851 = vmatmul.mubr.bf16.gmra.mrb[0].mxu0 %v176
  %v852 = vpop.f32.mrb[0].mxu0
  %v853 = vadd.f32 0.0, %v852
  %v854 = vpop.f32.mrb[0].mxu0
  %v855 = vadd.f32 0.0, %v854
  %v856 = vpop.f32.mrb[0].mxu0
  %v857 = vadd.f32 0.0, %v856
  %v858 = vpop.f32.mrb[0].mxu0
  %v859 = vadd.f32 0.0, %v858
  %860 = vmatprep.mubr.bf16.mxu0 0
  %861 = vmatmul.mubr.bf16.gmra.mrb[0].mxu0 %v177
  %v862 = vpop.f32.mrb[0].mxu0
  %v863 = vadd.f32 0.0, %v862
  %v864 = vpop.f32.mrb[0].mxu0
  %v865 = vadd.f32 0.0, %v864
  %v866 = vpop.f32.mrb[0].mxu0
  %v867 = vadd.f32 0.0, %v866
  %v868 = vpop.f32.mrb[0].mxu0
  %v869 = vadd.f32 0.0, %v868
  %870 = vmatprep.mubr.bf16.mxu0 0
  %871 = vmatmul.mubr.bf16.gmra.mrb[0].mxu0 %v178
  %v872 = vpop.f32.mrb[0].mxu0
  %v873 = vadd.f32 0.0, %v872
  %v874 = vpop.f32.mrb[0].mxu0
  %v875 = vadd.f32 0.0, %v874
  %v876 = vpop.f32.mrb[0].mxu0
  %v877 = vadd.f32 0.0, %v876
  %v878 = vpop.f32.mrb[0].mxu0
  %v879 = vadd.f32 0.0, %v878
  %880 = vmatprep.mubr.bf16.mxu0 0
  %881 = vmatmul.mubr.bf16.gmra.mrb[0].mxu0 %v179
  %v882 = vpop.f32.mrb[0].mxu0
  %v883 = vadd.f32 0.0, %v882
  %v884 = vpop.f32.mrb[0].mxu0
  %v885 = vadd.f32 0.0, %v884
  %v886 = vpop.f32.mrb[0].mxu0
  %v887 = vadd.f32 0.0, %v886
  %v888 = vpop.f32.mrb[0].mxu0
  %v889 = vadd.f32 0.0, %v888
  %890 = vmatprep.mubr.bf16.mxu0 0
  %891 = vmatmul.mubr.bf16.gmra.mrb[0].mxu0 %v180
  %v892 = vpop.f32.mrb[0].mxu0
  %v893 = vadd.f32 0.0, %v892
  %v894 = vpop.f32.mrb[0].mxu0
  %v895 = vadd.f32 0.0, %v894
  %v896 = vpop.f32.mrb[0].mxu0
  %v897 = vadd.f32 0.0, %v896
  %v898 = vpop.f32.mrb[0].mxu0
  %v899 = vadd.f32 0.0, %v898
  %900 = vmatprep.mubr.bf16.mxu0 0
  %901 = vmatmul.mubr.bf16.gmra.mrb[0].mxu0 %v181
  %v902 = vpop.f32.mrb[0].mxu0
  %v903 = vadd.f32 0.0, %v902
  %v904 = vpop.f32.mrb[0].mxu0
  %v905 = vadd.f32 0.0, %v904
  %v906 = vpop.f32.mrb[0].mxu0
  %v907 = vadd.f32 0.0, %v906
  %v908 = vpop.f32.mrb[0].mxu0
  %v909 = vadd.f32 0.0, %v908
  %910 = vmatprep.mubr.bf16.mxu0 0
  %911 = vmatmul.mubr.bf16.gmra.mrb[0].mxu0 %v182
  %v912 = vpop.f32.mrb[0].mxu0
  %v913 = vadd.f32 0.0, %v912
  %v914 = vpop.f32.mrb[0].mxu0
  %v915 = vadd.f32 0.0, %v914
  %v916 = vpop.f32.mrb[0].mxu0
  %v917 = vadd.f32 0.0, %v916
  %v918 = vpop.f32.mrb[0].mxu0
  %v919 = vadd.f32 0.0, %v918
  %920 = vmatprep.mubr.bf16.mxu0 0
  %921 = vmatmul.mubr.bf16.gmra.mrb[0].mxu0 %v183
  %v922 = vpop.f32.mrb[0].mxu0
  %v923 = vadd.f32 0.0, %v922
  %v924 = vpop.f32.mrb[0].mxu0
  %v925 = vadd.f32 0.0, %v924
  %v926 = vpop.f32.mrb[0].mxu0
  %v927 = vadd.f32 0.0, %v926
  %v928 = vpop.f32.mrb[0].mxu0
  %v929 = vadd.f32 0.0, %v928
  %930 = vdwg.mxu0
  %931 = vmatprep.subr.bf16.mxu0 %v439
  %932 = vmatpush1.bf16.msra.mxu0 %v438
  %933 = vmatprep.subr.bf16.mxu0 %v449
  %934 = vmatpush1.bf16.msra.mxu0 %v448
  %935 = vmatprep.subr.bf16.mxu0 %v459
  %936 = vmatpush1.bf16.msra.mxu0 %v458
  %937 = vmatprep.subr.bf16.mxu0 %v469
  %938 = vmatpush1.bf16.msra.mxu0 %v468
  %939 = vmatprep.subr.bf16.mxu0 %v479
  %940 = vmatpush1.bf16.msra.mxu0 %v478
  %941 = vmatprep.subr.bf16.mxu0 %v489
  %942 = vmatpush1.bf16.msra.mxu0 %v488
  %943 = vmatprep.subr.bf16.mxu0 %v499
  %944 = vmatpush1.bf16.msra.mxu0 %v498
  %945 = vmatprep.subr.bf16.mxu0 %v509
  %946 = vmatpush1.bf16.msra.mxu0 %v508
  %947 = vmatprep.subr.bf16.mxu0 0
  %948 = vmatpush1.bf16.msra.mxu0 0
  %949 = vmatprep.subr.bf16.mxu0 0
  %950 = vmatpush1.bf16.msra.mxu0 0
  %951 = vmatprep.subr.bf16.mxu0 0
  %952 = vmatpush1.bf16.msra.mxu0 0
  %953 = vmatprep.subr.bf16.mxu0 0
  %954 = vmatpush1.bf16.msra.mxu0 0
  %955 = vmatprep.subr.bf16.mxu0 0
  %956 = vmatpush1.bf16.msra.mxu0 0
  %957 = vmatprep.subr.bf16.mxu0 0
  %958 = vmatpush1.bf16.msra.mxu0 0
  %959 = vmatprep.subr.bf16.mxu0 0
  %960 = vmatpush1.bf16.msra.mxu0 0
  %961 = vmatprep.subr.bf16.mxu0 0
  %962 = vmatpush1.bf16.msra.mxu0 0
  %963 = vmatprep.mubr.bf16.mxu0 0
  %964 = vmatmul.mubr.bf16.gmra.mrb[0].mxu0 %v176
  %v965 = vpop.f32.mrb[0].mxu0
  %v966 = vadd.f32 0.0, %v965
  %v967 = vpop.f32.mrb[0].mxu0
  %v968 = vadd.f32 0.0, %v967
  %v969 = vpop.f32.mrb[0].mxu0
  %v970 = vadd.f32 0.0, %v969
  %v971 = vpop.f32.mrb[0].mxu0
  %v972 = vadd.f32 0.0, %v971
  %973 = vmatprep.mubr.bf16.mxu0 0
  %974 = vmatmul.mubr.bf16.gmra.mrb[0].mxu0 %v177
  %v975 = vpop.f32.mrb[0].mxu0
  %v976 = vadd.f32 0.0, %v975
  %v977 = vpop.f32.mrb[0].mxu0
  %v978 = vadd.f32 0.0, %v977
  %v979 = vpop.f32.mrb[0].mxu0
  %v980 = vadd.f32 0.0, %v979
  %v981 = vpop.f32.mrb[0].mxu0
  %v982 = vadd.f32 0.0, %v981
  %983 = vmatprep.mubr.bf16.mxu0 0
  %984 = vmatmul.mubr.bf16.gmra.mrb[0].mxu0 %v178
  %v985 = vpop.f32.mrb[0].mxu0
  %v986 = vadd.f32 0.0, %v985
  %v987 = vpop.f32.mrb[0].mxu0
  %v988 = vadd.f32 0.0, %v987
  %v989 = vpop.f32.mrb[0].mxu0
  %v990 = vadd.f32 0.0, %v989
  %v991 = vpop.f32.mrb[0].mxu0
  %v992 = vadd.f32 0.0, %v991
  %993 = vmatprep.mubr.bf16.mxu0 0
  %994 = vmatmul.mubr.bf16.gmra.mrb[0].mxu0 %v179
  %v995 = vpop.f32.mrb[0].mxu0
  %v996 = vadd.f32 0.0, %v995
  %v997 = vpop.f32.mrb[0].mxu0
  %v998 = vadd.f32 0.0, %v997
  %v999 = vpop.f32.mrb[0].mxu0
  %v1000 = vadd.f32 0.0, %v999
  %v1001 = vpop.f32.mrb[0].mxu0
  %v1002 = vadd.f32 0.0, %v1001
  %1003 = vmatprep.mubr.bf16.mxu0 0
  %1004 = vmatmul.mubr.bf16.gmra.mrb[0].mxu0 %v180
  %v1005 = vpop.f32.mrb[0].mxu0
  %v1006 = vadd.f32 0.0, %v1005
  %v1007 = vpop.f32.mrb[0].mxu0
  %v1008 = vadd.f32 0.0, %v1007
  %v1009 = vpop.f32.mrb[0].mxu0
  %v1010 = vadd.f32 0.0, %v1009
  %v1011 = vpop.f32.mrb[0].mxu0
  %v1012 = vadd.f32 0.0, %v1011
  %1013 = vmatprep.mubr.bf16.mxu0 0
  %1014 = vmatmul.mubr.bf16.gmra.mrb[0].mxu0 %v181
  %v1015 = vpop.f32.mrb[0].mxu0
  %v1016 = vadd.f32 0.0, %v1015
  %v1017 = vpop.f32.mrb[0].mxu0
  %v1018 = vadd.f32 0.0, %v1017
  %v1019 = vpop.f32.mrb[0].mxu0
  %v1020 = vadd.f32 0.0, %v1019
  %v1021 = vpop.f32.mrb[0].mxu0
  %v1022 = vadd.f32 0.0, %v1021
  %1023 = vmatprep.mubr.bf16.mxu0 0
  %1024 = vmatmul.mubr.bf16.gmra.mrb[0].mxu0 %v182
  %v1025 = vpop.f32.mrb[0].mxu0
  %v1026 = vadd.f32 0.0, %v1025
  %v1027 = vpop.f32.mrb[0].mxu0
  %v1028 = vadd.f32 0.0, %v1027
  %v1029 = vpop.f32.mrb[0].mxu0
  %v1030 = vadd.f32 0.0, %v1029
  %v1031 = vpop.f32.mrb[0].mxu0
  %v1032 = vadd.f32 0.0, %v1031
  %1033 = vmatprep.mubr.bf16.mxu0 0
  %1034 = vmatmul.mubr.bf16.gmra.mrb[0].mxu0 %v183
  %v1035 = vpop.f32.mrb[0].mxu0
  %v1036 = vadd.f32 0.0, %v1035
  %v1037 = vpop.f32.mrb[0].mxu0
  %v1038 = vadd.f32 0.0, %v1037
  %v1039 = vpop.f32.mrb[0].mxu0
  %v1040 = vadd.f32 0.0, %v1039
  %v1041 = vpop.f32.mrb[0].mxu0
  %v1042 = vadd.f32 0.0, %v1041
  %1043 = vdwg.mxu0
  %1044 = vmatprep.subr.bf16.mxu0 %v441
  %1045 = vmatpush1.bf16.msra.mxu0 %v440
  %1046 = vmatprep.subr.bf16.mxu0 %v451
  %1047 = vmatpush1.bf16.msra.mxu0 %v450
  %1048 = vmatprep.subr.bf16.mxu0 %v461
  %1049 = vmatpush1.bf16.msra.mxu0 %v460
  %1050 = vmatprep.subr.bf16.mxu0 %v471
  %1051 = vmatpush1.bf16.msra.mxu0 %v470
  %1052 = vmatprep.subr.bf16.mxu0 %v481
  %1053 = vmatpush1.bf16.msra.mxu0 %v480
  %1054 = vmatprep.subr.bf16.mxu0 %v491
  %1055 = vmatpush1.bf16.msra.mxu0 %v490
  %1056 = vmatprep.subr.bf16.mxu0 %v501
  %1057 = vmatpush1.bf16.msra.mxu0 %v500
  %1058 = vmatprep.subr.bf16.mxu0 %v511
  %1059 = vmatpush1.bf16.msra.mxu0 %v510
  %1060 = vmatprep.subr.bf16.mxu0 0
  %1061 = vmatpush1.bf16.msra.mxu0 0
  %1062 = vmatprep.subr.bf16.mxu0 0
  %1063 = vmatpush1.bf16.msra.mxu0 0
  %1064 = vmatprep.subr.bf16.mxu0 0
  %1065 = vmatpush1.bf16.msra.mxu0 0
  %1066 = vmatprep.subr.bf16.mxu0 0
  %1067 = vmatpush1.bf16.msra.mxu0 0
  %1068 = vmatprep.subr.bf16.mxu0 0
  %1069 = vmatpush1.bf16.msra.mxu0 0
  %1070 = vmatprep.subr.bf16.mxu0 0
  %1071 = vmatpush1.bf16.msra.mxu0 0
  %1072 = vmatprep.subr.bf16.mxu0 0
  %1073 = vmatpush1.bf16.msra.mxu0 0
  %1074 = vmatprep.subr.bf16.mxu0 0
  %1075 = vmatpush1.bf16.msra.mxu0 0
  %1076 = vmatprep.mubr.bf16.mxu0 0
  %1077 = vmatmul.mubr.bf16.gmra.mrb[0].mxu0 %v176
  %v1078 = vpop.f32.mrb[0].mxu0
  %v1079 = vadd.f32 0.0, %v1078
  %v1080 = vpop.f32.mrb[0].mxu0
  %v1081 = vadd.f32 0.0, %v1080
  %v1082 = vpop.f32.mrb[0].mxu0
  %v1083 = vadd.f32 0.0, %v1082
  %v1084 = vpop.f32.mrb[0].mxu0
  %v1085 = vadd.f32 0.0, %v1084
  %1086 = vmatprep.mubr.bf16.mxu0 0
  %1087 = vmatmul.mubr.bf16.gmra.mrb[0].mxu0 %v177
  %v1088 = vpop.f32.mrb[0].mxu0
  %v1089 = vadd.f32 0.0, %v1088
  %v1090 = vpop.f32.mrb[0].mxu0
  %v1091 = vadd.f32 0.0, %v1090
  %v1092 = vpop.f32.mrb[0].mxu0
  %v1093 = vadd.f32 0.0, %v1092
  %v1094 = vpop.f32.mrb[0].mxu0
  %v1095 = vadd.f32 0.0, %v1094
  %1096 = vmatprep.mubr.bf16.mxu0 0
  %1097 = vmatmul.mubr.bf16.gmra.mrb[0].mxu0 %v178
  %v1098 = vpop.f32.mrb[0].mxu0
  %v1099 = vadd.f32 0.0, %v1098
  %v1100 = vpop.f32.mrb[0].mxu0
  %v1101 = vadd.f32 0.0, %v1100
  %v1102 = vpop.f32.mrb[0].mxu0
  %v1103 = vadd.f32 0.0, %v1102
  %v1104 = vpop.f32.mrb[0].mxu0
  %v1105 = vadd.f32 0.0, %v1104
  %1106 = vmatprep.mubr.bf16.mxu0 0
  %1107 = vmatmul.mubr.bf16.gmra.mrb[0].mxu0 %v179
  %v1108 = vpop.f32.mrb[0].mxu0
  %v1109 = vadd.f32 0.0, %v1108
  %v1110 = vpop.f32.mrb[0].mxu0
  %v1111 = vadd.f32 0.0, %v1110
  %v1112 = vpop.f32.mrb[0].mxu0
  %v1113 = vadd.f32 0.0, %v1112
  %v1114 = vpop.f32.mrb[0].mxu0
  %v1115 = vadd.f32 0.0, %v1114
  %1116 = vmatprep.mubr.bf16.mxu0 0
  %1117 = vmatmul.mubr.bf16.gmra.mrb[0].mxu0 %v180
  %v1118 = vpop.f32.mrb[0].mxu0
  %v1119 = vadd.f32 0.0, %v1118
  %v1120 = vpop.f32.mrb[0].mxu0
  %v1121 = vadd.f32 0.0, %v1120
  %v1122 = vpop.f32.mrb[0].mxu0
  %v1123 = vadd.f32 0.0, %v1122
  %v1124 = vpop.f32.mrb[0].mxu0
  %v1125 = vadd.f32 0.0, %v1124
  %1126 = vmatprep.mubr.bf16.mxu0 0
  %1127 = vmatmul.mubr.bf16.gmra.mrb[0].mxu0 %v181
  %v1128 = vpop.f32.mrb[0].mxu0
  %v1129 = vadd.f32 0.0, %v1128
  %v1130 = vpop.f32.mrb[0].mxu0
  %v1131 = vadd.f32 0.0, %v1130
  %v1132 = vpop.f32.mrb[0].mxu0
  %v1133 = vadd.f32 0.0, %v1132
  %v1134 = vpop.f32.mrb[0].mxu0
  %v1135 = vadd.f32 0.0, %v1134
  %1136 = vmatprep.mubr.bf16.mxu0 0
  %1137 = vmatmul.mubr.bf16.gmra.mrb[0].mxu0 %v182
  %v1138 = vpop.f32.mrb[0].mxu0
  %v1139 = vadd.f32 0.0, %v1138
  %v1140 = vpop.f32.mrb[0].mxu0
  %v1141 = vadd.f32 0.0, %v1140
  %v1142 = vpop.f32.mrb[0].mxu0
  %v1143 = vadd.f32 0.0, %v1142
  %v1144 = vpop.f32.mrb[0].mxu0
  %v1145 = vadd.f32 0.0, %v1144
  %1146 = vmatprep.mubr.bf16.mxu0 0
  %1147 = vmatmul.mubr.bf16.gmra.mrb[0].mxu0 %v183
  %v1148 = vpop.f32.mrb[0].mxu0
  %v1149 = vadd.f32 0.0, %v1148
  %v1150 = vpop.f32.mrb[0].mxu0
  %v1151 = vadd.f32 0.0, %v1150
  %v1152 = vpop.f32.mrb[0].mxu0
  %v1153 = vadd.f32 0.0, %v1152
  %v1154 = vpop.f32.mrb[0].mxu0
  %v1155 = vadd.f32 0.0, %v1154
  %1156 = vdwg.mxu0
  %v1157 = vxor.u32 %v627, 2147483648
  %v1158 = vxor.u32 %v629, 2147483648
  %v1159 = vxor.u32 %v740, 2147483648
  %v1160 = vxor.u32 %v742, 2147483648
  %v1161 = vxor.u32 %v853, 2147483648
  %v1162 = vxor.u32 %v855, 2147483648
  %v1163 = vxor.u32 %v966, 2147483648
  %v1164 = vxor.u32 %v968, 2147483648
  %v1165 = vxor.u32 %v1079, 2147483648
  %v1166 = vxor.u32 %v1081, 2147483648
  %v1167 = vxor.u32 %v631, 2147483648
  %v1168 = vxor.u32 %v633, 2147483648
  %v1169 = vxor.u32 %v744, 2147483648
  %v1170 = vxor.u32 %v746, 2147483648
  %v1171 = vxor.u32 %v857, 2147483648
  %v1172 = vxor.u32 %v859, 2147483648
  %v1173 = vxor.u32 %v970, 2147483648
  %v1174 = vxor.u32 %v972, 2147483648
  %v1175 = vxor.u32 %v1083, 2147483648
  %v1176 = vxor.u32 %v1085, 2147483648
  %v1177 = vxor.u32 %v637, 2147483648
  %v1178 = vxor.u32 %v639, 2147483648
  %v1179 = vxor.u32 %v750, 2147483648
  %v1180 = vxor.u32 %v752, 2147483648
  %v1181 = vxor.u32 %v863, 2147483648
  %v1182 = vxor.u32 %v865, 2147483648
  %v1183 = vxor.u32 %v976, 2147483648
  %v1184 = vxor.u32 %v978, 2147483648
  %v1185 = vxor.u32 %v1089, 2147483648
  %v1186 = vxor.u32 %v1091, 2147483648
  %v1187 = vxor.u32 %v641, 2147483648
  %v1188 = vxor.u32 %v643, 2147483648
  %v1189 = vxor.u32 %v754, 2147483648
  %v1190 = vxor.u32 %v756, 2147483648
  %v1191 = vxor.u32 %v867, 2147483648
  %v1192 = vxor.u32 %v869, 2147483648
  %v1193 = vxor.u32 %v980, 2147483648
  %v1194 = vxor.u32 %v982, 2147483648
  %v1195 = vxor.u32 %v1093, 2147483648
  %v1196 = vxor.u32 %v1095, 2147483648
  %v1197 = vxor.u32 %v647, 2147483648
  %v1198 = vxor.u32 %v649, 2147483648
  %v1199 = vxor.u32 %v760, 2147483648
  %v1200 = vxor.u32 %v762, 2147483648
  %v1201 = vxor.u32 %v873, 2147483648
  %v1202 = vxor.u32 %v875, 2147483648
  %v1203 = vxor.u32 %v986, 2147483648
  %v1204 = vxor.u32 %v988, 2147483648
  %v1205 = vxor.u32 %v1099, 2147483648
  %v1206 = vxor.u32 %v1101, 2147483648
  %v1207 = vxor.u32 %v651, 2147483648
  %v1208 = vxor.u32 %v653, 2147483648
  %v1209 = vxor.u32 %v764, 2147483648
  %v1210 = vxor.u32 %v766, 2147483648
  %v1211 = vxor.u32 %v877, 2147483648
  %v1212 = vxor.u32 %v879, 2147483648
  %v1213 = vxor.u32 %v990, 2147483648
  %v1214 = vxor.u32 %v992, 2147483648
  %v1215 = vxor.u32 %v1103, 2147483648
  %v1216 = vxor.u32 %v1105, 2147483648
  %v1217 = vxor.u32 %v657, 2147483648
  %v1218 = vxor.u32 %v659, 2147483648
  %v1219 = vxor.u32 %v770, 2147483648
  %v1220 = vxor.u32 %v772, 2147483648
  %v1221 = vxor.u32 %v883, 2147483648
  %v1222 = vxor.u32 %v885, 2147483648
  %v1223 = vxor.u32 %v996, 2147483648
  %v1224 = vxor.u32 %v998, 2147483648
  %v1225 = vxor.u32 %v1109, 2147483648
  %v1226 = vxor.u32 %v1111, 2147483648
  %v1227 = vxor.u32 %v661, 2147483648
  %v1228 = vxor.u32 %v663, 2147483648
  %v1229 = vxor.u32 %v774, 2147483648
  %v1230 = vxor.u32 %v776, 2147483648
  %v1231 = vxor.u32 %v887, 2147483648
  %v1232 = vxor.u32 %v889, 2147483648
  %v1233 = vxor.u32 %v1000, 2147483648
  %v1234 = vxor.u32 %v1002, 2147483648
  %v1235 = vxor.u32 %v1113, 2147483648
  %v1236 = vxor.u32 %v1115, 2147483648
  %v1237 = vxor.u32 %v667, 2147483648
  %v1238 = vxor.u32 %v669, 2147483648
  %v1239 = vxor.u32 %v780, 2147483648
  %v1240 = vxor.u32 %v782, 2147483648
  %v1241 = vxor.u32 %v893, 2147483648
  %v1242 = vxor.u32 %v895, 2147483648
  %v1243 = vxor.u32 %v1006, 2147483648
  %v1244 = vxor.u32 %v1008, 2147483648
  %v1245 = vxor.u32 %v1119, 2147483648
  %v1246 = vxor.u32 %v1121, 2147483648
  %v1247 = vxor.u32 %v671, 2147483648
  %v1248 = vxor.u32 %v673, 2147483648
  %v1249 = vxor.u32 %v784, 2147483648
  %v1250 = vxor.u32 %v786, 2147483648
  %v1251 = vxor.u32 %v897, 2147483648
  %v1252 = vxor.u32 %v899, 2147483648
  %v1253 = vxor.u32 %v1010, 2147483648
  %v1254 = vxor.u32 %v1012, 2147483648
  %v1255 = vxor.u32 %v1123, 2147483648
  %v1256 = vxor.u32 %v1125, 2147483648
  %v1257 = vxor.u32 %v677, 2147483648
  %v1258 = vxor.u32 %v679, 2147483648
  %v1259 = vxor.u32 %v790, 2147483648
  %v1260 = vxor.u32 %v792, 2147483648
  %v1261 = vxor.u32 %v903, 2147483648
  %v1262 = vxor.u32 %v905, 2147483648
  %v1263 = vxor.u32 %v1016, 2147483648
  %v1264 = vxor.u32 %v1018, 2147483648
  %v1265 = vxor.u32 %v1129, 2147483648
  %v1266 = vxor.u32 %v1131, 2147483648
  %v1267 = vxor.u32 %v681, 2147483648
  %v1268 = vxor.u32 %v683, 2147483648
  %v1269 = vxor.u32 %v794, 2147483648
  %v1270 = vxor.u32 %v796, 2147483648
  %v1271 = vxor.u32 %v907, 2147483648
  %v1272 = vxor.u32 %v909, 2147483648
  %v1273 = vxor.u32 %v1020, 2147483648
  %v1274 = vxor.u32 %v1022, 2147483648
  %v1275 = vxor.u32 %v1133, 2147483648
  %v1276 = vxor.u32 %v1135, 2147483648
  %v1277 = vxor.u32 %v687, 2147483648
  %v1278 = vxor.u32 %v689, 2147483648
  %v1279 = vxor.u32 %v800, 2147483648
  %v1280 = vxor.u32 %v802, 2147483648
  %v1281 = vxor.u32 %v913, 2147483648
  %v1282 = vxor.u32 %v915, 2147483648
  %v1283 = vxor.u32 %v1026, 2147483648
  %v1284 = vxor.u32 %v1028, 2147483648
  %v1285 = vxor.u32 %v1139, 2147483648
  %v1286 = vxor.u32 %v1141, 2147483648
  %v1287 = vxor.u32 %v691, 2147483648
  %v1288 = vxor.u32 %v693, 2147483648
  %v1289 = vxor.u32 %v804, 2147483648
  %v1290 = vxor.u32 %v806, 2147483648
  %v1291 = vxor.u32 %v917, 2147483648
  %v1292 = vxor.u32 %v919, 2147483648
  %v1293 = vxor.u32 %v1030, 2147483648
  %v1294 = vxor.u32 %v1032, 2147483648
  %v1295 = vxor.u32 %v1143, 2147483648
  %v1296 = vxor.u32 %v1145, 2147483648
  %v1297 = vxor.u32 %v697, 2147483648
  %v1298 = vxor.u32 %v699, 2147483648
  %v1299 = vxor.u32 %v810, 2147483648
  %v1300 = vxor.u32 %v812, 2147483648
  %v1301 = vxor.u32 %v923, 2147483648
  %v1302 = vxor.u32 %v925, 2147483648
  %v1303 = vxor.u32 %v1036, 2147483648
  %v1304 = vxor.u32 %v1038, 2147483648
  %v1305 = vxor.u32 %v1149, 2147483648
  %v1306 = vxor.u32 %v1151, 2147483648
  %v1307 = vxor.u32 %v701, 2147483648
  %v1308 = vxor.u32 %v703, 2147483648
  %v1309 = vxor.u32 %v814, 2147483648
  %v1310 = vxor.u32 %v816, 2147483648
  %v1311 = vxor.u32 %v927, 2147483648
  %v1312 = vxor.u32 %v929, 2147483648
  %v1313 = vxor.u32 %v1040, 2147483648
  %v1314 = vxor.u32 %v1042, 2147483648
  %v1315 = vxor.u32 %v1153, 2147483648
  %v1316 = vxor.u32 %v1155, 2147483648
  %v1317 = vmul.f32 %v1157, 1.442695
  %v1318 = vpow.pop %v1317
  %v1319 = vmul.f32 %v1158, 1.442695
  %v1320 = vpow.pop %v1319
  %v1321 = vmul.f32 %v1159, 1.442695
  %v1322 = vpow.pop %v1321
  %v1323 = vmul.f32 %v1160, 1.442695
  %v1324 = vpow.pop %v1323
  %v1325 = vmul.f32 %v1161, 1.442695
  %v1326 = vpow.pop %v1325
  %v1327 = vmul.f32 %v1162, 1.442695
  %v1328 = vpow.pop %v1327
  %v1329 = vmul.f32 %v1163, 1.442695
  %v1330 = vpow.pop %v1329
  %v1331 = vmul.f32 %v1164, 1.442695
  %v1332 = vpow.pop %v1331
  %v1333 = vmul.f32 %v1165, 1.442695
  %v1334 = vpow.pop %v1333
  %v1335 = vmul.f32 %v1166, 1.442695
  %v1336 = vpow.pop %v1335
  %v1337 = vmul.f32 %v1167, 1.442695
  %v1338 = vpow.pop %v1337
  %v1339 = vmul.f32 %v1168, 1.442695
  %v1340 = vpow.pop %v1339
  %v1341 = vmul.f32 %v1169, 1.442695
  %v1342 = vpow.pop %v1341
  %v1343 = vmul.f32 %v1170, 1.442695
  %v1344 = vpow.pop %v1343
  %v1345 = vmul.f32 %v1171, 1.442695
  %v1346 = vpow.pop %v1345
  %v1347 = vmul.f32 %v1172, 1.442695
  %v1348 = vpow.pop %v1347
  %v1349 = vmul.f32 %v1173, 1.442695
  %v1350 = vpow.pop %v1349
  %v1351 = vmul.f32 %v1174, 1.442695
  %v1352 = vpow.pop %v1351
  %v1353 = vmul.f32 %v1175, 1.442695
  %v1354 = vpow.pop %v1353
  %v1355 = vmul.f32 %v1176, 1.442695
  %v1356 = vpow.pop %v1355
  %v1357 = vmul.f32 %v1177, 1.442695
  %v1358 = vpow.pop %v1357
  %v1359 = vmul.f32 %v1178, 1.442695
  %v1360 = vpow.pop %v1359
  %v1361 = vmul.f32 %v1179, 1.442695
  %v1362 = vpow.pop %v1361
  %v1363 = vmul.f32 %v1180, 1.442695
  %v1364 = vpow.pop %v1363
  %v1365 = vmul.f32 %v1181, 1.442695
  %v1366 = vpow.pop %v1365
  %v1367 = vmul.f32 %v1182, 1.442695
  %v1368 = vpow.pop %v1367
  %v1369 = vmul.f32 %v1183, 1.442695
  %v1370 = vpow.pop %v1369
  %v1371 = vmul.f32 %v1184, 1.442695
  %v1372 = vpow.pop %v1371
  %v1373 = vmul.f32 %v1185, 1.442695
  %v1374 = vpow.pop %v1373
  %v1375 = vmul.f32 %v1186, 1.442695
  %v1376 = vpow.pop %v1375
  %v1377 = vmul.f32 %v1187, 1.442695
  %v1378 = vpow.pop %v1377
  %v1379 = vmul.f32 %v1188, 1.442695
  %v1380 = vpow.pop %v1379
  %v1381 = vmul.f32 %v1189, 1.442695
  %v1382 = vpow.pop %v1381
  %v1383 = vmul.f32 %v1190, 1.442695
  %v1384 = vpow.pop %v1383
  %v1385 = vmul.f32 %v1191, 1.442695
  %v1386 = vpow.pop %v1385
  %v1387 = vmul.f32 %v1192, 1.442695
  %v1388 = vpow.pop %v1387
  %v1389 = vmul.f32 %v1193, 1.442695
  %v1390 = vpow.pop %v1389
  %v1391 = vmul.f32 %v1194, 1.442695
  %v1392 = vpow.pop %v1391
  %v1393 = vmul.f32 %v1195, 1.442695
  %v1394 = vpow.pop %v1393
  %v1395 = vmul.f32 %v1196, 1.442695
  %v1396 = vpow.pop %v1395
  %v1397 = vmul.f32 %v1197, 1.442695
  %v1398 = vpow.pop %v1397
  %v1399 = vmul.f32 %v1198, 1.442695
  %v1400 = vpow.pop %v1399
  %v1401 = vmul.f32 %v1199, 1.442695
  %v1402 = vpow.pop %v1401
  %v1403 = vmul.f32 %v1200, 1.442695
  %v1404 = vpow.pop %v1403
  %v1405 = vmul.f32 %v1201, 1.442695
  %v1406 = vpow.pop %v1405
  %v1407 = vmul.f32 %v1202, 1.442695
  %v1408 = vpow.pop %v1407
  %v1409 = vmul.f32 %v1203, 1.442695
  %v1410 = vpow.pop %v1409
  %v1411 = vmul.f32 %v1204, 1.442695
  %v1412 = vpow.pop %v1411
  %v1413 = vmul.f32 %v1205, 1.442695
  %v1414 = vpow.pop %v1413
  %v1415 = vmul.f32 %v1206, 1.442695
  %v1416 = vpow.pop %v1415
  %v1417 = vmul.f32 %v1207, 1.442695
  %v1418 = vpow.pop %v1417
  %v1419 = vmul.f32 %v1208, 1.442695
  %v1420 = vpow.pop %v1419
  %v1421 = vmul.f32 %v1209, 1.442695
  %v1422 = vpow.pop %v1421
  %v1423 = vmul.f32 %v1210, 1.442695
  %v1424 = vpow.pop %v1423
  %v1425 = vmul.f32 %v1211, 1.442695
  %v1426 = vpow.pop %v1425
  %v1427 = vmul.f32 %v1212, 1.442695
  %v1428 = vpow.pop %v1427
  %v1429 = vmul.f32 %v1213, 1.442695
  %v1430 = vpow.pop %v1429
  %v1431 = vmul.f32 %v1214, 1.442695
  %v1432 = vpow.pop %v1431
  %v1433 = vmul.f32 %v1215, 1.442695
  %v1434 = vpow.pop %v1433
  %v1435 = vmul.f32 %v1216, 1.442695
  %v1436 = vpow.pop %v1435
  %v1437 = vmul.f32 %v1217, 1.442695
  %v1438 = vpow.pop %v1437
  %v1439 = vmul.f32 %v1218, 1.442695
  %v1440 = vpow.pop %v1439
  %v1441 = vmul.f32 %v1219, 1.442695
  %v1442 = vpow.pop %v1441
  %v1443 = vmul.f32 %v1220, 1.442695
  %v1444 = vpow.pop %v1443
  %v1445 = vmul.f32 %v1221, 1.442695
  %v1446 = vpow.pop %v1445
  %v1447 = vmul.f32 %v1222, 1.442695
  %v1448 = vpow.pop %v1447
  %v1449 = vmul.f32 %v1223, 1.442695
  %v1450 = vpow.pop %v1449
  %v1451 = vmul.f32 %v1224, 1.442695
  %v1452 = vpow.pop %v1451
  %v1453 = vmul.f32 %v1225, 1.442695
  %v1454 = vpow.pop %v1453
  %v1455 = vmul.f32 %v1226, 1.442695
  %v1456 = vpow.pop %v1455
  %v1457 = vmul.f32 %v1227, 1.442695
  %v1458 = vpow.pop %v1457
  %v1459 = vmul.f32 %v1228, 1.442695
  %v1460 = vpow.pop %v1459
  %v1461 = vmul.f32 %v1229, 1.442695
  %v1462 = vpow.pop %v1461
  %v1463 = vmul.f32 %v1230, 1.442695
  %v1464 = vpow.pop %v1463
  %v1465 = vmul.f32 %v1231, 1.442695
  %v1466 = vpow.pop %v1465
  %v1467 = vmul.f32 %v1232, 1.442695
  %v1468 = vpow.pop %v1467
  %v1469 = vmul.f32 %v1233, 1.442695
  %v1470 = vpow.pop %v1469
  %v1471 = vmul.f32 %v1234, 1.442695
  %v1472 = vpow.pop %v1471
  %v1473 = vmul.f32 %v1235, 1.442695
  %v1474 = vpow.pop %v1473
  %v1475 = vmul.f32 %v1236, 1.442695
  %v1476 = vpow.pop %v1475
  %v1477 = vmul.f32 %v1237, 1.442695
  %v1478 = vpow.pop %v1477
  %v1479 = vmul.f32 %v1238, 1.442695
  %v1480 = vpow.pop %v1479
  %v1481 = vmul.f32 %v1239, 1.442695
  %v1482 = vpow.pop %v1481
  %v1483 = vmul.f32 %v1240, 1.442695
  %v1484 = vpow.pop %v1483
  %v1485 = vmul.f32 %v1241, 1.442695
  %v1486 = vpow.pop %v1485
  %v1487 = vmul.f32 %v1242, 1.442695
  %v1488 = vpow.pop %v1487
  %v1489 = vmul.f32 %v1243, 1.442695
  %v1490 = vpow.pop %v1489
  %v1491 = vmul.f32 %v1244, 1.442695
  %v1492 = vpow.pop %v1491
  %v1493 = vmul.f32 %v1245, 1.442695
  %v1494 = vpow.pop %v1493
  %v1495 = vmul.f32 %v1246, 1.442695
  %v1496 = vpow.pop %v1495
  %v1497 = vmul.f32 %v1247, 1.442695
  %v1498 = vpow.pop %v1497
  %v1499 = vmul.f32 %v1248, 1.442695
  %v1500 = vpow.pop %v1499
  %v1501 = vmul.f32 %v1249, 1.442695
  %v1502 = vpow.pop %v1501
  %v1503 = vmul.f32 %v1250, 1.442695
  %v1504 = vpow.pop %v1503
  %v1505 = vmul.f32 %v1251, 1.442695
  %v1506 = vpow.pop %v1505
  %v1507 = vmul.f32 %v1252, 1.442695
  %v1508 = vpow.pop %v1507
  %v1509 = vmul.f32 %v1253, 1.442695
  %v1510 = vpow.pop %v1509
  %v1511 = vmul.f32 %v1254, 1.442695
  %v1512 = vpow.pop %v1511
  %v1513 = vmul.f32 %v1255, 1.442695
  %v1514 = vpow.pop %v1513
  %v1515 = vmul.f32 %v1256, 1.442695
  %v1516 = vpow.pop %v1515
  %v1517 = vmul.f32 %v1257, 1.442695
  %v1518 = vpow.pop %v1517
  %v1519 = vmul.f32 %v1258, 1.442695
  %v1520 = vpow.pop %v1519
  %v1521 = vmul.f32 %v1259, 1.442695
  %v1522 = vpow.pop %v1521
  %v1523 = vmul.f32 %v1260, 1.442695
  %v1524 = vpow.pop %v1523
  %v1525 = vmul.f32 %v1261, 1.442695
  %v1526 = vpow.pop %v1525
  %v1527 = vmul.f32 %v1262, 1.442695
  %v1528 = vpow.pop %v1527
  %v1529 = vmul.f32 %v1263, 1.442695
  %v1530 = vpow.pop %v1529
  %v1531 = vmul.f32 %v1264, 1.442695
  %v1532 = vpow.pop %v1531
  %v1533 = vmul.f32 %v1265, 1.442695
  %v1534 = vpow.pop %v1533
  %v1535 = vmul.f32 %v1266, 1.442695
  %v1536 = vpow.pop %v1535
  %v1537 = vmul.f32 %v1267, 1.442695
  %v1538 = vpow.pop %v1537
  %v1539 = vmul.f32 %v1268, 1.442695
  %v1540 = vpow.pop %v1539
  %v1541 = vmul.f32 %v1269, 1.442695
  %v1542 = vpow.pop %v1541
  %v1543 = vmul.f32 %v1270, 1.442695
  %v1544 = vpow.pop %v1543
  %v1545 = vmul.f32 %v1271, 1.442695
  %v1546 = vpow.pop %v1545
  %v1547 = vmul.f32 %v1272, 1.442695
  %v1548 = vpow.pop %v1547
  %v1549 = vmul.f32 %v1273, 1.442695
  %v1550 = vpow.pop %v1549
  %v1551 = vmul.f32 %v1274, 1.442695
  %v1552 = vpow.pop %v1551
  %v1553 = vmul.f32 %v1275, 1.442695
  %v1554 = vpow.pop %v1553
  %v1555 = vmul.f32 %v1276, 1.442695
  %v1556 = vpow.pop %v1555
  %v1557 = vmul.f32 %v1277, 1.442695
  %v1558 = vpow.pop %v1557
  %v1559 = vmul.f32 %v1278, 1.442695
  %v1560 = vpow.pop %v1559
  %v1561 = vmul.f32 %v1279, 1.442695
  %v1562 = vpow.pop %v1561
  %v1563 = vmul.f32 %v1280, 1.442695
  %v1564 = vpow.pop %v1563
  %v1565 = vmul.f32 %v1281, 1.442695
  %v1566 = vpow.pop %v1565
  %v1567 = vmul.f32 %v1282, 1.442695
  %v1568 = vpow.pop %v1567
  %v1569 = vmul.f32 %v1283, 1.442695
  %v1570 = vpow.pop %v1569
  %v1571 = vmul.f32 %v1284, 1.442695
  %v1572 = vpow.pop %v1571
  %v1573 = vmul.f32 %v1285, 1.442695
  %v1574 = vpow.pop %v1573
  %v1575 = vmul.f32 %v1286, 1.442695
  %v1576 = vpow.pop %v1575
  %v1577 = vmul.f32 %v1287, 1.442695
  %v1578 = vpow.pop %v1577
  %v1579 = vmul.f32 %v1288, 1.442695
  %v1580 = vpow.pop %v1579
  %v1581 = vmul.f32 %v1289, 1.442695
  %v1582 = vpow.pop %v1581
  %v1583 = vmul.f32 %v1290, 1.442695
  %v1584 = vpow.pop %v1583
  %v1585 = vmul.f32 %v1291, 1.442695
  %v1586 = vpow.pop %v1585
  %v1587 = vmul.f32 %v1292, 1.442695
  %v1588 = vpow.pop %v1587
  %v1589 = vmul.f32 %v1293, 1.442695
  %v1590 = vpow.pop %v1589
  %v1591 = vmul.f32 %v1294, 1.442695
  %v1592 = vpow.pop %v1591
  %v1593 = vmul.f32 %v1295, 1.442695
  %v1594 = vpow.pop %v1593
  %v1595 = vmul.f32 %v1296, 1.442695
  %v1596 = vpow.pop %v1595
  %v1597 = vmul.f32 %v1297, 1.442695
  %v1598 = vpow.pop %v1597
  %v1599 = vmul.f32 %v1298, 1.442695
  %v1600 = vpow.pop %v1599
  %v1601 = vmul.f32 %v1299, 1.442695
  %v1602 = vpow.pop %v1601
  %v1603 = vmul.f32 %v1300, 1.442695
  %v1604 = vpow.pop %v1603
  %v1605 = vmul.f32 %v1301, 1.442695
  %v1606 = vpow.pop %v1605
  %v1607 = vmul.f32 %v1302, 1.442695
  %v1608 = vpow.pop %v1607
  %v1609 = vmul.f32 %v1303, 1.442695
  %v1610 = vpow.pop %v1609
  %v1611 = vmul.f32 %v1304, 1.442695
  %v1612 = vpow.pop %v1611
  %v1613 = vmul.f32 %v1305, 1.442695
  %v1614 = vpow.pop %v1613
  %v1615 = vmul.f32 %v1306, 1.442695
  %v1616 = vpow.pop %v1615
  %v1617 = vmul.f32 %v1307, 1.442695
  %v1618 = vpow.pop %v1617
  %v1619 = vmul.f32 %v1308, 1.442695
  %v1620 = vpow.pop %v1619
  %v1621 = vmul.f32 %v1309, 1.442695
  %v1622 = vpow.pop %v1621
  %v1623 = vmul.f32 %v1310, 1.442695
  %v1624 = vpow.pop %v1623
  %v1625 = vmul.f32 %v1311, 1.442695
  %v1626 = vpow.pop %v1625
  %v1627 = vmul.f32 %v1312, 1.442695
  %v1628 = vpow.pop %v1627
  %v1629 = vmul.f32 %v1313, 1.442695
  %v1630 = vpow.pop %v1629
  %v1631 = vmul.f32 %v1314, 1.442695
  %v1632 = vpow.pop %v1631
  %v1633 = vmul.f32 %v1315, 1.442695
  %v1634 = vpow.pop %v1633
  %v1635 = vmul.f32 %v1316, 1.442695
  %v1636 = vpow.pop %v1635
  %v1637 = vadd.f32 %v1318, 1.0
  %v1638 = vadd.f32 %v1320, 1.0
  %v1639 = vadd.f32 %v1322, 1.0
  %v1640 = vadd.f32 %v1324, 1.0
  %v1641 = vadd.f32 %v1326, 1.0
  %v1642 = vadd.f32 %v1328, 1.0
  %v1643 = vadd.f32 %v1330, 1.0
  %v1644 = vadd.f32 %v1332, 1.0
  %v1645 = vadd.f32 %v1334, 1.0
  %v1646 = vadd.f32 %v1336, 1.0
  %v1647 = vadd.f32 %v1338, 1.0
  %v1648 = vadd.f32 %v1340, 1.0
  %v1649 = vadd.f32 %v1342, 1.0
  %v1650 = vadd.f32 %v1344, 1.0
  %v1651 = vadd.f32 %v1346, 1.0
  %v1652 = vadd.f32 %v1348, 1.0
  %v1653 = vadd.f32 %v1350, 1.0
  %v1654 = vadd.f32 %v1352, 1.0
  %v1655 = vadd.f32 %v1354, 1.0
  %v1656 = vadd.f32 %v1356, 1.0
  %v1657 = vadd.f32 %v1358, 1.0
  %v1658 = vadd.f32 %v1360, 1.0
  %v1659 = vadd.f32 %v1362, 1.0
  %v1660 = vadd.f32 %v1364, 1.0
  %v1661 = vadd.f32 %v1366, 1.0
  %v1662 = vadd.f32 %v1368, 1.0
  %v1663 = vadd.f32 %v1370, 1.0
  %v1664 = vadd.f32 %v1372, 1.0
  %v1665 = vadd.f32 %v1374, 1.0
  %v1666 = vadd.f32 %v1376, 1.0
  %v1667 = vadd.f32 %v1378, 1.0
  %v1668 = vadd.f32 %v1380, 1.0
  %v1669 = vadd.f32 %v1382, 1.0
  %v1670 = vadd.f32 %v1384, 1.0
  %v1671 = vadd.f32 %v1386, 1.0
  %v1672 = vadd.f32 %v1388, 1.0
  %v1673 = vadd.f32 %v1390, 1.0
  %v1674 = vadd.f32 %v1392, 1.0
  %v1675 = vadd.f32 %v1394, 1.0
  %v1676 = vadd.f32 %v1396, 1.0
  %v1677 = vadd.f32 %v1398, 1.0
  %v1678 = vadd.f32 %v1400, 1.0
  %v1679 = vadd.f32 %v1402, 1.0
  %v1680 = vadd.f32 %v1404, 1.0
  %v1681 = vadd.f32 %v1406, 1.0
  %v1682 = vadd.f32 %v1408, 1.0
  %v1683 = vadd.f32 %v1410, 1.0
  %v1684 = vadd.f32 %v1412, 1.0
  %v1685 = vadd.f32 %v1414, 1.0
  %v1686 = vadd.f32 %v1416, 1.0
  %v1687 = vadd.f32 %v1418, 1.0
  %v1688 = vadd.f32 %v1420, 1.0
  %v1689 = vadd.f32 %v1422, 1.0
  %v1690 = vadd.f32 %v1424, 1.0
  %v1691 = vadd.f32 %v1426, 1.0
  %v1692 = vadd.f32 %v1428, 1.0
  %v1693 = vadd.f32 %v1430, 1.0
  %v1694 = vadd.f32 %v1432, 1.0
  %v1695 = vadd.f32 %v1434, 1.0
  %v1696 = vadd.f32 %v1436, 1.0
  %v1697 = vadd.f32 %v1438, 1.0
  %v1698 = vadd.f32 %v1440, 1.0
  %v1699 = vadd.f32 %v1442, 1.0
  %v1700 = vadd.f32 %v1444, 1.0
  %v1701 = vadd.f32 %v1446, 1.0
  %v1702 = vadd.f32 %v1448, 1.0
  %v1703 = vadd.f32 %v1450, 1.0
  %v1704 = vadd.f32 %v1452, 1.0
  %v1705 = vadd.f32 %v1454, 1.0
  %v1706 = vadd.f32 %v1456, 1.0
  %v1707 = vadd.f32 %v1458, 1.0
  %v1708 = vadd.f32 %v1460, 1.0
  %v1709 = vadd.f32 %v1462, 1.0
  %v1710 = vadd.f32 %v1464, 1.0
  %v1711 = vadd.f32 %v1466, 1.0
  %v1712 = vadd.f32 %v1468, 1.0
  %v1713 = vadd.f32 %v1470, 1.0
  %v1714 = vadd.f32 %v1472, 1.0
  %v1715 = vadd.f32 %v1474, 1.0
  %v1716 = vadd.f32 %v1476, 1.0
  %v1717 = vadd.f32 %v1478, 1.0
  %v1718 = vadd.f32 %v1480, 1.0
  %v1719 = vadd.f32 %v1482, 1.0
  %v1720 = vadd.f32 %v1484, 1.0
  %v1721 = vadd.f32 %v1486, 1.0
  %v1722 = vadd.f32 %v1488, 1.0
  %v1723 = vadd.f32 %v1490, 1.0
  %v1724 = vadd.f32 %v1492, 1.0
  %v1725 = vadd.f32 %v1494, 1.0
  %v1726 = vadd.f32 %v1496, 1.0
  %v1727 = vadd.f32 %v1498, 1.0
  %v1728 = vadd.f32 %v1500, 1.0
  %v1729 = vadd.f32 %v1502, 1.0
  %v1730 = vadd.f32 %v1504, 1.0
  %v1731 = vadd.f32 %v1506, 1.0
  %v1732 = vadd.f32 %v1508, 1.0
  %v1733 = vadd.f32 %v1510, 1.0
  %v1734 = vadd.f32 %v1512, 1.0
  %v1735 = vadd.f32 %v1514, 1.0
  %v1736 = vadd.f32 %v1516, 1.0
  %v1737 = vadd.f32 %v1518, 1.0
  %v1738 = vadd.f32 %v1520, 1.0
  %v1739 = vadd.f32 %v1522, 1.0
  %v1740 = vadd.f32 %v1524, 1.0
  %v1741 = vadd.f32 %v1526, 1.0
  %v1742 = vadd.f32 %v1528, 1.0
  %v1743 = vadd.f32 %v1530, 1.0
  %v1744 = vadd.f32 %v1532, 1.0
  %v1745 = vadd.f32 %v1534, 1.0
  %v1746 = vadd.f32 %v1536, 1.0
  %v1747 = vadd.f32 %v1538, 1.0
  %v1748 = vadd.f32 %v1540, 1.0
  %v1749 = vadd.f32 %v1542, 1.0
  %v1750 = vadd.f32 %v1544, 1.0
  %v1751 = vadd.f32 %v1546, 1.0
  %v1752 = vadd.f32 %v1548, 1.0
  %v1753 = vadd.f32 %v1550, 1.0
  %v1754 = vadd.f32 %v1552, 1.0
  %v1755 = vadd.f32 %v1554, 1.0
  %v1756 = vadd.f32 %v1556, 1.0
  %v1757 = vadd.f32 %v1558, 1.0
  %v1758 = vadd.f32 %v1560, 1.0
  %v1759 = vadd.f32 %v1562, 1.0
  %v1760 = vadd.f32 %v1564, 1.0
  %v1761 = vadd.f32 %v1566, 1.0
  %v1762 = vadd.f32 %v1568, 1.0
  %v1763 = vadd.f32 %v1570, 1.0
  %v1764 = vadd.f32 %v1572, 1.0
  %v1765 = vadd.f32 %v1574, 1.0
  %v1766 = vadd.f32 %v1576, 1.0
  %v1767 = vadd.f32 %v1578, 1.0
  %v1768 = vadd.f32 %v1580, 1.0
  %v1769 = vadd.f32 %v1582, 1.0
  %v1770 = vadd.f32 %v1584, 1.0
  %v1771 = vadd.f32 %v1586, 1.0
  %v1772 = vadd.f32 %v1588, 1.0
  %v1773 = vadd.f32 %v1590, 1.0
  %v1774 = vadd.f32 %v1592, 1.0
  %v1775 = vadd.f32 %v1594, 1.0
  %v1776 = vadd.f32 %v1596, 1.0
  %v1777 = vadd.f32 %v1598, 1.0
  %v1778 = vadd.f32 %v1600, 1.0
  %v1779 = vadd.f32 %v1602, 1.0
  %v1780 = vadd.f32 %v1604, 1.0
  %v1781 = vadd.f32 %v1606, 1.0
  %v1782 = vadd.f32 %v1608, 1.0
  %v1783 = vadd.f32 %v1610, 1.0
  %v1784 = vadd.f32 %v1612, 1.0
  %v1785 = vadd.f32 %v1614, 1.0
  %v1786 = vadd.f32 %v1616, 1.0
  %v1787 = vadd.f32 %v1618, 1.0
  %v1788 = vadd.f32 %v1620, 1.0
  %v1789 = vadd.f32 %v1622, 1.0
  %v1790 = vadd.f32 %v1624, 1.0
  %v1791 = vadd.f32 %v1626, 1.0
  %v1792 = vadd.f32 %v1628, 1.0
  %v1793 = vadd.f32 %v1630, 1.0
  %v1794 = vadd.f32 %v1632, 1.0
  %v1795 = vadd.f32 %v1634, 1.0
  %v1796 = vadd.f32 %v1636, 1.0
  %v1797 = vrcp.pop %v1637
  %v1798 = vmul.f32 1.0, %v1797
  %v1799 = vrcp.pop %v1638
  %v1800 = vmul.f32 1.0, %v1799
  %v1801 = vrcp.pop %v1639
  %v1802 = vmul.f32 1.0, %v1801
  %v1803 = vrcp.pop %v1640
  %v1804 = vmul.f32 1.0, %v1803
  %v1805 = vrcp.pop %v1641
  %v1806 = vmul.f32 1.0, %v1805
  %v1807 = vrcp.pop %v1642
  %v1808 = vmul.f32 1.0, %v1807
  %v1809 = vrcp.pop %v1643
  %v1810 = vmul.f32 1.0, %v1809
  %v1811 = vrcp.pop %v1644
  %v1812 = vmul.f32 1.0, %v1811
  %v1813 = vrcp.pop %v1645
  %v1814 = vmul.f32 1.0, %v1813
  %v1815 = vrcp.pop %v1646
  %v1816 = vmul.f32 1.0, %v1815
  %v1817 = vrcp.pop %v1647
  %v1818 = vmul.f32 1.0, %v1817
  %v1819 = vrcp.pop %v1648
  %v1820 = vmul.f32 1.0, %v1819
  %v1821 = vrcp.pop %v1649
  %v1822 = vmul.f32 1.0, %v1821
  %v1823 = vrcp.pop %v1650
  %v1824 = vmul.f32 1.0, %v1823
  %v1825 = vrcp.pop %v1651
  %v1826 = vmul.f32 1.0, %v1825
  %v1827 = vrcp.pop %v1652
  %v1828 = vmul.f32 1.0, %v1827
  %v1829 = vrcp.pop %v1653
  %v1830 = vmul.f32 1.0, %v1829
  %v1831 = vrcp.pop %v1654
  %v1832 = vmul.f32 1.0, %v1831
  %v1833 = vrcp.pop %v1655
  %v1834 = vmul.f32 1.0, %v1833
  %v1835 = vrcp.pop %v1656
  %v1836 = vmul.f32 1.0, %v1835
  %v1837 = vrcp.pop %v1657
  %v1838 = vmul.f32 1.0, %v1837
  %v1839 = vrcp.pop %v1658
  %v1840 = vmul.f32 1.0, %v1839
  %v1841 = vrcp.pop %v1659
  %v1842 = vmul.f32 1.0, %v1841
  %v1843 = vrcp.pop %v1660
  %v1844 = vmul.f32 1.0, %v1843
  %v1845 = vrcp.pop %v1661
  %v1846 = vmul.f32 1.0, %v1845
  %v1847 = vrcp.pop %v1662
  %v1848 = vmul.f32 1.0, %v1847
  %v1849 = vrcp.pop %v1663
  %v1850 = vmul.f32 1.0, %v1849
  %v1851 = vrcp.pop %v1664
  %v1852 = vmul.f32 1.0, %v1851
  %v1853 = vrcp.pop %v1665
  %v1854 = vmul.f32 1.0, %v1853
  %v1855 = vrcp.pop %v1666
  %v1856 = vmul.f32 1.0, %v1855
  %v1857 = vrcp.pop %v1667
  %v1858 = vmul.f32 1.0, %v1857
  %v1859 = vrcp.pop %v1668
  %v1860 = vmul.f32 1.0, %v1859
  %v1861 = vrcp.pop %v1669
  %v1862 = vmul.f32 1.0, %v1861
  %v1863 = vrcp.pop %v1670
  %v1864 = vmul.f32 1.0, %v1863
  %v1865 = vrcp.pop %v1671
  %v1866 = vmul.f32 1.0, %v1865
  %v1867 = vrcp.pop %v1672
  %v1868 = vmul.f32 1.0, %v1867
  %v1869 = vrcp.pop %v1673
  %v1870 = vmul.f32 1.0, %v1869
  %v1871 = vrcp.pop %v1674
  %v1872 = vmul.f32 1.0, %v1871
  %v1873 = vrcp.pop %v1675
  %v1874 = vmul.f32 1.0, %v1873
  %v1875 = vrcp.pop %v1676
  %v1876 = vmul.f32 1.0, %v1875
  %v1877 = vrcp.pop %v1677
  %v1878 = vmul.f32 1.0, %v1877
  %v1879 = vrcp.pop %v1678
  %v1880 = vmul.f32 1.0, %v1879
  %v1881 = vrcp.pop %v1679
  %v1882 = vmul.f32 1.0, %v1881
  %v1883 = vrcp.pop %v1680
  %v1884 = vmul.f32 1.0, %v1883
  %v1885 = vrcp.pop %v1681
  %v1886 = vmul.f32 1.0, %v1885
  %v1887 = vrcp.pop %v1682
  %v1888 = vmul.f32 1.0, %v1887
  %v1889 = vrcp.pop %v1683
  %v1890 = vmul.f32 1.0, %v1889
  %v1891 = vrcp.pop %v1684
  %v1892 = vmul.f32 1.0, %v1891
  %v1893 = vrcp.pop %v1685
  %v1894 = vmul.f32 1.0, %v1893
  %v1895 = vrcp.pop %v1686
  %v1896 = vmul.f32 1.0, %v1895
  %v1897 = vrcp.pop %v1687
  %v1898 = vmul.f32 1.0, %v1897
  %v1899 = vrcp.pop %v1688
  %v1900 = vmul.f32 1.0, %v1899
  %v1901 = vrcp.pop %v1689
  %v1902 = vmul.f32 1.0, %v1901
  %v1903 = vrcp.pop %v1690
  %v1904 = vmul.f32 1.0, %v1903
  %v1905 = vrcp.pop %v1691
  %v1906 = vmul.f32 1.0, %v1905
  %v1907 = vrcp.pop %v1692
  %v1908 = vmul.f32 1.0, %v1907
  %v1909 = vrcp.pop %v1693
  %v1910 = vmul.f32 1.0, %v1909
  %v1911 = vrcp.pop %v1694
  %v1912 = vmul.f32 1.0, %v1911
  %v1913 = vrcp.pop %v1695
  %v1914 = vmul.f32 1.0, %v1913
  %v1915 = vrcp.pop %v1696
  %v1916 = vmul.f32 1.0, %v1915
  %v1917 = vrcp.pop %v1697
  %v1918 = vmul.f32 1.0, %v1917
  %v1919 = vrcp.pop %v1698
  %v1920 = vmul.f32 1.0, %v1919
  %v1921 = vrcp.pop %v1699
  %v1922 = vmul.f32 1.0, %v1921
  %v1923 = vrcp.pop %v1700
  %v1924 = vmul.f32 1.0, %v1923
  %v1925 = vrcp.pop %v1701
  %v1926 = vmul.f32 1.0, %v1925
  %v1927 = vrcp.pop %v1702
  %v1928 = vmul.f32 1.0, %v1927
  %v1929 = vrcp.pop %v1703
  %v1930 = vmul.f32 1.0, %v1929
  %v1931 = vrcp.pop %v1704
  %v1932 = vmul.f32 1.0, %v1931
  %v1933 = vrcp.pop %v1705
  %v1934 = vmul.f32 1.0, %v1933
  %v1935 = vrcp.pop %v1706
  %v1936 = vmul.f32 1.0, %v1935
  %v1937 = vrcp.pop %v1707
  %v1938 = vmul.f32 1.0, %v1937
  %v1939 = vrcp.pop %v1708
  %v1940 = vmul.f32 1.0, %v1939
  %v1941 = vrcp.pop %v1709
  %v1942 = vmul.f32 1.0, %v1941
  %v1943 = vrcp.pop %v1710
  %v1944 = vmul.f32 1.0, %v1943
  %v1945 = vrcp.pop %v1711
  %v1946 = vmul.f32 1.0, %v1945
  %v1947 = vrcp.pop %v1712
  %v1948 = vmul.f32 1.0, %v1947
  %v1949 = vrcp.pop %v1713
  %v1950 = vmul.f32 1.0, %v1949
  %v1951 = vrcp.pop %v1714
  %v1952 = vmul.f32 1.0, %v1951
  %v1953 = vrcp.pop %v1715
  %v1954 = vmul.f32 1.0, %v1953
  %v1955 = vrcp.pop %v1716
  %v1956 = vmul.f32 1.0, %v1955
  %v1957 = vrcp.pop %v1717
  %v1958 = vmul.f32 1.0, %v1957
  %v1959 = vrcp.pop %v1718
  %v1960 = vmul.f32 1.0, %v1959
  %v1961 = vrcp.pop %v1719
  %v1962 = vmul.f32 1.0, %v1961
  %v1963 = vrcp.pop %v1720
  %v1964 = vmul.f32 1.0, %v1963
  %v1965 = vrcp.pop %v1721
  %v1966 = vmul.f32 1.0, %v1965
  %v1967 = vrcp.pop %v1722
  %v1968 = vmul.f32 1.0, %v1967
  %v1969 = vrcp.pop %v1723
  %v1970 = vmul.f32 1.0, %v1969
  %v1971 = vrcp.pop %v1724
  %v1972 = vmul.f32 1.0, %v1971
  %v1973 = vrcp.pop %v1725
  %v1974 = vmul.f32 1.0, %v1973
  %v1975 = vrcp.pop %v1726
  %v1976 = vmul.f32 1.0, %v1975
  %v1977 = vrcp.pop %v1727
  %v1978 = vmul.f32 1.0, %v1977
  %v1979 = vrcp.pop %v1728
  %v1980 = vmul.f32 1.0, %v1979
  %v1981 = vrcp.pop %v1729
  %v1982 = vmul.f32 1.0, %v1981
  %v1983 = vrcp.pop %v1730
  %v1984 = vmul.f32 1.0, %v1983
  %v1985 = vrcp.pop %v1731
  %v1986 = vmul.f32 1.0, %v1985
  %v1987 = vrcp.pop %v1732
  %v1988 = vmul.f32 1.0, %v1987
  %v1989 = vrcp.pop %v1733
  %v1990 = vmul.f32 1.0, %v1989
  %v1991 = vrcp.pop %v1734
  %v1992 = vmul.f32 1.0, %v1991
  %v1993 = vrcp.pop %v1735
  %v1994 = vmul.f32 1.0, %v1993
  %v1995 = vrcp.pop %v1736
  %v1996 = vmul.f32 1.0, %v1995
  %v1997 = vrcp.pop %v1737
  %v1998 = vmul.f32 1.0, %v1997
  %v1999 = vrcp.pop %v1738
  %v2000 = vmul.f32 1.0, %v1999
  %v2001 = vrcp.pop %v1739
  %v2002 = vmul.f32 1.0, %v2001
  %v2003 = vrcp.pop %v1740
  %v2004 = vmul.f32 1.0, %v2003
  %v2005 = vrcp.pop %v1741
  %v2006 = vmul.f32 1.0, %v2005
  %v2007 = vrcp.pop %v1742
  %v2008 = vmul.f32 1.0, %v2007
  %v2009 = vrcp.pop %v1743
  %v2010 = vmul.f32 1.0, %v2009
  %v2011 = vrcp.pop %v1744
  %v2012 = vmul.f32 1.0, %v2011
  %v2013 = vrcp.pop %v1745
  %v2014 = vmul.f32 1.0, %v2013
  %v2015 = vrcp.pop %v1746
  %v2016 = vmul.f32 1.0, %v2015
  %v2017 = vrcp.pop %v1747
  %v2018 = vmul.f32 1.0, %v2017
  %v2019 = vrcp.pop %v1748
  %v2020 = vmul.f32 1.0, %v2019
  %v2021 = vrcp.pop %v1749
  %v2022 = vmul.f32 1.0, %v2021
  %v2023 = vrcp.pop %v1750
  %v2024 = vmul.f32 1.0, %v2023
  %v2025 = vrcp.pop %v1751
  %v2026 = vmul.f32 1.0, %v2025
  %v2027 = vrcp.pop %v1752
  %v2028 = vmul.f32 1.0, %v2027
  %v2029 = vrcp.pop %v1753
  %v2030 = vmul.f32 1.0, %v2029
  %v2031 = vrcp.pop %v1754
  %v2032 = vmul.f32 1.0, %v2031
  %v2033 = vrcp.pop %v1755
  %v2034 = vmul.f32 1.0, %v2033
  %v2035 = vrcp.pop %v1756
  %v2036 = vmul.f32 1.0, %v2035
  %v2037 = vrcp.pop %v1757
  %v2038 = vmul.f32 1.0, %v2037
  %v2039 = vrcp.pop %v1758
  %v2040 = vmul.f32 1.0, %v2039
  %v2041 = vrcp.pop %v1759
  %v2042 = vmul.f32 1.0, %v2041
  %v2043 = vrcp.pop %v1760
  %v2044 = vmul.f32 1.0, %v2043
  %v2045 = vrcp.pop %v1761
  %v2046 = vmul.f32 1.0, %v2045
  %v2047 = vrcp.pop %v1762
  %v2048 = vmul.f32 1.0, %v2047
  %v2049 = vrcp.pop %v1763
  %v2050 = vmul.f32 1.0, %v2049
  %v2051 = vrcp.pop %v1764
  %v2052 = vmul.f32 1.0, %v2051
  %v2053 = vrcp.pop %v1765
  %v2054 = vmul.f32 1.0, %v2053
  %v2055 = vrcp.pop %v1766
  %v2056 = vmul.f32 1.0, %v2055
  %v2057 = vrcp.pop %v1767
  %v2058 = vmul.f32 1.0, %v2057
  %v2059 = vrcp.pop %v1768
  %v2060 = vmul.f32 1.0, %v2059
  %v2061 = vrcp.pop %v1769
  %v2062 = vmul.f32 1.0, %v2061
  %v2063 = vrcp.pop %v1770
  %v2064 = vmul.f32 1.0, %v2063
  %v2065 = vrcp.pop %v1771
  %v2066 = vmul.f32 1.0, %v2065
  %v2067 = vrcp.pop %v1772
  %v2068 = vmul.f32 1.0, %v2067
  %v2069 = vrcp.pop %v1773
  %v2070 = vmul.f32 1.0, %v2069
  %v2071 = vrcp.pop %v1774
  %v2072 = vmul.f32 1.0, %v2071
  %v2073 = vrcp.pop %v1775
  %v2074 = vmul.f32 1.0, %v2073
  %v2075 = vrcp.pop %v1776
  %v2076 = vmul.f32 1.0, %v2075
  %v2077 = vrcp.pop %v1777
  %v2078 = vmul.f32 1.0, %v2077
  %v2079 = vrcp.pop %v1778
  %v2080 = vmul.f32 1.0, %v2079
  %v2081 = vrcp.pop %v1779
  %v2082 = vmul.f32 1.0, %v2081
  %v2083 = vrcp.pop %v1780
  %v2084 = vmul.f32 1.0, %v2083
  %v2085 = vrcp.pop %v1781
  %v2086 = vmul.f32 1.0, %v2085
  %v2087 = vrcp.pop %v1782
  %v2088 = vmul.f32 1.0, %v2087
  %v2089 = vrcp.pop %v1783
  %v2090 = vmul.f32 1.0, %v2089
  %v2091 = vrcp.pop %v1784
  %v2092 = vmul.f32 1.0, %v2091
  %v2093 = vrcp.pop %v1785
  %v2094 = vmul.f32 1.0, %v2093
  %v2095 = vrcp.pop %v1786
  %v2096 = vmul.f32 1.0, %v2095
  %v2097 = vrcp.pop %v1787
  %v2098 = vmul.f32 1.0, %v2097
  %v2099 = vrcp.pop %v1788
  %v2100 = vmul.f32 1.0, %v2099
  %v2101 = vrcp.pop %v1789
  %v2102 = vmul.f32 1.0, %v2101
  %v2103 = vrcp.pop %v1790
  %v2104 = vmul.f32 1.0, %v2103
  %v2105 = vrcp.pop %v1791
  %v2106 = vmul.f32 1.0, %v2105
  %v2107 = vrcp.pop %v1792
  %v2108 = vmul.f32 1.0, %v2107
  %v2109 = vrcp.pop %v1793
  %v2110 = vmul.f32 1.0, %v2109
  %v2111 = vrcp.pop %v1794
  %v2112 = vmul.f32 1.0, %v2111
  %v2113 = vrcp.pop %v1795
  %v2114 = vmul.f32 1.0, %v2113
  %v2115 = vrcp.pop %v1796
  %v2116 = vmul.f32 1.0, %v2115
  %v2117 = vmul.f32 %v627, %v1798
  %v2118 = vmul.f32 %v629, %v1800
  %v2119 = vmul.f32 %v740, %v1802
  %v2120 = vmul.f32 %v742, %v1804
  %v2121 = vmul.f32 %v853, %v1806
  %v2122 = vmul.f32 %v855, %v1808
  %v2123 = vmul.f32 %v966, %v1810
  %v2124 = vmul.f32 %v968, %v1812
  %v2125 = vmul.f32 %v1079, %v1814
  %v2126 = vmul.f32 %v1081, %v1816
  %v2127 = vmul.f32 %v631, %v1818
  %v2128 = vmul.f32 %v633, %v1820
  %v2129 = vmul.f32 %v744, %v1822
  %v2130 = vmul.f32 %v746, %v1824
  %v2131 = vmul.f32 %v857, %v1826
  %v2132 = vmul.f32 %v859, %v1828
  %v2133 = vmul.f32 %v970, %v1830
  %v2134 = vmul.f32 %v972, %v1832
  %v2135 = vmul.f32 %v1083, %v1834
  %v2136 = vmul.f32 %v1085, %v1836
  %v2137 = vmul.f32 %v637, %v1838
  %v2138 = vmul.f32 %v639, %v1840
  %v2139 = vmul.f32 %v750, %v1842
  %v2140 = vmul.f32 %v752, %v1844
  %v2141 = vmul.f32 %v863, %v1846
  %v2142 = vmul.f32 %v865, %v1848
  %v2143 = vmul.f32 %v976, %v1850
  %v2144 = vmul.f32 %v978, %v1852
  %v2145 = vmul.f32 %v1089, %v1854
  %v2146 = vmul.f32 %v1091, %v1856
  %v2147 = vmul.f32 %v641, %v1858
  %v2148 = vmul.f32 %v643, %v1860
  %v2149 = vmul.f32 %v754, %v1862
  %v2150 = vmul.f32 %v756, %v1864
  %v2151 = vmul.f32 %v867, %v1866
  %v2152 = vmul.f32 %v869, %v1868
  %v2153 = vmul.f32 %v980, %v1870
  %v2154 = vmul.f32 %v982, %v1872
  %v2155 = vmul.f32 %v1093, %v1874
  %v2156 = vmul.f32 %v1095, %v1876
  %v2157 = vmul.f32 %v647, %v1878
  %v2158 = vmul.f32 %v649, %v1880
  %v2159 = vmul.f32 %v760, %v1882
  %v2160 = vmul.f32 %v762, %v1884
  %v2161 = vmul.f32 %v873, %v1886
  %v2162 = vmul.f32 %v875, %v1888
  %v2163 = vmul.f32 %v986, %v1890
  %v2164 = vmul.f32 %v988, %v1892
  %v2165 = vmul.f32 %v1099, %v1894
  %v2166 = vmul.f32 %v1101, %v1896
  %v2167 = vmul.f32 %v651, %v1898
  %v2168 = vmul.f32 %v653, %v1900
  %v2169 = vmul.f32 %v764, %v1902
  %v2170 = vmul.f32 %v766, %v1904
  %v2171 = vmul.f32 %v877, %v1906
  %v2172 = vmul.f32 %v879, %v1908
  %v2173 = vmul.f32 %v990, %v1910
  %v2174 = vmul.f32 %v992, %v1912
  %v2175 = vmul.f32 %v1103, %v1914
  %v2176 = vmul.f32 %v1105, %v1916
  %v2177 = vmul.f32 %v657, %v1918
  %v2178 = vmul.f32 %v659, %v1920
  %v2179 = vmul.f32 %v770, %v1922
  %v2180 = vmul.f32 %v772, %v1924
  %v2181 = vmul.f32 %v883, %v1926
  %v2182 = vmul.f32 %v885, %v1928
  %v2183 = vmul.f32 %v996, %v1930
  %v2184 = vmul.f32 %v998, %v1932
  %v2185 = vmul.f32 %v1109, %v1934
  %v2186 = vmul.f32 %v1111, %v1936
  %v2187 = vmul.f32 %v661, %v1938
  %v2188 = vmul.f32 %v663, %v1940
  %v2189 = vmul.f32 %v774, %v1942
  %v2190 = vmul.f32 %v776, %v1944
  %v2191 = vmul.f32 %v887, %v1946
  %v2192 = vmul.f32 %v889, %v1948
  %v2193 = vmul.f32 %v1000, %v1950
  %v2194 = vmul.f32 %v1002, %v1952
  %v2195 = vmul.f32 %v1113, %v1954
  %v2196 = vmul.f32 %v1115, %v1956
  %v2197 = vmul.f32 %v667, %v1958
  %v2198 = vmul.f32 %v669, %v1960
  %v2199 = vmul.f32 %v780, %v1962
  %v2200 = vmul.f32 %v782, %v1964
  %v2201 = vmul.f32 %v893, %v1966
  %v2202 = vmul.f32 %v895, %v1968
  %v2203 = vmul.f32 %v1006, %v1970
  %v2204 = vmul.f32 %v1008, %v1972
  %v2205 = vmul.f32 %v1119, %v1974
  %v2206 = vmul.f32 %v1121, %v1976
  %v2207 = vmul.f32 %v671, %v1978
  %v2208 = vmul.f32 %v673, %v1980
  %v2209 = vmul.f32 %v784, %v1982
  %v2210 = vmul.f32 %v786, %v1984
  %v2211 = vmul.f32 %v897, %v1986
  %v2212 = vmul.f32 %v899, %v1988
  %v2213 = vmul.f32 %v1010, %v1990
  %v2214 = vmul.f32 %v1012, %v1992
  %v2215 = vmul.f32 %v1123, %v1994
  %v2216 = vmul.f32 %v1125, %v1996
  %v2217 = vmul.f32 %v677, %v1998
  %v2218 = vmul.f32 %v679, %v2000
  %v2219 = vmul.f32 %v790, %v2002
  %v2220 = vmul.f32 %v792, %v2004
  %v2221 = vmul.f32 %v903, %v2006
  %v2222 = vmul.f32 %v905, %v2008
  %v2223 = vmul.f32 %v1016, %v2010
  %v2224 = vmul.f32 %v1018, %v2012
  %v2225 = vmul.f32 %v1129, %v2014
  %v2226 = vmul.f32 %v1131, %v2016
  %v2227 = vmul.f32 %v681, %v2018
  %v2228 = vmul.f32 %v683, %v2020
  %v2229 = vmul.f32 %v794, %v2022
  %v2230 = vmul.f32 %v796, %v2024
  %v2231 = vmul.f32 %v907, %v2026
  %v2232 = vmul.f32 %v909, %v2028
  %v2233 = vmul.f32 %v1020, %v2030
  %v2234 = vmul.f32 %v1022, %v2032
  %v2235 = vmul.f32 %v1133, %v2034
  %v2236 = vmul.f32 %v1135, %v2036
  %v2237 = vmul.f32 %v687, %v2038
  %v2238 = vmul.f32 %v689, %v2040
  %v2239 = vmul.f32 %v800, %v2042
  %v2240 = vmul.f32 %v802, %v2044
  %v2241 = vmul.f32 %v913, %v2046
  %v2242 = vmul.f32 %v915, %v2048
  %v2243 = vmul.f32 %v1026, %v2050
  %v2244 = vmul.f32 %v1028, %v2052
  %v2245 = vmul.f32 %v1139, %v2054
  %v2246 = vmul.f32 %v1141, %v2056
  %v2247 = vmul.f32 %v691, %v2058
  %v2248 = vmul.f32 %v693, %v2060
  %v2249 = vmul.f32 %v804, %v2062
  %v2250 = vmul.f32 %v806, %v2064
  %v2251 = vmul.f32 %v917, %v2066
  %v2252 = vmul.f32 %v919, %v2068
  %v2253 = vmul.f32 %v1030, %v2070
  %v2254 = vmul.f32 %v1032, %v2072
  %v2255 = vmul.f32 %v1143, %v2074
  %v2256 = vmul.f32 %v1145, %v2076
  %v2257 = vmul.f32 %v697, %v2078
  %v2258 = vmul.f32 %v699, %v2080
  %v2259 = vmul.f32 %v810, %v2082
  %v2260 = vmul.f32 %v812, %v2084
  %v2261 = vmul.f32 %v923, %v2086
  %v2262 = vmul.f32 %v925, %v2088
  %v2263 = vmul.f32 %v1036, %v2090
  %v2264 = vmul.f32 %v1038, %v2092
  %v2265 = vmul.f32 %v1149, %v2094
  %v2266 = vmul.f32 %v1151, %v2096
  %v2267 = vmul.f32 %v701, %v2098
  %v2268 = vmul.f32 %v703, %v2100
  %v2269 = vmul.f32 %v814, %v2102
  %v2270 = vmul.f32 %v816, %v2104
  %v2271 = vmul.f32 %v927, %v2106
  %v2272 = vmul.f32 %v929, %v2108
  %v2273 = vmul.f32 %v1040, %v2110
  %v2274 = vmul.f32 %v1042, %v2112
  %v2275 = vmul.f32 %v1153, %v2114
  %v2276 = vmul.f32 %v1155, %v2116
  %v2277 = vpack.c.bf16 %v2127, %v2117
  %v2278 = vpack.c.bf16 %v2128, %v2118
  %v2279 = vpack.c.bf16 %v2129, %v2119
  %v2280 = vpack.c.bf16 %v2130, %v2120
  %v2281 = vpack.c.bf16 %v2131, %v2121
  %v2282 = vpack.c.bf16 %v2132, %v2122
  %v2283 = vpack.c.bf16 %v2133, %v2123
  %v2284 = vpack.c.bf16 %v2134, %v2124
  %v2285 = vpack.c.bf16 %v2135, %v2125
  %v2286 = vpack.c.bf16 %v2136, %v2126
  %v2287 = vpack.c.bf16 %v2147, %v2137
  %v2288 = vpack.c.bf16 %v2148, %v2138
  %v2289 = vpack.c.bf16 %v2149, %v2139
  %v2290 = vpack.c.bf16 %v2150, %v2140
  %v2291 = vpack.c.bf16 %v2151, %v2141
  %v2292 = vpack.c.bf16 %v2152, %v2142
  %v2293 = vpack.c.bf16 %v2153, %v2143
  %v2294 = vpack.c.bf16 %v2154, %v2144
  %v2295 = vpack.c.bf16 %v2155, %v2145
  %v2296 = vpack.c.bf16 %v2156, %v2146
  %v2297 = vpack.c.bf16 %v2167, %v2157
  %v2298 = vpack.c.bf16 %v2168, %v2158
  %v2299 = vpack.c.bf16 %v2169, %v2159
  %v2300 = vpack.c.bf16 %v2170, %v2160
  %v2301 = vpack.c.bf16 %v2171, %v2161
  %v2302 = vpack.c.bf16 %v2172, %v2162
  %v2303 = vpack.c.bf16 %v2173, %v2163
  %v2304 = vpack.c.bf16 %v2174, %v2164
  %v2305 = vpack.c.bf16 %v2175, %v2165
  %v2306 = vpack.c.bf16 %v2176, %v2166
  %v2307 = vpack.c.bf16 %v2187, %v2177
  %v2308 = vpack.c.bf16 %v2188, %v2178
  %v2309 = vpack.c.bf16 %v2189, %v2179
  %v2310 = vpack.c.bf16 %v2190, %v2180
  %v2311 = vpack.c.bf16 %v2191, %v2181
  %v2312 = vpack.c.bf16 %v2192, %v2182
  %v2313 = vpack.c.bf16 %v2193, %v2183
  %v2314 = vpack.c.bf16 %v2194, %v2184
  %v2315 = vpack.c.bf16 %v2195, %v2185
  %v2316 = vpack.c.bf16 %v2196, %v2186
  %v2317 = vpack.c.bf16 %v2207, %v2197
  %v2318 = vpack.c.bf16 %v2208, %v2198
  %v2319 = vpack.c.bf16 %v2209, %v2199
  %v2320 = vpack.c.bf16 %v2210, %v2200
  %v2321 = vpack.c.bf16 %v2211, %v2201
  %v2322 = vpack.c.bf16 %v2212, %v2202
  %v2323 = vpack.c.bf16 %v2213, %v2203
  %v2324 = vpack.c.bf16 %v2214, %v2204
  %v2325 = vpack.c.bf16 %v2215, %v2205
  %v2326 = vpack.c.bf16 %v2216, %v2206
  %v2327 = vpack.c.bf16 %v2227, %v2217
  %v2328 = vpack.c.bf16 %v2228, %v2218
  %v2329 = vpack.c.bf16 %v2229, %v2219
  %v2330 = vpack.c.bf16 %v2230, %v2220
  %v2331 = vpack.c.bf16 %v2231, %v2221
  %v2332 = vpack.c.bf16 %v2232, %v2222
  %v2333 = vpack.c.bf16 %v2233, %v2223
  %v2334 = vpack.c.bf16 %v2234, %v2224
  %v2335 = vpack.c.bf16 %v2235, %v2225
  %v2336 = vpack.c.bf16 %v2236, %v2226
  %v2337 = vpack.c.bf16 %v2247, %v2237
  %v2338 = vpack.c.bf16 %v2248, %v2238
  %v2339 = vpack.c.bf16 %v2249, %v2239
  %v2340 = vpack.c.bf16 %v2250, %v2240
  %v2341 = vpack.c.bf16 %v2251, %v2241
  %v2342 = vpack.c.bf16 %v2252, %v2242
  %v2343 = vpack.c.bf16 %v2253, %v2243
  %v2344 = vpack.c.bf16 %v2254, %v2244
  %v2345 = vpack.c.bf16 %v2255, %v2245
  %v2346 = vpack.c.bf16 %v2256, %v2246
  %v2347 = vpack.c.bf16 %v2267, %v2257
  %v2348 = vpack.c.bf16 %v2268, %v2258
  %v2349 = vpack.c.bf16 %v2269, %v2259
  %v2350 = vpack.c.bf16 %v2270, %v2260
  %v2351 = vpack.c.bf16 %v2271, %v2261
  %v2352 = vpack.c.bf16 %v2272, %v2262
  %v2353 = vpack.c.bf16 %v2273, %v2263
  %v2354 = vpack.c.bf16 %v2274, %v2264
  %v2355 = vpack.c.bf16 %v2275, %v2265
  %v2356 = vpack.c.bf16 %v2276, %v2266
  %v2357 = vld [vmem:[%s3] sm:$0xf]
  %v2358 = vld [vmem:[%s3 + $0x4] sm:$0xf]
  %v2359 = vld [vmem:[%s3 + $0x8] sm:$0xf]
  %v2360 = vld [vmem:[%s3 + $0xc] sm:$0xf]
  %v2361 = vld [vmem:[%s3 + $0x10] sm:$0xf]
  %v2362 = vld [vmem:[%s3 + $0x14] sm:$0xf]
  %v2363 = vld [vmem:[%s3 + $0x18] sm:$0xf]
  %v2364 = vld [vmem:[%s3 + $0x1c] sm:$0xf]
  %v2365 = vld [vmem:[%s3 + $0x20] sm:$0xf]
  %v2366 = vld [vmem:[%s3 + $0x24] sm:$0xf]
  %v2367 = vld [vmem:[%s3 + $0x28] sm:$0xf]
  %v2368 = vld [vmem:[%s3 + $0x2c] sm:$0xf]
  %v2369 = vld [vmem:[%s3 + $0x30] sm:$0xf]
  %v2370 = vld [vmem:[%s3 + $0x34] sm:$0xf]
  %v2371 = vld [vmem:[%s3 + $0x38] sm:$0xf]
  %v2372 = vld [vmem:[%s3 + $0x3c] sm:$0xf]
  %v2373 = vld [vmem:[%s3 + $0x40] sm:$0xf]
  %v2374 = vld [vmem:[%s3 + $0x44] sm:$0xf]
  %v2375 = vld [vmem:[%s3 + $0x48] sm:$0xf]
  %v2376 = vld [vmem:[%s3 + $0x4c] sm:$0xf]
  %v2377 = vld [vmem:[%s3 + $0x50] sm:$0xf]
  %v2378 = vld [vmem:[%s3 + $0x54] sm:$0xf]
  %v2379 = vld [vmem:[%s3 + $0x58] sm:$0xf]
  %v2380 = vld [vmem:[%s3 + $0x5c] sm:$0xf]
  %v2381 = vld [vmem:[%s3 + $0x60] sm:$0xf]
  %v2382 = vld [vmem:[%s3 + $0x64] sm:$0xf]
  %v2383 = vld [vmem:[%s3 + $0x68] sm:$0xf]
  %v2384 = vld [vmem:[%s3 + $0x6c] sm:$0xf]
  %v2385 = vld [vmem:[%s3 + $0x70] sm:$0xf]
  %v2386 = vld [vmem:[%s3 + $0x74] sm:$0xf]
  %v2387 = vld [vmem:[%s3 + $0x78] sm:$0xf]
  %v2388 = vld [vmem:[%s3 + $0x7c] sm:$0xf]
  %v2389 = vld [vmem:[%s3 + $0x80] sm:$0xf]
  %v2390 = vld [vmem:[%s3 + $0x84] sm:$0xf]
  %v2391 = vld [vmem:[%s3 + $0x88] sm:$0xf]
  %v2392 = vld [vmem:[%s3 + $0x8c] sm:$0xf]
  %v2393 = vld [vmem:[%s3 + $0x90] sm:$0xf]
  %v2394 = vld [vmem:[%s3 + $0x94] sm:$0xf]
  %v2395 = vld [vmem:[%s3 + $0x98] sm:$0xf]
  %v2396 = vld [vmem:[%s3 + $0x9c] sm:$0xf]
  %v2397 = vld [vmem:[%s3 + $0xa0] sm:$0xf]
  %v2398 = vld [vmem:[%s3 + $0xa4] sm:$0xf]
  %v2399 = vld [vmem:[%s3 + $0xa8] sm:$0xf]
  %v2400 = vld [vmem:[%s3 + $0xac] sm:$0xf]
  %v2401 = vld [vmem:[%s3 + $0xb0] sm:$0xf]
  %v2402 = vld [vmem:[%s3 + $0xb4] sm:$0xf]
  %v2403 = vld [vmem:[%s3 + $0xb8] sm:$0xf]
  %v2404 = vld [vmem:[%s3 + $0xbc] sm:$0xf]
  %v2405 = vld [vmem:[%s3 + $0xc0] sm:$0xf]
  %v2406 = vld [vmem:[%s3 + $0xc4] sm:$0xf]
  %v2407 = vld [vmem:[%s3 + $0xc8] sm:$0xf]
  %v2408 = vld [vmem:[%s3 + $0xcc] sm:$0xf]
  %v2409 = vld [vmem:[%s3 + $0xd0] sm:$0xf]
  %v2410 = vld [vmem:[%s3 + $0xd4] sm:$0xf]
  %v2411 = vld [vmem:[%s3 + $0xd8] sm:$0xf]
  %v2412 = vld [vmem:[%s3 + $0xdc] sm:$0xf]
  %v2413 = vld [vmem:[%s3 + $0xe0] sm:$0xf]
  %v2414 = vld [vmem:[%s3 + $0xe4] sm:$0xf]
  %v2415 = vld [vmem:[%s3 + $0xe8] sm:$0xf]
  %v2416 = vld [vmem:[%s3 + $0xec] sm:$0xf]
  %v2417 = vld [vmem:[%s3 + $0xf0] sm:$0xf]
  %v2418 = vld [vmem:[%s3 + $0xf4] sm:$0xf]
  %v2419 = vld [vmem:[%s3 + $0xf8] sm:$0xf]
  %v2420 = vld [vmem:[%s3 + $0xfc] sm:$0xf]
  %v2421 = vld [vmem:[%s3 + $0x100] sm:$0xf]
  %v2422 = vld [vmem:[%s3 + $0x104] sm:$0xf]
  %v2423 = vld [vmem:[%s3 + $0x108] sm:$0xf]
  %v2424 = vld [vmem:[%s3 + $0x10c] sm:$0xf]
  %v2425 = vld [vmem:[%s3 + $0x110] sm:$0xf]
  %v2426 = vld [vmem:[%s3 + $0x114] sm:$0xf]
  %v2427 = vld [vmem:[%s3 + $0x118] sm:$0xf]
  %v2428 = vld [vmem:[%s3 + $0x11c] sm:$0xf]
  %v2429 = vld [vmem:[%s3 + $0x120] sm:$0xf]
  %v2430 = vld [vmem:[%s3 + $0x124] sm:$0xf]
  %v2431 = vld [vmem:[%s3 + $0x128] sm:$0xf]
  %v2432 = vld [vmem:[%s3 + $0x12c] sm:$0xf]
  %v2433 = vld [vmem:[%s3 + $0x130] sm:$0xf]
  %v2434 = vld [vmem:[%s3 + $0x134] sm:$0xf]
  %v2435 = vld [vmem:[%s3 + $0x138] sm:$0xf]
  %v2436 = vld [vmem:[%s3 + $0x13c] sm:$0xf]
  %v2437 = vld [vmem:[%s3 + $0x140] sm:$0xf]
  %v2438 = vld [vmem:[%s3 + $0x144] sm:$0xf]
  %v2439 = vld [vmem:[%s3 + $0x148] sm:$0xf]
  %v2440 = vld [vmem:[%s3 + $0x14c] sm:$0xf]
  %v2441 = vld [vmem:[%s3 + $0x150] sm:$0xf]
  %v2442 = vld [vmem:[%s3 + $0x154] sm:$0xf]
  %v2443 = vld [vmem:[%s3 + $0x158] sm:$0xf]
  %v2444 = vld [vmem:[%s3 + $0x15c] sm:$0xf]
  %v2445 = vld [vmem:[%s3 + $0x160] sm:$0xf]
  %v2446 = vld [vmem:[%s3 + $0x164] sm:$0xf]
  %v2447 = vld [vmem:[%s3 + $0x168] sm:$0xf]
  %v2448 = vld [vmem:[%s3 + $0x16c] sm:$0xf]
  %v2449 = vld [vmem:[%s3 + $0x170] sm:$0xf]
  %v2450 = vld [vmem:[%s3 + $0x174] sm:$0xf]
  %v2451 = vld [vmem:[%s3 + $0x178] sm:$0xf]
  %v2452 = vld [vmem:[%s3 + $0x17c] sm:$0xf]
  %v2453 = vld [vmem:[%s3 + $0x180] sm:$0xf]
  %v2454 = vld [vmem:[%s3 + $0x184] sm:$0xf]
  %v2455 = vld [vmem:[%s3 + $0x188] sm:$0xf]
  %v2456 = vld [vmem:[%s3 + $0x18c] sm:$0xf]
  %v2457 = vld [vmem:[%s3 + $0x190] sm:$0xf]
  %v2458 = vld [vmem:[%s3 + $0x194] sm:$0xf]
  %v2459 = vld [vmem:[%s3 + $0x198] sm:$0xf]
  %v2460 = vld [vmem:[%s3 + $0x19c] sm:$0xf]
  %v2461 = vld [vmem:[%s3 + $0x1a0] sm:$0xf]
  %v2462 = vld [vmem:[%s3 + $0x1a4] sm:$0xf]
  %v2463 = vld [vmem:[%s3 + $0x1a8] sm:$0xf]
  %v2464 = vld [vmem:[%s3 + $0x1ac] sm:$0xf]
  %v2465 = vld [vmem:[%s3 + $0x1b0] sm:$0xf]
  %v2466 = vld [vmem:[%s3 + $0x1b4] sm:$0xf]
  %v2467 = vld [vmem:[%s3 + $0x1b8] sm:$0xf]
  %v2468 = vld [vmem:[%s3 + $0x1bc] sm:$0xf]
  %v2469 = vld [vmem:[%s3 + $0x1c0] sm:$0xf]
  %v2470 = vld [vmem:[%s3 + $0x1c4] sm:$0xf]
  %v2471 = vld [vmem:[%s3 + $0x1c8] sm:$0xf]
  %v2472 = vld [vmem:[%s3 + $0x1cc] sm:$0xf]
  %v2473 = vld [vmem:[%s3 + $0x1d0] sm:$0xf]
  %v2474 = vld [vmem:[%s3 + $0x1d4] sm:$0xf]
  %v2475 = vld [vmem:[%s3 + $0x1d8] sm:$0xf]
  %v2476 = vld [vmem:[%s3 + $0x1dc] sm:$0xf]
  %v2477 = vld [vmem:[%s3 + $0x1e0] sm:$0xf]
  %v2478 = vld [vmem:[%s3 + $0x1e4] sm:$0xf]
  %v2479 = vld [vmem:[%s3 + $0x1e8] sm:$0xf]
  %v2480 = vld [vmem:[%s3 + $0x1ec] sm:$0xf]
  %v2481 = vld [vmem:[%s3 + $0x1f0] sm:$0xf]
  %v2482 = vld [vmem:[%s3 + $0x1f4] sm:$0xf]
  %v2483 = vld [vmem:[%s3 + $0x1f8] sm:$0xf]
  %v2484 = vld [vmem:[%s3 + $0x1fc] sm:$0xf]
  %v2485 = vld [vmem:[%s3 + $0x200] sm:$0xf]
  %v2486 = vld [vmem:[%s3 + $0x204] sm:$0xf]
  %v2487 = vld [vmem:[%s3 + $0x208] sm:$0xf]
  %v2488 = vld [vmem:[%s3 + $0x20c] sm:$0xf]
  %v2489 = vld [vmem:[%s3 + $0x210] sm:$0xf]
  %v2490 = vld [vmem:[%s3 + $0x214] sm:$0xf]
  %v2491 = vld [vmem:[%s3 + $0x218] sm:$0xf]
  %v2492 = vld [vmem:[%s3 + $0x21c] sm:$0xf]
  %v2493 = vld [vmem:[%s3 + $0x220] sm:$0xf]
  %v2494 = vld [vmem:[%s3 + $0x224] sm:$0xf]
  %v2495 = vld [vmem:[%s3 + $0x228] sm:$0xf]
  %v2496 = vld [vmem:[%s3 + $0x22c] sm:$0xf]
  %v2497 = vld [vmem:[%s3 + $0x230] sm:$0xf]
  %v2498 = vld [vmem:[%s3 + $0x234] sm:$0xf]
  %v2499 = vld [vmem:[%s3 + $0x238] sm:$0xf]
  %v2500 = vld [vmem:[%s3 + $0x23c] sm:$0xf]
  %v2501 = vld [vmem:[%s3 + $0x240] sm:$0xf]
  %v2502 = vld [vmem:[%s3 + $0x244] sm:$0xf]
  %v2503 = vld [vmem:[%s3 + $0x248] sm:$0xf]
  %v2504 = vld [vmem:[%s3 + $0x24c] sm:$0xf]
  %v2505 = vld [vmem:[%s3 + $0x250] sm:$0xf]
  %v2506 = vld [vmem:[%s3 + $0x254] sm:$0xf]
  %v2507 = vld [vmem:[%s3 + $0x258] sm:$0xf]
  %v2508 = vld [vmem:[%s3 + $0x25c] sm:$0xf]
  %v2509 = vld [vmem:[%s3 + $0x260] sm:$0xf]
  %v2510 = vld [vmem:[%s3 + $0x264] sm:$0xf]
  %v2511 = vld [vmem:[%s3 + $0x268] sm:$0xf]
  %v2512 = vld [vmem:[%s3 + $0x26c] sm:$0xf]
  %v2513 = vld [vmem:[%s3 + $0x270] sm:$0xf]
  %v2514 = vld [vmem:[%s3 + $0x274] sm:$0xf]
  %v2515 = vld [vmem:[%s3 + $0x278] sm:$0xf]
  %v2516 = vld [vmem:[%s3 + $0x27c] sm:$0xf]
  %v2517 = vld [vmem:[%s4] sm:$0x1]
  %v2519 = vlaneseq
  %v2520 = vshrl.u32 %v2519, 7
  %v2521 = vsub.s32 0, %v2520
  %v2522 = vrot.slane %v2517, %v2521
  %v2684 = vunpack.c.l.b16 %v2357
  %v2685 = vunpack.c.l.b16 %v2358
  %v2686 = vunpack.c.l.b16 %v2359
  %v2687 = vunpack.c.l.b16 %v2360
  %v2688 = vunpack.c.l.b16 %v2361
  %v2689 = vunpack.c.l.b16 %v2362
  %v2690 = vunpack.c.l.b16 %v2363
  %v2691 = vunpack.c.l.b16 %v2364
  %v2692 = vunpack.c.l.b16 %v2365
  %v2693 = vunpack.c.l.b16 %v2366
  %v2694 = vunpack.c.l.b16 %v2367
  %v2695 = vunpack.c.l.b16 %v2368
  %v2696 = vunpack.c.l.b16 %v2369
  %v2697 = vunpack.c.l.b16 %v2370
  %v2698 = vunpack.c.l.b16 %v2371
  %v2699 = vunpack.c.l.b16 %v2372
  %v2700 = vunpack.c.l.b16 %v2373
  %v2701 = vunpack.c.l.b16 %v2374
  %v2702 = vunpack.c.l.b16 %v2375
  %v2703 = vunpack.c.l.b16 %v2376
  %v2704 = vunpack.c.l.b16 %v2377
  %v2705 = vunpack.c.l.b16 %v2378
  %v2706 = vunpack.c.l.b16 %v2379
  %v2707 = vunpack.c.l.b16 %v2380
  %v2708 = vunpack.c.l.b16 %v2381
  %v2709 = vunpack.c.l.b16 %v2382
  %v2710 = vunpack.c.l.b16 %v2383
  %v2711 = vunpack.c.l.b16 %v2384
  %v2712 = vunpack.c.l.b16 %v2385
  %v2713 = vunpack.c.l.b16 %v2386
  %v2714 = vunpack.c.l.b16 %v2387
  %v2715 = vunpack.c.l.b16 %v2388
  %v2716 = vunpack.c.l.b16 %v2389
  %v2717 = vunpack.c.l.b16 %v2390
  %v2718 = vunpack.c.l.b16 %v2391
  %v2719 = vunpack.c.l.b16 %v2392
  %v2720 = vunpack.c.l.b16 %v2393
  %v2721 = vunpack.c.l.b16 %v2394
  %v2722 = vunpack.c.l.b16 %v2395
  %v2723 = vunpack.c.l.b16 %v2396
  %v2724 = vunpack.c.l.b16 %v2397
  %v2725 = vunpack.c.l.b16 %v2398
  %v2726 = vunpack.c.l.b16 %v2399
  %v2727 = vunpack.c.l.b16 %v2400
  %v2728 = vunpack.c.l.b16 %v2401
  %v2729 = vunpack.c.l.b16 %v2402
  %v2730 = vunpack.c.l.b16 %v2403
  %v2731 = vunpack.c.l.b16 %v2404
  %v2732 = vunpack.c.l.b16 %v2405
  %v2733 = vunpack.c.l.b16 %v2406
  %v2734 = vunpack.c.l.b16 %v2407
  %v2735 = vunpack.c.l.b16 %v2408
  %v2736 = vunpack.c.l.b16 %v2409
  %v2737 = vunpack.c.l.b16 %v2410
  %v2738 = vunpack.c.l.b16 %v2411
  %v2739 = vunpack.c.l.b16 %v2412
  %v2740 = vunpack.c.l.b16 %v2413
  %v2741 = vunpack.c.l.b16 %v2414
  %v2742 = vunpack.c.l.b16 %v2415
  %v2743 = vunpack.c.l.b16 %v2416
  %v2744 = vunpack.c.l.b16 %v2417
  %v2745 = vunpack.c.l.b16 %v2418
  %v2746 = vunpack.c.l.b16 %v2419
  %v2747 = vunpack.c.l.b16 %v2420
  %v2748 = vunpack.c.l.b16 %v2421
  %v2749 = vunpack.c.l.b16 %v2422
  %v2750 = vunpack.c.l.b16 %v2423
  %v2751 = vunpack.c.l.b16 %v2424
  %v2752 = vunpack.c.l.b16 %v2425
  %v2753 = vunpack.c.l.b16 %v2426
  %v2754 = vunpack.c.l.b16 %v2427
  %v2755 = vunpack.c.l.b16 %v2428
  %v2756 = vunpack.c.l.b16 %v2429
  %v2757 = vunpack.c.l.b16 %v2430
  %v2758 = vunpack.c.l.b16 %v2431
  %v2759 = vunpack.c.l.b16 %v2432
  %v2760 = vunpack.c.l.b16 %v2433
  %v2761 = vunpack.c.l.b16 %v2434
  %v2762 = vunpack.c.l.b16 %v2435
  %v2763 = vunpack.c.l.b16 %v2436
  %v2764 = vunpack.c.l.b16 %v2437
  %v2765 = vunpack.c.l.b16 %v2438
  %v2766 = vunpack.c.l.b16 %v2439
  %v2767 = vunpack.c.l.b16 %v2440
  %v2768 = vunpack.c.l.b16 %v2441
  %v2769 = vunpack.c.l.b16 %v2442
  %v2770 = vunpack.c.l.b16 %v2443
  %v2771 = vunpack.c.l.b16 %v2444
  %v2772 = vunpack.c.l.b16 %v2445
  %v2773 = vunpack.c.l.b16 %v2446
  %v2774 = vunpack.c.l.b16 %v2447
  %v2775 = vunpack.c.l.b16 %v2448
  %v2776 = vunpack.c.l.b16 %v2449
  %v2777 = vunpack.c.l.b16 %v2450
  %v2778 = vunpack.c.l.b16 %v2451
  %v2779 = vunpack.c.l.b16 %v2452
  %v2780 = vunpack.c.l.b16 %v2453
  %v2781 = vunpack.c.l.b16 %v2454
  %v2782 = vunpack.c.l.b16 %v2455
  %v2783 = vunpack.c.l.b16 %v2456
  %v2784 = vunpack.c.l.b16 %v2457
  %v2785 = vunpack.c.l.b16 %v2458
  %v2786 = vunpack.c.l.b16 %v2459
  %v2787 = vunpack.c.l.b16 %v2460
  %v2788 = vunpack.c.l.b16 %v2461
  %v2789 = vunpack.c.l.b16 %v2462
  %v2790 = vunpack.c.l.b16 %v2463
  %v2791 = vunpack.c.l.b16 %v2464
  %v2792 = vunpack.c.l.b16 %v2465
  %v2793 = vunpack.c.l.b16 %v2466
  %v2794 = vunpack.c.l.b16 %v2467
  %v2795 = vunpack.c.l.b16 %v2468
  %v2796 = vunpack.c.l.b16 %v2469
  %v2797 = vunpack.c.l.b16 %v2470
  %v2798 = vunpack.c.l.b16 %v2471
  %v2799 = vunpack.c.l.b16 %v2472
  %v2800 = vunpack.c.l.b16 %v2473
  %v2801 = vunpack.c.l.b16 %v2474
  %v2802 = vunpack.c.l.b16 %v2475
  %v2803 = vunpack.c.l.b16 %v2476
  %v2804 = vunpack.c.l.b16 %v2477
  %v2805 = vunpack.c.l.b16 %v2478
  %v2806 = vunpack.c.l.b16 %v2479
  %v2807 = vunpack.c.l.b16 %v2480
  %v2808 = vunpack.c.l.b16 %v2481
  %v2809 = vunpack.c.l.b16 %v2482
  %v2810 = vunpack.c.l.b16 %v2483
  %v2811 = vunpack.c.l.b16 %v2484
  %v2812 = vunpack.c.l.b16 %v2485
  %v2813 = vunpack.c.l.b16 %v2486
  %v2814 = vunpack.c.l.b16 %v2487
  %v2815 = vunpack.c.l.b16 %v2488
  %v2816 = vunpack.c.l.b16 %v2489
  %v2817 = vunpack.c.l.b16 %v2490
  %v2818 = vunpack.c.l.b16 %v2491
  %v2819 = vunpack.c.l.b16 %v2492
  %v2820 = vunpack.c.l.b16 %v2493
  %v2821 = vunpack.c.l.b16 %v2494
  %v2822 = vunpack.c.l.b16 %v2495
  %v2823 = vunpack.c.l.b16 %v2496
  %v2824 = vunpack.c.l.b16 %v2497
  %v2825 = vunpack.c.l.b16 %v2498
  %v2826 = vunpack.c.l.b16 %v2499
  %v2827 = vunpack.c.l.b16 %v2500
  %v2828 = vunpack.c.l.b16 %v2501
  %v2829 = vunpack.c.l.b16 %v2502
  %v2830 = vunpack.c.l.b16 %v2503
  %v2831 = vunpack.c.l.b16 %v2504
  %v2832 = vunpack.c.l.b16 %v2505
  %v2833 = vunpack.c.l.b16 %v2506
  %v2834 = vunpack.c.l.b16 %v2507
  %v2835 = vunpack.c.l.b16 %v2508
  %v2836 = vunpack.c.l.b16 %v2509
  %v2837 = vunpack.c.l.b16 %v2510
  %v2838 = vunpack.c.l.b16 %v2511
  %v2839 = vunpack.c.l.b16 %v2512
  %v2840 = vunpack.c.l.b16 %v2513
  %v2841 = vunpack.c.l.b16 %v2514
  %v2842 = vunpack.c.l.b16 %v2515
  %v2843 = vunpack.c.l.b16 %v2516
  %v2844 = vpack.c.b16 %v2685, %v2684
  %v2845 = vpack.c.b16 %v2687, %v2686
  %v2846 = vpack.c.b16 %v2689, %v2688
  %v2847 = vpack.c.b16 %v2691, %v2690
  %v2848 = vpack.c.b16 %v2693, %v2692
  %v2849 = vpack.c.b16 %v2695, %v2694
  %v2850 = vpack.c.b16 %v2697, %v2696
  %v2851 = vpack.c.b16 %v2699, %v2698
  %v2852 = vpack.c.b16 %v2701, %v2700
  %v2853 = vpack.c.b16 %v2703, %v2702
  %v2854 = vpack.c.b16 %v2705, %v2704
  %v2855 = vpack.c.b16 %v2707, %v2706
  %v2856 = vpack.c.b16 %v2709, %v2708
  %v2857 = vpack.c.b16 %v2711, %v2710
  %v2858 = vpack.c.b16 %v2713, %v2712
  %v2859 = vpack.c.b16 %v2715, %v2714
  %v2860 = vpack.c.b16 %v2717, %v2716
  %v2861 = vpack.c.b16 %v2719, %v2718
  %v2862 = vpack.c.b16 %v2721, %v2720
  %v2863 = vpack.c.b16 %v2723, %v2722
  %v2864 = vpack.c.b16 %v2725, %v2724
  %v2865 = vpack.c.b16 %v2727, %v2726
  %v2866 = vpack.c.b16 %v2729, %v2728
  %v2867 = vpack.c.b16 %v2731, %v2730
  %v2868 = vpack.c.b16 %v2733, %v2732
  %v2869 = vpack.c.b16 %v2735, %v2734
  %v2870 = vpack.c.b16 %v2737, %v2736
  %v2871 = vpack.c.b16 %v2739, %v2738
  %v2872 = vpack.c.b16 %v2741, %v2740
  %v2873 = vpack.c.b16 %v2743, %v2742
  %v2874 = vpack.c.b16 %v2745, %v2744
  %v2875 = vpack.c.b16 %v2747, %v2746
  %v2876 = vpack.c.b16 %v2749, %v2748
  %v2877 = vpack.c.b16 %v2751, %v2750
  %v2878 = vpack.c.b16 %v2753, %v2752
  %v2879 = vpack.c.b16 %v2755, %v2754
  %v2880 = vpack.c.b16 %v2757, %v2756
  %v2881 = vpack.c.b16 %v2759, %v2758
  %v2882 = vpack.c.b16 %v2761, %v2760
  %v2883 = vpack.c.b16 %v2763, %v2762
  %v2884 = vpack.c.b16 %v2765, %v2764
  %v2885 = vpack.c.b16 %v2767, %v2766
  %v2886 = vpack.c.b16 %v2769, %v2768
  %v2887 = vpack.c.b16 %v2771, %v2770
  %v2888 = vpack.c.b16 %v2773, %v2772
  %v2889 = vpack.c.b16 %v2775, %v2774
  %v2890 = vpack.c.b16 %v2777, %v2776
  %v2891 = vpack.c.b16 %v2779, %v2778
  %v2892 = vpack.c.b16 %v2781, %v2780
  %v2893 = vpack.c.b16 %v2783, %v2782
  %v2894 = vpack.c.b16 %v2785, %v2784
  %v2895 = vpack.c.b16 %v2787, %v2786
  %v2896 = vpack.c.b16 %v2789, %v2788
  %v2897 = vpack.c.b16 %v2791, %v2790
  %v2898 = vpack.c.b16 %v2793, %v2792
  %v2899 = vpack.c.b16 %v2795, %v2794
  %v2900 = vpack.c.b16 %v2797, %v2796
  %v2901 = vpack.c.b16 %v2799, %v2798
  %v2902 = vpack.c.b16 %v2801, %v2800
  %v2903 = vpack.c.b16 %v2803, %v2802
  %v2904 = vpack.c.b16 %v2805, %v2804
  %v2905 = vpack.c.b16 %v2807, %v2806
  %v2906 = vpack.c.b16 %v2809, %v2808
  %v2907 = vpack.c.b16 %v2811, %v2810
  %v2908 = vpack.c.b16 %v2813, %v2812
  %v2909 = vpack.c.b16 %v2815, %v2814
  %v2910 = vpack.c.b16 %v2817, %v2816
  %v2911 = vpack.c.b16 %v2819, %v2818
  %v2912 = vpack.c.b16 %v2821, %v2820
  %v2913 = vpack.c.b16 %v2823, %v2822
  %v2914 = vpack.c.b16 %v2825, %v2824
  %v2915 = vpack.c.b16 %v2827, %v2826
  %v2916 = vpack.c.b16 %v2829, %v2828
  %v2917 = vpack.c.b16 %v2831, %v2830
  %v2918 = vpack.c.b16 %v2833, %v2832
  %v2919 = vpack.c.b16 %v2835, %v2834
  %v2920 = vpack.c.b16 %v2837, %v2836
  %v2921 = vpack.c.b16 %v2839, %v2838
  %v2922 = vpack.c.b16 %v2841, %v2840
  %v2923 = vpack.c.b16 %v2843, %v2842
  %3004 = vmatprep.subr.bf16.mxu0 0
  %3005 = vmatpush1.bf16.msra.mxu0 %v2844
  %3006 = vmatprep.subr.bf16.mxu0 0
  %3007 = vmatpush1.bf16.msra.mxu0 %v2845
  %3008 = vmatprep.subr.bf16.mxu0 0
  %3009 = vmatpush1.bf16.msra.mxu0 %v2846
  %3010 = vmatprep.subr.bf16.mxu0 0
  %3011 = vmatpush1.bf16.msra.mxu0 %v2847
  %3012 = vmatprep.subr.bf16.mxu0 0
  %3013 = vmatpush1.bf16.msra.mxu0 %v2848
  %3014 = vmatprep.subr.bf16.mxu0 0
  %3015 = vmatpush1.bf16.msra.mxu0 %v2849
  %3016 = vmatprep.subr.bf16.mxu0 0
  %3017 = vmatpush1.bf16.msra.mxu0 %v2850
  %3018 = vmatprep.subr.bf16.mxu0 0
  %3019 = vmatpush1.bf16.msra.mxu0 %v2851
  %3020 = vmatprep.subr.bf16.mxu0 0
  %3021 = vmatpush1.bf16.msra.mxu0 %v2852
  %3022 = vmatprep.subr.bf16.mxu0 0
  %3023 = vmatpush1.bf16.msra.mxu0 %v2853
  %3024 = vmatprep.subr.bf16.mxu0 0
  %3025 = vmatpush1.bf16.msra.mxu0 %v2854
  %3026 = vmatprep.subr.bf16.mxu0 0
  %3027 = vmatpush1.bf16.msra.mxu0 %v2855
  %3028 = vmatprep.subr.bf16.mxu0 0
  %3029 = vmatpush1.bf16.msra.mxu0 %v2856
  %3030 = vmatprep.subr.bf16.mxu0 0
  %3031 = vmatpush1.bf16.msra.mxu0 %v2857
  %3032 = vmatprep.subr.bf16.mxu0 0
  %3033 = vmatpush1.bf16.msra.mxu0 %v2858
  %3034 = vmatprep.subr.bf16.mxu0 0
  %3035 = vmatpush1.bf16.msra.mxu0 %v2859
  %3036 = vmatprep.mubr.bf16.mxu0 %v2278
  %3037 = vmatmul.mubr.bf16.gmra.mrb[0].mxu0 %v2277
  %v3038 = vpop.f32.mrb[0].mxu0
  %v3039 = vadd.f32 %v2522, %v3038
  %v3040 = vpop.f32.mrb[0].mxu0
  %v3041 = vpop.f32.mrb[0].mxu0
  %v3042 = vadd.f32 %v2522, %v3041
  %v3043 = vpop.f32.mrb[0].mxu0
  %3044 = vmatprep.mubr.bf16.mxu0 %v2288
  %3045 = vmatmul.mubr.bf16.gmra.mrb[0].mxu0 %v2287
  %v3046 = vpop.f32.mrb[0].mxu0
  %v3047 = vadd.f32 %v2522, %v3046
  %v3048 = vpop.f32.mrb[0].mxu0
  %v3049 = vpop.f32.mrb[0].mxu0
  %v3050 = vadd.f32 %v2522, %v3049
  %v3051 = vpop.f32.mrb[0].mxu0
  %3052 = vmatprep.mubr.bf16.mxu0 %v2298
  %3053 = vmatmul.mubr.bf16.gmra.mrb[0].mxu0 %v2297
  %v3054 = vpop.f32.mrb[0].mxu0
  %v3055 = vadd.f32 %v2522, %v3054
  %v3056 = vpop.f32.mrb[0].mxu0
  %v3057 = vpop.f32.mrb[0].mxu0
  %v3058 = vadd.f32 %v2522, %v3057
  %v3059 = vpop.f32.mrb[0].mxu0
  %3060 = vmatprep.mubr.bf16.mxu0 %v2308
  %3061 = vmatmul.mubr.bf16.gmra.mrb[0].mxu0 %v2307
  %v3062 = vpop.f32.mrb[0].mxu0
  %v3063 = vadd.f32 %v2522, %v3062
  %v3064 = vpop.f32.mrb[0].mxu0
  %v3065 = vpop.f32.mrb[0].mxu0
  %v3066 = vadd.f32 %v2522, %v3065
  %v3067 = vpop.f32.mrb[0].mxu0
  %3068 = vmatprep.mubr.bf16.mxu0 %v2318
  %3069 = vmatmul.mubr.bf16.gmra.mrb[0].mxu0 %v2317
  %v3070 = vpop.f32.mrb[0].mxu0
  %v3071 = vadd.f32 %v2522, %v3070
  %v3072 = vpop.f32.mrb[0].mxu0
  %v3073 = vpop.f32.mrb[0].mxu0
  %v3074 = vadd.f32 %v2522, %v3073
  %v3075 = vpop.f32.mrb[0].mxu0
  %3076 = vmatprep.mubr.bf16.mxu0 %v2328
  %3077 = vmatmul.mubr.bf16.gmra.mrb[0].mxu0 %v2327
  %v3078 = vpop.f32.mrb[0].mxu0
  %v3079 = vadd.f32 %v2522, %v3078
  %v3080 = vpop.f32.mrb[0].mxu0
  %v3081 = vpop.f32.mrb[0].mxu0
  %v3082 = vadd.f32 %v2522, %v3081
  %v3083 = vpop.f32.mrb[0].mxu0
  %3084 = vmatprep.mubr.bf16.mxu0 %v2338
  %3085 = vmatmul.mubr.bf16.gmra.mrb[0].mxu0 %v2337
  %v3086 = vpop.f32.mrb[0].mxu0
  %v3087 = vadd.f32 %v2522, %v3086
  %v3088 = vpop.f32.mrb[0].mxu0
  %v3089 = vpop.f32.mrb[0].mxu0
  %v3090 = vadd.f32 %v2522, %v3089
  %v3091 = vpop.f32.mrb[0].mxu0
  %3092 = vmatprep.mubr.bf16.mxu0 %v2348
  %3093 = vmatmul.mubr.bf16.gmra.mrb[0].mxu0 %v2347
  %v3094 = vpop.f32.mrb[0].mxu0
  %v3095 = vadd.f32 %v2522, %v3094
  %v3096 = vpop.f32.mrb[0].mxu0
  %v3097 = vpop.f32.mrb[0].mxu0
  %v3098 = vadd.f32 %v2522, %v3097
  %v3099 = vpop.f32.mrb[0].mxu0
  %3100 = vdwg.mxu0
  %3101 = vmatprep.subr.bf16.mxu0 0
  %3102 = vmatpush1.bf16.msra.mxu0 %v2860
  %3103 = vmatprep.subr.bf16.mxu0 0
  %3104 = vmatpush1.bf16.msra.mxu0 %v2861
  %3105 = vmatprep.subr.bf16.mxu0 0
  %3106 = vmatpush1.bf16.msra.mxu0 %v2862
  %3107 = vmatprep.subr.bf16.mxu0 0
  %3108 = vmatpush1.bf16.msra.mxu0 %v2863
  %3109 = vmatprep.subr.bf16.mxu0 0
  %3110 = vmatpush1.bf16.msra.mxu0 %v2864
  %3111 = vmatprep.subr.bf16.mxu0 0
  %3112 = vmatpush1.bf16.msra.mxu0 %v2865
  %3113 = vmatprep.subr.bf16.mxu0 0
  %3114 = vmatpush1.bf16.msra.mxu0 %v2866
  %3115 = vmatprep.subr.bf16.mxu0 0
  %3116 = vmatpush1.bf16.msra.mxu0 %v2867
  %3117 = vmatprep.subr.bf16.mxu0 0
  %3118 = vmatpush1.bf16.msra.mxu0 %v2868
  %3119 = vmatprep.subr.bf16.mxu0 0
  %3120 = vmatpush1.bf16.msra.mxu0 %v2869
  %3121 = vmatprep.subr.bf16.mxu0 0
  %3122 = vmatpush1.bf16.msra.mxu0 %v2870
  %3123 = vmatprep.subr.bf16.mxu0 0
  %3124 = vmatpush1.bf16.msra.mxu0 %v2871
  %3125 = vmatprep.subr.bf16.mxu0 0
  %3126 = vmatpush1.bf16.msra.mxu0 %v2872
  %3127 = vmatprep.subr.bf16.mxu0 0
  %3128 = vmatpush1.bf16.msra.mxu0 %v2873
  %3129 = vmatprep.subr.bf16.mxu0 0
  %3130 = vmatpush1.bf16.msra.mxu0 %v2874
  %3131 = vmatprep.subr.bf16.mxu0 0
  %3132 = vmatpush1.bf16.msra.mxu0 %v2875
  %3133 = vmatprep.mubr.bf16.mxu0 %v2280
  %3134 = vmatmul.mubr.bf16.gmra.mrb[0].mxu0 %v2279
  %v3135 = vpop.f32.mrb[0].mxu0
  %v3136 = vadd.f32 %v3039, %v3135
  %v3137 = vpop.f32.mrb[0].mxu0
  %v3138 = vpop.f32.mrb[0].mxu0
  %v3139 = vadd.f32 %v3042, %v3138
  %v3140 = vpop.f32.mrb[0].mxu0
  %3141 = vmatprep.mubr.bf16.mxu0 %v2290
  %3142 = vmatmul.mubr.bf16.gmra.mrb[0].mxu0 %v2289
  %v3143 = vpop.f32.mrb[0].mxu0
  %v3144 = vadd.f32 %v3047, %v3143
  %v3145 = vpop.f32.mrb[0].mxu0
  %v3146 = vpop.f32.mrb[0].mxu0
  %v3147 = vadd.f32 %v3050, %v3146
  %v3148 = vpop.f32.mrb[0].mxu0
  %3149 = vmatprep.mubr.bf16.mxu0 %v2300
  %3150 = vmatmul.mubr.bf16.gmra.mrb[0].mxu0 %v2299
  %v3151 = vpop.f32.mrb[0].mxu0
  %v3152 = vadd.f32 %v3055, %v3151
  %v3153 = vpop.f32.mrb[0].mxu0
  %v3154 = vpop.f32.mrb[0].mxu0
  %v3155 = vadd.f32 %v3058, %v3154
  %v3156 = vpop.f32.mrb[0].mxu0
  %3157 = vmatprep.mubr.bf16.mxu0 %v2310
  %3158 = vmatmul.mubr.bf16.gmra.mrb[0].mxu0 %v2309
  %v3159 = vpop.f32.mrb[0].mxu0
  %v3160 = vadd.f32 %v3063, %v3159
  %v3161 = vpop.f32.mrb[0].mxu0
  %v3162 = vpop.f32.mrb[0].mxu0
  %v3163 = vadd.f32 %v3066, %v3162
  %v3164 = vpop.f32.mrb[0].mxu0
  %3165 = vmatprep.mubr.bf16.mxu0 %v2320
  %3166 = vmatmul.mubr.bf16.gmra.mrb[0].mxu0 %v2319
  %v3167 = vpop.f32.mrb[0].mxu0
  %v3168 = vadd.f32 %v3071, %v3167
  %v3169 = vpop.f32.mrb[0].mxu0
  %v3170 = vpop.f32.mrb[0].mxu0
  %v3171 = vadd.f32 %v3074, %v3170
  %v3172 = vpop.f32.mrb[0].mxu0
  %3173 = vmatprep.mubr.bf16.mxu0 %v2330
  %3174 = vmatmul.mubr.bf16.gmra.mrb[0].mxu0 %v2329
  %v3175 = vpop.f32.mrb[0].mxu0
  %v3176 = vadd.f32 %v3079, %v3175
  %v3177 = vpop.f32.mrb[0].mxu0
  %v3178 = vpop.f32.mrb[0].mxu0
  %v3179 = vadd.f32 %v3082, %v3178
  %v3180 = vpop.f32.mrb[0].mxu0
  %3181 = vmatprep.mubr.bf16.mxu0 %v2340
  %3182 = vmatmul.mubr.bf16.gmra.mrb[0].mxu0 %v2339
  %v3183 = vpop.f32.mrb[0].mxu0
  %v3184 = vadd.f32 %v3087, %v3183
  %v3185 = vpop.f32.mrb[0].mxu0
  %v3186 = vpop.f32.mrb[0].mxu0
  %v3187 = vadd.f32 %v3090, %v3186
  %v3188 = vpop.f32.mrb[0].mxu0
  %3189 = vmatprep.mubr.bf16.mxu0 %v2350
  %3190 = vmatmul.mubr.bf16.gmra.mrb[0].mxu0 %v2349
  %v3191 = vpop.f32.mrb[0].mxu0
  %v3192 = vadd.f32 %v3095, %v3191
  %v3193 = vpop.f32.mrb[0].mxu0
  %v3194 = vpop.f32.mrb[0].mxu0
  %v3195 = vadd.f32 %v3098, %v3194
  %v3196 = vpop.f32.mrb[0].mxu0
  %3197 = vdwg.mxu0
  %3198 = vmatprep.subr.bf16.mxu0 0
  %3199 = vmatpush1.bf16.msra.mxu0 %v2876
  %3200 = vmatprep.subr.bf16.mxu0 0
  %3201 = vmatpush1.bf16.msra.mxu0 %v2877
  %3202 = vmatprep.subr.bf16.mxu0 0
  %3203 = vmatpush1.bf16.msra.mxu0 %v2878
  %3204 = vmatprep.subr.bf16.mxu0 0
  %3205 = vmatpush1.bf16.msra.mxu0 %v2879
  %3206 = vmatprep.subr.bf16.mxu0 0
  %3207 = vmatpush1.bf16.msra.mxu0 %v2880
  %3208 = vmatprep.subr.bf16.mxu0 0
  %3209 = vmatpush1.bf16.msra.mxu0 %v2881
  %3210 = vmatprep.subr.bf16.mxu0 0
  %3211 = vmatpush1.bf16.msra.mxu0 %v2882
  %3212 = vmatprep.subr.bf16.mxu0 0
  %3213 = vmatpush1.bf16.msra.mxu0 %v2883
  %3214 = vmatprep.subr.bf16.mxu0 0
  %3215 = vmatpush1.bf16.msra.mxu0 %v2884
  %3216 = vmatprep.subr.bf16.mxu0 0
  %3217 = vmatpush1.bf16.msra.mxu0 %v2885
  %3218 = vmatprep.subr.bf16.mxu0 0
  %3219 = vmatpush1.bf16.msra.mxu0 %v2886
  %3220 = vmatprep.subr.bf16.mxu0 0
  %3221 = vmatpush1.bf16.msra.mxu0 %v2887
  %3222 = vmatprep.subr.bf16.mxu0 0
  %3223 = vmatpush1.bf16.msra.mxu0 %v2888
  %3224 = vmatprep.subr.bf16.mxu0 0
  %3225 = vmatpush1.bf16.msra.mxu0 %v2889
  %3226 = vmatprep.subr.bf16.mxu0 0
  %3227 = vmatpush1.bf16.msra.mxu0 %v2890
  %3228 = vmatprep.subr.bf16.mxu0 0
  %3229 = vmatpush1.bf16.msra.mxu0 %v2891
  %3230 = vmatprep.mubr.bf16.mxu0 %v2282
  %3231 = vmatmul.mubr.bf16.gmra.mrb[0].mxu0 %v2281
  %v3232 = vpop.f32.mrb[0].mxu0
  %v3233 = vadd.f32 %v3136, %v3232
  %v3234 = vpop.f32.mrb[0].mxu0
  %v3235 = vpop.f32.mrb[0].mxu0
  %v3236 = vadd.f32 %v3139, %v3235
  %v3237 = vpop.f32.mrb[0].mxu0
  %3238 = vmatprep.mubr.bf16.mxu0 %v2292
  %3239 = vmatmul.mubr.bf16.gmra.mrb[0].mxu0 %v2291
  %v3240 = vpop.f32.mrb[0].mxu0
  %v3241 = vadd.f32 %v3144, %v3240
  %v3242 = vpop.f32.mrb[0].mxu0
  %v3243 = vpop.f32.mrb[0].mxu0
  %v3244 = vadd.f32 %v3147, %v3243
  %v3245 = vpop.f32.mrb[0].mxu0
  %3246 = vmatprep.mubr.bf16.mxu0 %v2302
  %3247 = vmatmul.mubr.bf16.gmra.mrb[0].mxu0 %v2301
  %v3248 = vpop.f32.mrb[0].mxu0
  %v3249 = vadd.f32 %v3152, %v3248
  %v3250 = vpop.f32.mrb[0].mxu0
  %v3251 = vpop.f32.mrb[0].mxu0
  %v3252 = vadd.f32 %v3155, %v3251
  %v3253 = vpop.f32.mrb[0].mxu0
  %3254 = vmatprep.mubr.bf16.mxu0 %v2312
  %3255 = vmatmul.mubr.bf16.gmra.mrb[0].mxu0 %v2311
  %v3256 = vpop.f32.mrb[0].mxu0
  %v3257 = vadd.f32 %v3160, %v3256
  %v3258 = vpop.f32.mrb[0].mxu0
  %v3259 = vpop.f32.mrb[0].mxu0
  %v3260 = vadd.f32 %v3163, %v3259
  %v3261 = vpop.f32.mrb[0].mxu0
  %3262 = vmatprep.mubr.bf16.mxu0 %v2322
  %3263 = vmatmul.mubr.bf16.gmra.mrb[0].mxu0 %v2321
  %v3264 = vpop.f32.mrb[0].mxu0
  %v3265 = vadd.f32 %v3168, %v3264
  %v3266 = vpop.f32.mrb[0].mxu0
  %v3267 = vpop.f32.mrb[0].mxu0
  %v3268 = vadd.f32 %v3171, %v3267
  %v3269 = vpop.f32.mrb[0].mxu0
  %3270 = vmatprep.mubr.bf16.mxu0 %v2332
  %3271 = vmatmul.mubr.bf16.gmra.mrb[0].mxu0 %v2331
  %v3272 = vpop.f32.mrb[0].mxu0
  %v3273 = vadd.f32 %v3176, %v3272
  %v3274 = vpop.f32.mrb[0].mxu0
  %v3275 = vpop.f32.mrb[0].mxu0
  %v3276 = vadd.f32 %v3179, %v3275
  %v3277 = vpop.f32.mrb[0].mxu0
  %3278 = vmatprep.mubr.bf16.mxu0 %v2342
  %3279 = vmatmul.mubr.bf16.gmra.mrb[0].mxu0 %v2341
  %v3280 = vpop.f32.mrb[0].mxu0
  %v3281 = vadd.f32 %v3184, %v3280
  %v3282 = vpop.f32.mrb[0].mxu0
  %v3283 = vpop.f32.mrb[0].mxu0
  %v3284 = vadd.f32 %v3187, %v3283
  %v3285 = vpop.f32.mrb[0].mxu0
  %3286 = vmatprep.mubr.bf16.mxu0 %v2352
  %3287 = vmatmul.mubr.bf16.gmra.mrb[0].mxu0 %v2351
  %v3288 = vpop.f32.mrb[0].mxu0
  %v3289 = vadd.f32 %v3192, %v3288
  %v3290 = vpop.f32.mrb[0].mxu0
  %v3291 = vpop.f32.mrb[0].mxu0
  %v3292 = vadd.f32 %v3195, %v3291
  %v3293 = vpop.f32.mrb[0].mxu0
  %3294 = vdwg.mxu0
  %3295 = vmatprep.subr.bf16.mxu0 0
  %3296 = vmatpush1.bf16.msra.mxu0 %v2892
  %3297 = vmatprep.subr.bf16.mxu0 0
  %3298 = vmatpush1.bf16.msra.mxu0 %v2893
  %3299 = vmatprep.subr.bf16.mxu0 0
  %3300 = vmatpush1.bf16.msra.mxu0 %v2894
  %3301 = vmatprep.subr.bf16.mxu0 0
  %3302 = vmatpush1.bf16.msra.mxu0 %v2895
  %3303 = vmatprep.subr.bf16.mxu0 0
  %3304 = vmatpush1.bf16.msra.mxu0 %v2896
  %3305 = vmatprep.subr.bf16.mxu0 0
  %3306 = vmatpush1.bf16.msra.mxu0 %v2897
  %3307 = vmatprep.subr.bf16.mxu0 0
  %3308 = vmatpush1.bf16.msra.mxu0 %v2898
  %3309 = vmatprep.subr.bf16.mxu0 0
  %3310 = vmatpush1.bf16.msra.mxu0 %v2899
  %3311 = vmatprep.subr.bf16.mxu0 0
  %3312 = vmatpush1.bf16.msra.mxu0 %v2900
  %3313 = vmatprep.subr.bf16.mxu0 0
  %3314 = vmatpush1.bf16.msra.mxu0 %v2901
  %3315 = vmatprep.subr.bf16.mxu0 0
  %3316 = vmatpush1.bf16.msra.mxu0 %v2902
  %3317 = vmatprep.subr.bf16.mxu0 0
  %3318 = vmatpush1.bf16.msra.mxu0 %v2903
  %3319 = vmatprep.subr.bf16.mxu0 0
  %3320 = vmatpush1.bf16.msra.mxu0 %v2904
  %3321 = vmatprep.subr.bf16.mxu0 0
  %3322 = vmatpush1.bf16.msra.mxu0 %v2905
  %3323 = vmatprep.subr.bf16.mxu0 0
  %3324 = vmatpush1.bf16.msra.mxu0 %v2906
  %3325 = vmatprep.subr.bf16.mxu0 0
  %3326 = vmatpush1.bf16.msra.mxu0 %v2907
  %3327 = vmatprep.mubr.bf16.mxu0 %v2284
  %3328 = vmatmul.mubr.bf16.gmra.mrb[0].mxu0 %v2283
  %v3329 = vpop.f32.mrb[0].mxu0
  %v3330 = vadd.f32 %v3233, %v3329
  %v3331 = vpop.f32.mrb[0].mxu0
  %v3332 = vpop.f32.mrb[0].mxu0
  %v3333 = vadd.f32 %v3236, %v3332
  %v3334 = vpop.f32.mrb[0].mxu0
  %3335 = vmatprep.mubr.bf16.mxu0 %v2294
  %3336 = vmatmul.mubr.bf16.gmra.mrb[0].mxu0 %v2293
  %v3337 = vpop.f32.mrb[0].mxu0
  %v3338 = vadd.f32 %v3241, %v3337
  %v3339 = vpop.f32.mrb[0].mxu0
  %v3340 = vpop.f32.mrb[0].mxu0
  %v3341 = vadd.f32 %v3244, %v3340
  %v3342 = vpop.f32.mrb[0].mxu0
  %3343 = vmatprep.mubr.bf16.mxu0 %v2304
  %3344 = vmatmul.mubr.bf16.gmra.mrb[0].mxu0 %v2303
  %v3345 = vpop.f32.mrb[0].mxu0
  %v3346 = vadd.f32 %v3249, %v3345
  %v3347 = vpop.f32.mrb[0].mxu0
  %v3348 = vpop.f32.mrb[0].mxu0
  %v3349 = vadd.f32 %v3252, %v3348
  %v3350 = vpop.f32.mrb[0].mxu0
  %3351 = vmatprep.mubr.bf16.mxu0 %v2314
  %3352 = vmatmul.mubr.bf16.gmra.mrb[0].mxu0 %v2313
  %v3353 = vpop.f32.mrb[0].mxu0
  %v3354 = vadd.f32 %v3257, %v3353
  %v3355 = vpop.f32.mrb[0].mxu0
  %v3356 = vpop.f32.mrb[0].mxu0
  %v3357 = vadd.f32 %v3260, %v3356
  %v3358 = vpop.f32.mrb[0].mxu0
  %3359 = vmatprep.mubr.bf16.mxu0 %v2324
  %3360 = vmatmul.mubr.bf16.gmra.mrb[0].mxu0 %v2323
  %v3361 = vpop.f32.mrb[0].mxu0
  %v3362 = vadd.f32 %v3265, %v3361
  %v3363 = vpop.f32.mrb[0].mxu0
  %v3364 = vpop.f32.mrb[0].mxu0
  %v3365 = vadd.f32 %v3268, %v3364
  %v3366 = vpop.f32.mrb[0].mxu0
  %3367 = vmatprep.mubr.bf16.mxu0 %v2334
  %3368 = vmatmul.mubr.bf16.gmra.mrb[0].mxu0 %v2333
  %v3369 = vpop.f32.mrb[0].mxu0
  %v3370 = vadd.f32 %v3273, %v3369
  %v3371 = vpop.f32.mrb[0].mxu0
  %v3372 = vpop.f32.mrb[0].mxu0
  %v3373 = vadd.f32 %v3276, %v3372
  %v3374 = vpop.f32.mrb[0].mxu0
  %3375 = vmatprep.mubr.bf16.mxu0 %v2344
  %3376 = vmatmul.mubr.bf16.gmra.mrb[0].mxu0 %v2343
  %v3377 = vpop.f32.mrb[0].mxu0
  %v3378 = vadd.f32 %v3281, %v3377
  %v3379 = vpop.f32.mrb[0].mxu0
  %v3380 = vpop.f32.mrb[0].mxu0
  %v3381 = vadd.f32 %v3284, %v3380
  %v3382 = vpop.f32.mrb[0].mxu0
  %3383 = vmatprep.mubr.bf16.mxu0 %v2354
  %3384 = vmatmul.mubr.bf16.gmra.mrb[0].mxu0 %v2353
  %v3385 = vpop.f32.mrb[0].mxu0
  %v3386 = vadd.f32 %v3289, %v3385
  %v3387 = vpop.f32.mrb[0].mxu0
  %v3388 = vpop.f32.mrb[0].mxu0
  %v3389 = vadd.f32 %v3292, %v3388
  %v3390 = vpop.f32.mrb[0].mxu0
  %3391 = vdwg.mxu0
  %3392 = vmatprep.subr.bf16.mxu0 0
  %3393 = vmatpush1.bf16.msra.mxu0 %v2908
  %3394 = vmatprep.subr.bf16.mxu0 0
  %3395 = vmatpush1.bf16.msra.mxu0 %v2909
  %3396 = vmatprep.subr.bf16.mxu0 0
  %3397 = vmatpush1.bf16.msra.mxu0 %v2910
  %3398 = vmatprep.subr.bf16.mxu0 0
  %3399 = vmatpush1.bf16.msra.mxu0 %v2911
  %3400 = vmatprep.subr.bf16.mxu0 0
  %3401 = vmatpush1.bf16.msra.mxu0 %v2912
  %3402 = vmatprep.subr.bf16.mxu0 0
  %3403 = vmatpush1.bf16.msra.mxu0 %v2913
  %3404 = vmatprep.subr.bf16.mxu0 0
  %3405 = vmatpush1.bf16.msra.mxu0 %v2914
  %3406 = vmatprep.subr.bf16.mxu0 0
  %3407 = vmatpush1.bf16.msra.mxu0 %v2915
  %3408 = vmatprep.subr.bf16.mxu0 0
  %3409 = vmatpush1.bf16.msra.mxu0 %v2916
  %3410 = vmatprep.subr.bf16.mxu0 0
  %3411 = vmatpush1.bf16.msra.mxu0 %v2917
  %3412 = vmatprep.subr.bf16.mxu0 0
  %3413 = vmatpush1.bf16.msra.mxu0 %v2918
  %3414 = vmatprep.subr.bf16.mxu0 0
  %3415 = vmatpush1.bf16.msra.mxu0 %v2919
  %3416 = vmatprep.subr.bf16.mxu0 0
  %3417 = vmatpush1.bf16.msra.mxu0 %v2920
  %3418 = vmatprep.subr.bf16.mxu0 0
  %3419 = vmatpush1.bf16.msra.mxu0 %v2921
  %3420 = vmatprep.subr.bf16.mxu0 0
  %3421 = vmatpush1.bf16.msra.mxu0 %v2922
  %3422 = vmatprep.subr.bf16.mxu0 0
  %3423 = vmatpush1.bf16.msra.mxu0 %v2923
  %3424 = vmatprep.mubr.bf16.mxu0 %v2286
  %3425 = vmatmul.mubr.bf16.gmra.mrb[0].mxu0 %v2285
  %v3426 = vpop.f32.mrb[0].mxu0
  %v3427 = vadd.f32 %v3330, %v3426
  %v3428 = vpop.f32.mrb[0].mxu0
  %v3429 = vpop.f32.mrb[0].mxu0
  %v3430 = vadd.f32 %v3333, %v3429
  %v3431 = vpop.f32.mrb[0].mxu0
  %3432 = vmatprep.mubr.bf16.mxu0 %v2296
  %3433 = vmatmul.mubr.bf16.gmra.mrb[0].mxu0 %v2295
  %v3434 = vpop.f32.mrb[0].mxu0
  %v3435 = vadd.f32 %v3338, %v3434
  %v3436 = vpop.f32.mrb[0].mxu0
  %v3437 = vpop.f32.mrb[0].mxu0
  %v3438 = vadd.f32 %v3341, %v3437
  %v3439 = vpop.f32.mrb[0].mxu0
  %3440 = vmatprep.mubr.bf16.mxu0 %v2306
  %3441 = vmatmul.mubr.bf16.gmra.mrb[0].mxu0 %v2305
  %v3442 = vpop.f32.mrb[0].mxu0
  %v3443 = vadd.f32 %v3346, %v3442
  %v3444 = vpop.f32.mrb[0].mxu0
  %v3445 = vpop.f32.mrb[0].mxu0
  %v3446 = vadd.f32 %v3349, %v3445
  %v3447 = vpop.f32.mrb[0].mxu0
  %3448 = vmatprep.mubr.bf16.mxu0 %v2316
  %3449 = vmatmul.mubr.bf16.gmra.mrb[0].mxu0 %v2315
  %v3450 = vpop.f32.mrb[0].mxu0
  %v3451 = vadd.f32 %v3354, %v3450
  %v3452 = vpop.f32.mrb[0].mxu0
  %v3453 = vpop.f32.mrb[0].mxu0
  %v3454 = vadd.f32 %v3357, %v3453
  %v3455 = vpop.f32.mrb[0].mxu0
  %3456 = vmatprep.mubr.bf16.mxu0 %v2326
  %3457 = vmatmul.mubr.bf16.gmra.mrb[0].mxu0 %v2325
  %v3458 = vpop.f32.mrb[0].mxu0
  %v3459 = vadd.f32 %v3362, %v3458
  %v3460 = vpop.f32.mrb[0].mxu0
  %v3461 = vpop.f32.mrb[0].mxu0
  %v3462 = vadd.f32 %v3365, %v3461
  %v3463 = vpop.f32.mrb[0].mxu0
  %3464 = vmatprep.mubr.bf16.mxu0 %v2336
  %3465 = vmatmul.mubr.bf16.gmra.mrb[0].mxu0 %v2335
  %v3466 = vpop.f32.mrb[0].mxu0
  %v3467 = vadd.f32 %v3370, %v3466
  %v3468 = vpop.f32.mrb[0].mxu0
  %v3469 = vpop.f32.mrb[0].mxu0
  %v3470 = vadd.f32 %v3373, %v3469
  %v3471 = vpop.f32.mrb[0].mxu0
  %3472 = vmatprep.mubr.bf16.mxu0 %v2346
  %3473 = vmatmul.mubr.bf16.gmra.mrb[0].mxu0 %v2345
  %v3474 = vpop.f32.mrb[0].mxu0
  %v3475 = vadd.f32 %v3378, %v3474
  %v3476 = vpop.f32.mrb[0].mxu0
  %v3477 = vpop.f32.mrb[0].mxu0
  %v3478 = vadd.f32 %v3381, %v3477
  %v3479 = vpop.f32.mrb[0].mxu0
  %3480 = vmatprep.mubr.bf16.mxu0 %v2356
  %3481 = vmatmul.mubr.bf16.gmra.mrb[0].mxu0 %v2355
  %v3482 = vpop.f32.mrb[0].mxu0
  %v3483 = vadd.f32 %v3386, %v3482
  %v3484 = vpop.f32.mrb[0].mxu0
  %v3485 = vpop.f32.mrb[0].mxu0
  %v3486 = vadd.f32 %v3389, %v3485
  %v3487 = vpop.f32.mrb[0].mxu0
  %3488 = vdwg.mxu0
  %v3489 = vxor.u32 %v3427, 2147483648
  %v3490 = vxor.u32 %v3430, 2147483648
  %v3491 = vxor.u32 %v3435, 2147483648
  %v3492 = vxor.u32 %v3438, 2147483648
  %v3493 = vxor.u32 %v3443, 2147483648
  %v3494 = vxor.u32 %v3446, 2147483648
  %v3495 = vxor.u32 %v3451, 2147483648
  %v3496 = vxor.u32 %v3454, 2147483648
  %v3497 = vxor.u32 %v3459, 2147483648
  %v3498 = vxor.u32 %v3462, 2147483648
  %v3499 = vxor.u32 %v3467, 2147483648
  %v3500 = vxor.u32 %v3470, 2147483648
  %v3501 = vxor.u32 %v3475, 2147483648
  %v3502 = vxor.u32 %v3478, 2147483648
  %v3503 = vxor.u32 %v3483, 2147483648
  %v3504 = vxor.u32 %v3486, 2147483648
  %v3505 = vmul.f32 %v3489, 1.442695
  %v3506 = vpow.pop %v3505
  %v3507 = vmul.f32 %v3490, 1.442695
  %v3508 = vpow.pop %v3507
  %v3509 = vmul.f32 %v3491, 1.442695
  %v3510 = vpow.pop %v3509
  %v3511 = vmul.f32 %v3492, 1.442695
  %v3512 = vpow.pop %v3511
  %v3513 = vmul.f32 %v3493, 1.442695
  %v3514 = vpow.pop %v3513
  %v3515 = vmul.f32 %v3494, 1.442695
  %v3516 = vpow.pop %v3515
  %v3517 = vmul.f32 %v3495, 1.442695
  %v3518 = vpow.pop %v3517
  %v3519 = vmul.f32 %v3496, 1.442695
  %v3520 = vpow.pop %v3519
  %v3521 = vmul.f32 %v3497, 1.442695
  %v3522 = vpow.pop %v3521
  %v3523 = vmul.f32 %v3498, 1.442695
  %v3524 = vpow.pop %v3523
  %v3525 = vmul.f32 %v3499, 1.442695
  %v3526 = vpow.pop %v3525
  %v3527 = vmul.f32 %v3500, 1.442695
  %v3528 = vpow.pop %v3527
  %v3529 = vmul.f32 %v3501, 1.442695
  %v3530 = vpow.pop %v3529
  %v3531 = vmul.f32 %v3502, 1.442695
  %v3532 = vpow.pop %v3531
  %v3533 = vmul.f32 %v3503, 1.442695
  %v3534 = vpow.pop %v3533
  %v3535 = vmul.f32 %v3504, 1.442695
  %v3536 = vpow.pop %v3535
  %v3537 = vadd.f32 %v3506, 1.0
  %v3538 = vadd.f32 %v3508, 1.0
  %v3539 = vadd.f32 %v3510, 1.0
  %v3540 = vadd.f32 %v3512, 1.0
  %v3541 = vadd.f32 %v3514, 1.0
  %v3542 = vadd.f32 %v3516, 1.0
  %v3543 = vadd.f32 %v3518, 1.0
  %v3544 = vadd.f32 %v3520, 1.0
  %v3545 = vadd.f32 %v3522, 1.0
  %v3546 = vadd.f32 %v3524, 1.0
  %v3547 = vadd.f32 %v3526, 1.0
  %v3548 = vadd.f32 %v3528, 1.0
  %v3549 = vadd.f32 %v3530, 1.0
  %v3550 = vadd.f32 %v3532, 1.0
  %v3551 = vadd.f32 %v3534, 1.0
  %v3552 = vadd.f32 %v3536, 1.0
  %v3553 = vrcp.pop %v3537
  %v3554 = vmul.f32 1.0, %v3553
  %v3555 = vrcp.pop %v3538
  %v3556 = vmul.f32 1.0, %v3555
  %v3557 = vrcp.pop %v3539
  %v3558 = vmul.f32 1.0, %v3557
  %v3559 = vrcp.pop %v3540
  %v3560 = vmul.f32 1.0, %v3559
  %v3561 = vrcp.pop %v3541
  %v3562 = vmul.f32 1.0, %v3561
  %v3563 = vrcp.pop %v3542
  %v3564 = vmul.f32 1.0, %v3563
  %v3565 = vrcp.pop %v3543
  %v3566 = vmul.f32 1.0, %v3565
  %v3567 = vrcp.pop %v3544
  %v3568 = vmul.f32 1.0, %v3567
  %v3569 = vrcp.pop %v3545
  %v3570 = vmul.f32 1.0, %v3569
  %v3571 = vrcp.pop %v3546
  %v3572 = vmul.f32 1.0, %v3571
  %v3573 = vrcp.pop %v3547
  %v3574 = vmul.f32 1.0, %v3573
  %v3575 = vrcp.pop %v3548
  %v3576 = vmul.f32 1.0, %v3575
  %v3577 = vrcp.pop %v3549
  %v3578 = vmul.f32 1.0, %v3577
  %v3579 = vrcp.pop %v3550
  %v3580 = vmul.f32 1.0, %v3579
  %v3581 = vrcp.pop %v3551
  %v3582 = vmul.f32 1.0, %v3581
  %v3583 = vrcp.pop %v3552
  %v3584 = vmul.f32 1.0, %v3583
  %v3585 = vmul.f32 %v3427, %v3554
  %v3586 = vmul.f32 %v3430, %v3556
  %v3587 = vmul.f32 %v3435, %v3558
  %v3588 = vmul.f32 %v3438, %v3560
  %v3589 = vmul.f32 %v3443, %v3562
  %v3590 = vmul.f32 %v3446, %v3564
  %v3591 = vmul.f32 %v3451, %v3566
  %v3592 = vmul.f32 %v3454, %v3568
  %v3593 = vmul.f32 %v3459, %v3570
  %v3594 = vmul.f32 %v3462, %v3572
  %v3595 = vmul.f32 %v3467, %v3574
  %v3596 = vmul.f32 %v3470, %v3576
  %v3597 = vmul.f32 %v3475, %v3578
  %v3598 = vmul.f32 %v3478, %v3580
  %v3599 = vmul.f32 %v3483, %v3582
  %v3600 = vmul.f32 %v3486, %v3584
  %v3601 = vld [vmem:[%s1] sm:$0xf]
  %v3602 = vpack.c.bf16 %v3586, %v3585
  %v3603 = vpack.c.bf16 %v3588, %v3587
  %v3604 = vpack.c.bf16 %v3590, %v3589
  %v3605 = vpack.c.bf16 %v3592, %v3591
  %v3606 = vpack.c.bf16 %v3594, %v3593
  %v3607 = vpack.c.bf16 %v3596, %v3595
  %v3608 = vpack.c.bf16 %v3598, %v3597
  %v3609 = vpack.c.bf16 %v3600, %v3599
  %3610 = vmatprep.subr.bf16.mxu0 0
  %3611 = vmatpush1.bf16.msra.mxu0 %v3602
  %3612 = vmatprep.subr.bf16.mxu0 0
  %3613 = vmatpush1.bf16.msra.mxu0 %v3603
  %3614 = vmatprep.subr.bf16.mxu0 0
  %3615 = vmatpush1.bf16.msra.mxu0 %v3604
  %3616 = vmatprep.subr.bf16.mxu0 0
  %3617 = vmatpush1.bf16.msra.mxu0 %v3605
  %3618 = vmatprep.subr.bf16.mxu0 0
  %3619 = vmatpush1.bf16.msra.mxu0 %v3606
  %3620 = vmatprep.subr.bf16.mxu0 0
  %3621 = vmatpush1.bf16.msra.mxu0 %v3607
  %3622 = vmatprep.subr.bf16.mxu0 0
  %3623 = vmatpush1.bf16.msra.mxu0 %v3608
  %3624 = vmatprep.subr.bf16.mxu0 0
  %3625 = vmatpush1.bf16.msra.mxu0 %v3609
  %3626 = vmatprep.subr.bf16.mxu0 0
  %3627 = vmatpush1.bf16.msra.mxu0 0
  %3628 = vmatprep.subr.bf16.mxu0 0
  %3629 = vmatpush1.bf16.msra.mxu0 0
  %3630 = vmatprep.subr.bf16.mxu0 0
  %3631 = vmatpush1.bf16.msra.mxu0 0
  %3632 = vmatprep.subr.bf16.mxu0 0
  %3633 = vmatpush1.bf16.msra.mxu0 0
  %3634 = vmatprep.subr.bf16.mxu0 0
  %3635 = vmatpush1.bf16.msra.mxu0 0
  %3636 = vmatprep.subr.bf16.mxu0 0
  %3637 = vmatpush1.bf16.msra.mxu0 0
  %3638 = vmatprep.subr.bf16.mxu0 0
  %3639 = vmatpush1.bf16.msra.mxu0 0
  %3640 = vmatprep.subr.bf16.mxu0 0
  %3641 = vmatpush1.bf16.msra.mxu0 0
  %3642 = vmatprep.mubr.bf16.mxu0 0
  %3643 = vmatmul.mubr.bf16.gmra.mrb[0].mxu0 %v3601
  %v3644 = vpop.f32.mrb[0].mxu0
  %v3645 = vadd.f32 0.0, %v3644
  %v3646 = vpop.f32.mrb[0].mxu0
  %v3647 = vpop.f32.mrb[0].mxu0
  %v3648 = vpop.f32.mrb[0].mxu0
  %3649 = vdwg.mxu0
  %v3650 = vpack.c.bf16 %v3645, %v3645
  %v3651 = vld [vmem:[%s5] sm:$0xff]
  %v3652 = vld [vmem:[%s5 + $0x8] sm:$0xff]
  %v3653 = vld [vmem:[%s5 + $0x10] sm:$0xff]
  %v3654 = vld [vmem:[%s5 + $0x18] sm:$0xff]
  %v3655 = vld [vmem:[%s5 + $0x20] sm:$0xff]
  %v3656 = vld [vmem:[%s5 + $0x28] sm:$0xff]
  %v3657 = vld [vmem:[%s5 + $0x30] sm:$0xff]
  %v3658 = vld [vmem:[%s5 + $0x38] sm:$0xff]
  %v3659 = vld [vmem:[%s5 + $0x40] sm:$0xff]
  %v3660 = vld [vmem:[%s5 + $0x48] sm:$0xff]
  %v3661 = vld [vmem:[%s5 + $0x50] sm:$0xff]
  %v3662 = vld [vmem:[%s5 + $0x58] sm:$0xff]
  %v3663 = vld [vmem:[%s5 + $0x60] sm:$0xff]
  %v3664 = vld [vmem:[%s5 + $0x68] sm:$0xff]
  %v3665 = vld [vmem:[%s5 + $0x70] sm:$0xff]
  %v3666 = vld [vmem:[%s5 + $0x78] sm:$0xff]
  %v3667 = vld [vmem:[%s5 + $0x80] sm:$0xff]
  %v3668 = vld [vmem:[%s5 + $0x88] sm:$0xff]
  %v3669 = vld [vmem:[%s5 + $0x90] sm:$0xff]
  %v3670 = vld [vmem:[%s5 + $0x98] sm:$0xff]
  %v3671 = vld [vmem:[%s5 + $0xa0] sm:$0xff]
  %v3672 = vld [vmem:[%s5 + $0xa8] sm:$0xff]
  %v3673 = vld [vmem:[%s5 + $0xb0] sm:$0xff]
  %v3674 = vld [vmem:[%s5 + $0xb8] sm:$0xff]
  %v3675 = vld [vmem:[%s5 + $0xc0] sm:$0xff]
  %v3676 = vld [vmem:[%s5 + $0xc8] sm:$0xff]
  %v3677 = vld [vmem:[%s5 + $0xd0] sm:$0xff]
  %v3678 = vld [vmem:[%s5 + $0xd8] sm:$0xff]
  %v3679 = vld [vmem:[%s5 + $0xe0] sm:$0xff]
  %v3680 = vld [vmem:[%s5 + $0xe8] sm:$0xff]
  %v3681 = vld [vmem:[%s5 + $0xf0] sm:$0xff]
  %v3682 = vld [vmem:[%s5 + $0xf8] sm:$0xff]
  %v3683 = vld [vmem:[%s7] sm:$0xf]
  %v3685 = vlaneseq
  %v3686 = vshrl.u32 %v3685, 7
  %v3687 = vsub.s32 0, %v3686
  %v3688 = vrot.slane %v3683, %v3687
  %v3689 = vlaneseq
  %v3690 = vshrl.u32 %v3689, 7
  %v3691 = vsub.s32 1, %v3690
  %v3692 = vrot.slane %v3683, %v3691
  %v3693 = vlaneseq
  %v3694 = vshrl.u32 %v3693, 7
  %v3695 = vsub.s32 2, %v3694
  %v3696 = vrot.slane %v3683, %v3695
  %v3697 = vlaneseq
  %v3698 = vshrl.u32 %v3697, 7
  %v3699 = vsub.s32 3, %v3698
  %v3700 = vrot.slane %v3683, %v3699
  %v3737 = vunpack.c.l.b16 %v3651
  %v3738 = vunpack.c.h.b16 %v3651
  %v3739 = vunpack.c.l.b16 %v3652
  %v3740 = vunpack.c.h.b16 %v3652
  %v3741 = vunpack.c.l.b16 %v3653
  %v3742 = vunpack.c.h.b16 %v3653
  %v3743 = vunpack.c.l.b16 %v3654
  %v3744 = vunpack.c.h.b16 %v3654
  %v3745 = vunpack.c.l.b16 %v3655
  %v3746 = vunpack.c.h.b16 %v3655
  %v3747 = vunpack.c.l.b16 %v3656
  %v3748 = vunpack.c.h.b16 %v3656
  %v3749 = vunpack.c.l.b16 %v3657
  %v3750 = vunpack.c.h.b16 %v3657
  %v3751 = vunpack.c.l.b16 %v3658
  %v3752 = vunpack.c.h.b16 %v3658
  %v3753 = vunpack.c.l.b16 %v3659
  %v3754 = vunpack.c.h.b16 %v3659
  %v3755 = vunpack.c.l.b16 %v3660
  %v3756 = vunpack.c.h.b16 %v3660
  %v3757 = vunpack.c.l.b16 %v3661
  %v3758 = vunpack.c.h.b16 %v3661
  %v3759 = vunpack.c.l.b16 %v3662
  %v3760 = vunpack.c.h.b16 %v3662
  %v3761 = vunpack.c.l.b16 %v3663
  %v3762 = vunpack.c.h.b16 %v3663
  %v3763 = vunpack.c.l.b16 %v3664
  %v3764 = vunpack.c.h.b16 %v3664
  %v3765 = vunpack.c.l.b16 %v3665
  %v3766 = vunpack.c.h.b16 %v3665
  %v3767 = vunpack.c.l.b16 %v3666
  %v3768 = vunpack.c.h.b16 %v3666
  %v3769 = vunpack.c.l.b16 %v3667
  %v3770 = vunpack.c.h.b16 %v3667
  %v3771 = vunpack.c.l.b16 %v3668
  %v3772 = vunpack.c.h.b16 %v3668
  %v3773 = vunpack.c.l.b16 %v3669
  %v3774 = vunpack.c.h.b16 %v3669
  %v3775 = vunpack.c.l.b16 %v3670
  %v3776 = vunpack.c.h.b16 %v3670
  %v3777 = vunpack.c.l.b16 %v3671
  %v3778 = vunpack.c.h.b16 %v3671
  %v3779 = vunpack.c.l.b16 %v3672
  %v3780 = vunpack.c.h.b16 %v3672
  %v3781 = vunpack.c.l.b16 %v3673
  %v3782 = vunpack.c.h.b16 %v3673
  %v3783 = vunpack.c.l.b16 %v3674
  %v3784 = vunpack.c.h.b16 %v3674
  %v3785 = vunpack.c.l.b16 %v3675
  %v3786 = vunpack.c.h.b16 %v3675
  %v3787 = vunpack.c.l.b16 %v3676
  %v3788 = vunpack.c.h.b16 %v3676
  %v3789 = vunpack.c.l.b16 %v3677
  %v3790 = vunpack.c.h.b16 %v3677
  %v3791 = vunpack.c.l.b16 %v3678
  %v3792 = vunpack.c.h.b16 %v3678
  %v3793 = vunpack.c.l.b16 %v3679
  %v3794 = vunpack.c.h.b16 %v3679
  %v3795 = vunpack.c.l.b16 %v3680
  %v3796 = vunpack.c.h.b16 %v3680
  %v3797 = vunpack.c.l.b16 %v3681
  %v3798 = vunpack.c.h.b16 %v3681
  %v3799 = vunpack.c.l.b16 %v3682
  %v3800 = vunpack.c.h.b16 %v3682
  %v3801 = vpack.c.b16 %v3741, %v3737
  %v3802 = vpack.c.b16 %v3742, %v3738
  %v3803 = vpack.c.b16 %v3743, %v3739
  %v3804 = vpack.c.b16 %v3744, %v3740
  %v3805 = vpack.c.b16 %v3749, %v3745
  %v3806 = vpack.c.b16 %v3750, %v3746
  %v3807 = vpack.c.b16 %v3751, %v3747
  %v3808 = vpack.c.b16 %v3752, %v3748
  %v3809 = vpack.c.b16 %v3757, %v3753
  %v3810 = vpack.c.b16 %v3758, %v3754
  %v3811 = vpack.c.b16 %v3759, %v3755
  %v3812 = vpack.c.b16 %v3760, %v3756
  %v3813 = vpack.c.b16 %v3765, %v3761
  %v3814 = vpack.c.b16 %v3766, %v3762
  %v3815 = vpack.c.b16 %v3767, %v3763
  %v3816 = vpack.c.b16 %v3768, %v3764
  %v3817 = vpack.c.b16 %v3773, %v3769
  %v3818 = vpack.c.b16 %v3774, %v3770
  %v3819 = vpack.c.b16 %v3775, %v3771
  %v3820 = vpack.c.b16 %v3776, %v3772
  %v3821 = vpack.c.b16 %v3781, %v3777
  %v3822 = vpack.c.b16 %v3782, %v3778
  %v3823 = vpack.c.b16 %v3783, %v3779
  %v3824 = vpack.c.b16 %v3784, %v3780
  %v3825 = vpack.c.b16 %v3789, %v3785
  %v3826 = vpack.c.b16 %v3790, %v3786
  %v3827 = vpack.c.b16 %v3791, %v3787
  %v3828 = vpack.c.b16 %v3792, %v3788
  %v3829 = vpack.c.b16 %v3797, %v3793
  %v3830 = vpack.c.b16 %v3798, %v3794
  %v3831 = vpack.c.b16 %v3799, %v3795
  %v3832 = vpack.c.b16 %v3800, %v3796
  %3865 = vmatprep.subr.bf16.mxu0 %v3802
  %3866 = vmatpush1.bf16.msra.mxu0 %v3801
  %3867 = vmatprep.subr.bf16.mxu0 %v3806
  %3868 = vmatpush1.bf16.msra.mxu0 %v3805
  %3869 = vmatprep.subr.bf16.mxu0 %v3810
  %3870 = vmatpush1.bf16.msra.mxu0 %v3809
  %3871 = vmatprep.subr.bf16.mxu0 %v3814
  %3872 = vmatpush1.bf16.msra.mxu0 %v3813
  %3873 = vmatprep.subr.bf16.mxu0 %v3818
  %3874 = vmatpush1.bf16.msra.mxu0 %v3817
  %3875 = vmatprep.subr.bf16.mxu0 %v3822
  %3876 = vmatpush1.bf16.msra.mxu0 %v3821
  %3877 = vmatprep.subr.bf16.mxu0 %v3826
  %3878 = vmatpush1.bf16.msra.mxu0 %v3825
  %3879 = vmatprep.subr.bf16.mxu0 %v3830
  %3880 = vmatpush1.bf16.msra.mxu0 %v3829
  %3881 = vmatprep.subr.bf16.mxu0 0
  %3882 = vmatpush1.bf16.msra.mxu0 0
  %3883 = vmatprep.subr.bf16.mxu0 0
  %3884 = vmatpush1.bf16.msra.mxu0 0
  %3885 = vmatprep.subr.bf16.mxu0 0
  %3886 = vmatpush1.bf16.msra.mxu0 0
  %3887 = vmatprep.subr.bf16.mxu0 0
  %3888 = vmatpush1.bf16.msra.mxu0 0
  %3889 = vmatprep.subr.bf16.mxu0 0
  %3890 = vmatpush1.bf16.msra.mxu0 0
  %3891 = vmatprep.subr.bf16.mxu0 0
  %3892 = vmatpush1.bf16.msra.mxu0 0
  %3893 = vmatprep.subr.bf16.mxu0 0
  %3894 = vmatpush1.bf16.msra.mxu0 0
  %3895 = vmatprep.subr.bf16.mxu0 0
  %3896 = vmatpush1.bf16.msra.mxu0 0
  %3897 = vmatprep.mubr.bf16.mxu0 0
  %3898 = vmatmul.mubr.bf16.gmra.mrb[0].mxu0 %v3650
  %v3899 = vpop.f32.mrb[0].mxu0
  %v3900 = vadd.f32 %v3688, %v3899
  %v3901 = vpop.f32.mrb[0].mxu0
  %v3902 = vadd.f32 %v3692, %v3901
  %v3903 = vpop.f32.mrb[0].mxu0
  %v3904 = vpop.f32.mrb[0].mxu0
  %3905 = vdwg.mxu0
  %3906 = vmatprep.subr.bf16.mxu0 %v3804
  %3907 = vmatpush1.bf16.msra.mxu0 %v3803
  %3908 = vmatprep.subr.bf16.mxu0 %v3808
  %3909 = vmatpush1.bf16.msra.mxu0 %v3807
  %3910 = vmatprep.subr.bf16.mxu0 %v3812
  %3911 = vmatpush1.bf16.msra.mxu0 %v3811
  %3912 = vmatprep.subr.bf16.mxu0 %v3816
  %3913 = vmatpush1.bf16.msra.mxu0 %v3815
  %3914 = vmatprep.subr.bf16.mxu0 %v3820
  %3915 = vmatpush1.bf16.msra.mxu0 %v3819
  %3916 = vmatprep.subr.bf16.mxu0 %v3824
  %3917 = vmatpush1.bf16.msra.mxu0 %v3823
  %3918 = vmatprep.subr.bf16.mxu0 %v3828
  %3919 = vmatpush1.bf16.msra.mxu0 %v3827
  %3920 = vmatprep.subr.bf16.mxu0 %v3832
  %3921 = vmatpush1.bf16.msra.mxu0 %v3831
  %3922 = vmatprep.subr.bf16.mxu0 0
  %3923 = vmatpush1.bf16.msra.mxu0 0
  %3924 = vmatprep.subr.bf16.mxu0 0
  %3925 = vmatpush1.bf16.msra.mxu0 0
  %3926 = vmatprep.subr.bf16.mxu0 0
  %3927 = vmatpush1.bf16.msra.mxu0 0
  %3928 = vmatprep.subr.bf16.mxu0 0
  %3929 = vmatpush1.bf16.msra.mxu0 0
  %3930 = vmatprep.subr.bf16.mxu0 0
  %3931 = vmatpush1.bf16.msra.mxu0 0
  %3932 = vmatprep.subr.bf16.mxu0 0
  %3933 = vmatpush1.bf16.msra.mxu0 0
  %3934 = vmatprep.subr.bf16.mxu0 0
  %3935 = vmatpush1.bf16.msra.mxu0 0
  %3936 = vmatprep.subr.bf16.mxu0 0
  %3937 = vmatpush1.bf16.msra.mxu0 0
  %3938 = vmatprep.mubr.bf16.mxu0 0
  %3939 = vmatmul.mubr.bf16.gmra.mrb[0].mxu0 %v3650
  %v3940 = vpop.f32.mrb[0].mxu0
  %v3941 = vadd.f32 %v3696, %v3940
  %v3942 = vpop.f32.mrb[0].mxu0
  %v3943 = vadd.f32 %v3700, %v3942
  %v3944 = vpop.f32.mrb[0].mxu0
  %v3945 = vpop.f32.mrb[0].mxu0
  %3946 = vdwg.mxu0
  %v3947 = vld [vmem:[%s6] sm:$0xff]
  %v3948 = vld [vmem:[%s6 + $0x8] sm:$0xff]
  %v3949 = vld [vmem:[%s6 + $0x10] sm:$0xff]
  %v3950 = vld [vmem:[%s6 + $0x18] sm:$0xff]
  %v3951 = vld [vmem:[%s6 + $0x20] sm:$0xff]
  %v3952 = vld [vmem:[%s6 + $0x28] sm:$0xff]
  %v3953 = vld [vmem:[%s6 + $0x30] sm:$0xff]
  %v3954 = vld [vmem:[%s6 + $0x38] sm:$0xff]
  %v3955 = vld [vmem:[%s6 + $0x40] sm:$0xff]
  %v3956 = vld [vmem:[%s6 + $0x48] sm:$0xff]
  %v3957 = vld [vmem:[%s6 + $0x50] sm:$0xff]
  %v3958 = vld [vmem:[%s6 + $0x58] sm:$0xff]
  %v3959 = vld [vmem:[%s6 + $0x60] sm:$0xff]
  %v3960 = vld [vmem:[%s6 + $0x68] sm:$0xff]
  %v3961 = vld [vmem:[%s6 + $0x70] sm:$0xff]
  %v3962 = vld [vmem:[%s6 + $0x78] sm:$0xff]
  %v3963 = vld [vmem:[%s6 + $0x80] sm:$0xff]
  %v3964 = vld [vmem:[%s6 + $0x88] sm:$0xff]
  %v3965 = vld [vmem:[%s6 + $0x90] sm:$0xff]
  %v3966 = vld [vmem:[%s6 + $0x98] sm:$0xff]
  %v3967 = vld [vmem:[%s6 + $0xa0] sm:$0xff]
  %v3968 = vld [vmem:[%s6 + $0xa8] sm:$0xff]
  %v3969 = vld [vmem:[%s6 + $0xb0] sm:$0xff]
  %v3970 = vld [vmem:[%s6 + $0xb8] sm:$0xff]
  %v3971 = vld [vmem:[%s6 + $0xc0] sm:$0xff]
  %v3972 = vld [vmem:[%s6 + $0xc8] sm:$0xff]
  %v3973 = vld [vmem:[%s6 + $0xd0] sm:$0xff]
  %v3974 = vld [vmem:[%s6 + $0xd8] sm:$0xff]
  %v3975 = vld [vmem:[%s6 + $0xe0] sm:$0xff]
  %v3976 = vld [vmem:[%s6 + $0xe8] sm:$0xff]
  %v3977 = vld [vmem:[%s6 + $0xf0] sm:$0xff]
  %v3978 = vld [vmem:[%s6 + $0xf8] sm:$0xff]
  %v3979 = vld [vmem:[%s8] sm:$0xff]
  %v3980 = vld [vmem:[%s8 + $0x8] sm:$0xff]
  %v3981 = vld [vmem:[%s8 + $0x10] sm:$0xff]
  %v3982 = vld [vmem:[%s8 + $0x18] sm:$0xff]
  %v3983 = vld [vmem:[%s8 + $0x20] sm:$0xff]
  %v3984 = vld [vmem:[%s8 + $0x28] sm:$0xff]
  %v3985 = vld [vmem:[%s8 + $0x30] sm:$0xff]
  %v3986 = vld [vmem:[%s8 + $0x38] sm:$0xff]
  %v3987 = vld [vmem:[%s8 + $0x40] sm:$0xff]
  %v3988 = vld [vmem:[%s8 + $0x48] sm:$0xff]
  %v3989 = vld [vmem:[%s8 + $0x50] sm:$0xff]
  %v3990 = vld [vmem:[%s8 + $0x58] sm:$0xff]
  %v3991 = vld [vmem:[%s8 + $0x60] sm:$0xff]
  %v3992 = vld [vmem:[%s8 + $0x68] sm:$0xff]
  %v3993 = vld [vmem:[%s8 + $0x70] sm:$0xff]
  %v3994 = vld [vmem:[%s8 + $0x78] sm:$0xff]
  %v3995 = vld [vmem:[%s8 + $0x80] sm:$0xff]
  %v3996 = vld [vmem:[%s8 + $0x88] sm:$0xff]
  %v3997 = vld [vmem:[%s8 + $0x90] sm:$0xff]
  %v3998 = vld [vmem:[%s8 + $0x98] sm:$0xff]
  %v3999 = vld [vmem:[%s8 + $0xa0] sm:$0xff]
  %v4000 = vld [vmem:[%s8 + $0xa8] sm:$0xff]
  %v4001 = vld [vmem:[%s8 + $0xb0] sm:$0xff]
  %v4002 = vld [vmem:[%s8 + $0xb8] sm:$0xff]
  %v4003 = vld [vmem:[%s8 + $0xc0] sm:$0xff]
  %v4004 = vld [vmem:[%s8 + $0xc8] sm:$0xff]
  %v4005 = vld [vmem:[%s8 + $0xd0] sm:$0xff]
  %v4006 = vld [vmem:[%s8 + $0xd8] sm:$0xff]
  %v4007 = vld [vmem:[%s8 + $0xe0] sm:$0xff]
  %v4008 = vld [vmem:[%s8 + $0xe8] sm:$0xff]
  %v4009 = vld [vmem:[%s8 + $0xf0] sm:$0xff]
  %v4010 = vld [vmem:[%s8 + $0xf8] sm:$0xff]
  %v4011 = vld [vmem:[%s8 + $0x100] sm:$0xff]
  %v4012 = vld [vmem:[%s8 + $0x108] sm:$0xff]
  %v4013 = vld [vmem:[%s8 + $0x110] sm:$0xff]
  %v4014 = vld [vmem:[%s8 + $0x118] sm:$0xff]
  %v4015 = vld [vmem:[%s8 + $0x120] sm:$0xff]
  %v4016 = vld [vmem:[%s8 + $0x128] sm:$0xff]
  %v4017 = vld [vmem:[%s8 + $0x130] sm:$0xff]
  %v4018 = vld [vmem:[%s8 + $0x138] sm:$0xff]
  %v4019 = vld [vmem:[%s8 + $0x140] sm:$0xff]
  %v4020 = vld [vmem:[%s8 + $0x148] sm:$0xff]
  %v4021 = vld [vmem:[%s8 + $0x150] sm:$0xff]
  %v4022 = vld [vmem:[%s8 + $0x158] sm:$0xff]
  %v4023 = vld [vmem:[%s8 + $0x160] sm:$0xff]
  %v4024 = vld [vmem:[%s8 + $0x168] sm:$0xff]
  %v4025 = vld [vmem:[%s8 + $0x170] sm:$0xff]
  %v4026 = vld [vmem:[%s8 + $0x178] sm:$0xff]
  %v4027 = vld [vmem:[%s8 + $0x180] sm:$0xff]
  %v4028 = vld [vmem:[%s8 + $0x188] sm:$0xff]
  %v4029 = vld [vmem:[%s8 + $0x190] sm:$0xff]
  %v4030 = vld [vmem:[%s8 + $0x198] sm:$0xff]
  %v4031 = vld [vmem:[%s8 + $0x1a0] sm:$0xff]
  %v4032 = vld [vmem:[%s8 + $0x1a8] sm:$0xff]
  %v4033 = vld [vmem:[%s8 + $0x1b0] sm:$0xff]
  %v4034 = vld [vmem:[%s8 + $0x1b8] sm:$0xff]
  %v4035 = vld [vmem:[%s8 + $0x1c0] sm:$0xff]
  %v4036 = vld [vmem:[%s8 + $0x1c8] sm:$0xff]
  %v4037 = vld [vmem:[%s8 + $0x1d0] sm:$0xff]
  %v4038 = vld [vmem:[%s8 + $0x1d8] sm:$0xff]
  %v4039 = vld [vmem:[%s8 + $0x1e0] sm:$0xff]
  %v4040 = vld [vmem:[%s8 + $0x1e8] sm:$0xff]
  %v4041 = vld [vmem:[%s8 + $0x1f0] sm:$0xff]
  %v4042 = vld [vmem:[%s8 + $0x1f8] sm:$0xff]
  %v4043 = vld [vmem:[%s9] sm:$0xf]
  %v4076 = vunpack.c.l.b16 %v3947
  %v4077 = vunpack.c.h.b16 %v3947
  %v4078 = vunpack.c.l.b16 %v3948
  %v4079 = vunpack.c.h.b16 %v3948
  %v4080 = vunpack.c.l.b16 %v3949
  %v4081 = vunpack.c.h.b16 %v3949
  %v4082 = vunpack.c.l.b16 %v3950
  %v4083 = vunpack.c.h.b16 %v3950
  %v4084 = vunpack.c.l.b16 %v3951
  %v4085 = vunpack.c.h.b16 %v3951
  %v4086 = vunpack.c.l.b16 %v3952
  %v4087 = vunpack.c.h.b16 %v3952
  %v4088 = vunpack.c.l.b16 %v3953
  %v4089 = vunpack.c.h.b16 %v3953
  %v4090 = vunpack.c.l.b16 %v3954
  %v4091 = vunpack.c.h.b16 %v3954
  %v4092 = vunpack.c.l.b16 %v3955
  %v4093 = vunpack.c.h.b16 %v3955
  %v4094 = vunpack.c.l.b16 %v3956
  %v4095 = vunpack.c.h.b16 %v3956
  %v4096 = vunpack.c.l.b16 %v3957
  %v4097 = vunpack.c.h.b16 %v3957
  %v4098 = vunpack.c.l.b16 %v3958
  %v4099 = vunpack.c.h.b16 %v3958
  %v4100 = vunpack.c.l.b16 %v3959
  %v4101 = vunpack.c.h.b16 %v3959
  %v4102 = vunpack.c.l.b16 %v3960
  %v4103 = vunpack.c.h.b16 %v3960
  %v4104 = vunpack.c.l.b16 %v3961
  %v4105 = vunpack.c.h.b16 %v3961
  %v4106 = vunpack.c.l.b16 %v3962
  %v4107 = vunpack.c.h.b16 %v3962
  %v4108 = vunpack.c.l.b16 %v3963
  %v4109 = vunpack.c.h.b16 %v3963
  %v4110 = vunpack.c.l.b16 %v3964
  %v4111 = vunpack.c.h.b16 %v3964
  %v4112 = vunpack.c.l.b16 %v3965
  %v4113 = vunpack.c.h.b16 %v3965
  %v4114 = vunpack.c.l.b16 %v3966
  %v4115 = vunpack.c.h.b16 %v3966
  %v4116 = vunpack.c.l.b16 %v3967
  %v4117 = vunpack.c.h.b16 %v3967
  %v4118 = vunpack.c.l.b16 %v3968
  %v4119 = vunpack.c.h.b16 %v3968
  %v4120 = vunpack.c.l.b16 %v3969
  %v4121 = vunpack.c.h.b16 %v3969
  %v4122 = vunpack.c.l.b16 %v3970
  %v4123 = vunpack.c.h.b16 %v3970
  %v4124 = vunpack.c.l.b16 %v3971
  %v4125 = vunpack.c.h.b16 %v3971
  %v4126 = vunpack.c.l.b16 %v3972
  %v4127 = vunpack.c.h.b16 %v3972
  %v4128 = vunpack.c.l.b16 %v3973
  %v4129 = vunpack.c.h.b16 %v3973
  %v4130 = vunpack.c.l.b16 %v3974
  %v4131 = vunpack.c.h.b16 %v3974
  %v4132 = vunpack.c.l.b16 %v3975
  %v4133 = vunpack.c.h.b16 %v3975
  %v4134 = vunpack.c.l.b16 %v3976
  %v4135 = vunpack.c.h.b16 %v3976
  %v4136 = vunpack.c.l.b16 %v3977
  %v4137 = vunpack.c.h.b16 %v3977
  %v4138 = vunpack.c.l.b16 %v3978
  %v4139 = vunpack.c.h.b16 %v3978
  %v4140 = vpack.c.b16 %v4080, %v4076
  %v4141 = vpack.c.b16 %v4081, %v4077
  %v4142 = vpack.c.b16 %v4082, %v4078
  %v4143 = vpack.c.b16 %v4083, %v4079
  %v4144 = vpack.c.b16 %v4088, %v4084
  %v4145 = vpack.c.b16 %v4089, %v4085
  %v4146 = vpack.c.b16 %v4090, %v4086
  %v4147 = vpack.c.b16 %v4091, %v4087
  %v4148 = vpack.c.b16 %v4096, %v4092
  %v4149 = vpack.c.b16 %v4097, %v4093
  %v4150 = vpack.c.b16 %v4098, %v4094
  %v4151 = vpack.c.b16 %v4099, %v4095
  %v4152 = vpack.c.b16 %v4104, %v4100
  %v4153 = vpack.c.b16 %v4105, %v4101
  %v4154 = vpack.c.b16 %v4106, %v4102
  %v4155 = vpack.c.b16 %v4107, %v4103
  %v4156 = vpack.c.b16 %v4112, %v4108
  %v4157 = vpack.c.b16 %v4113, %v4109
  %v4158 = vpack.c.b16 %v4114, %v4110
  %v4159 = vpack.c.b16 %v4115, %v4111
  %v4160 = vpack.c.b16 %v4120, %v4116
  %v4161 = vpack.c.b16 %v4121, %v4117
  %v4162 = vpack.c.b16 %v4122, %v4118
  %v4163 = vpack.c.b16 %v4123, %v4119
  %v4164 = vpack.c.b16 %v4128, %v4124
  %v4165 = vpack.c.b16 %v4129, %v4125
  %v4166 = vpack.c.b16 %v4130, %v4126
  %v4167 = vpack.c.b16 %v4131, %v4127
  %v4168 = vpack.c.b16 %v4136, %v4132
  %v4169 = vpack.c.b16 %v4137, %v4133
  %v4170 = vpack.c.b16 %v4138, %v4134
  %v4171 = vpack.c.b16 %v4139, %v4135
  %4204 = vmatprep.subr.bf16.mxu0 %v4141
  %4205 = vmatpush1.bf16.msra.mxu0 %v4140
  %4206 = vmatprep.subr.bf16.mxu0 %v4145
  %4207 = vmatpush1.bf16.msra.mxu0 %v4144
  %4208 = vmatprep.subr.bf16.mxu0 %v4149
  %4209 = vmatpush1.bf16.msra.mxu0 %v4148
  %4210 = vmatprep.subr.bf16.mxu0 %v4153
  %4211 = vmatpush1.bf16.msra.mxu0 %v4152
  %4212 = vmatprep.subr.bf16.mxu0 %v4157
  %4213 = vmatpush1.bf16.msra.mxu0 %v4156
  %4214 = vmatprep.subr.bf16.mxu0 %v4161
  %4215 = vmatpush1.bf16.msra.mxu0 %v4160
  %4216 = vmatprep.subr.bf16.mxu0 %v4165
  %4217 = vmatpush1.bf16.msra.mxu0 %v4164
  %4218 = vmatprep.subr.bf16.mxu0 %v4169
  %4219 = vmatpush1.bf16.msra.mxu0 %v4168
  %4220 = vmatprep.subr.bf16.mxu0 0
  %4221 = vmatpush1.bf16.msra.mxu0 0
  %4222 = vmatprep.subr.bf16.mxu0 0
  %4223 = vmatpush1.bf16.msra.mxu0 0
  %4224 = vmatprep.subr.bf16.mxu0 0
  %4225 = vmatpush1.bf16.msra.mxu0 0
  %4226 = vmatprep.subr.bf16.mxu0 0
  %4227 = vmatpush1.bf16.msra.mxu0 0
  %4228 = vmatprep.subr.bf16.mxu0 0
  %4229 = vmatpush1.bf16.msra.mxu0 0
  %4230 = vmatprep.subr.bf16.mxu0 0
  %4231 = vmatpush1.bf16.msra.mxu0 0
  %4232 = vmatprep.subr.bf16.mxu0 0
  %4233 = vmatpush1.bf16.msra.mxu0 0
  %4234 = vmatprep.subr.bf16.mxu0 0
  %4235 = vmatpush1.bf16.msra.mxu0 0
  %4236 = vmatprep.mubr.bf16.mxu0 0
  %4237 = vmatmul.mubr.bf16.gmra.mrb[0].mxu0 0
  %v4238 = vpop.f32.mrb[0].mxu0
  %v4239 = vadd.f32 0.0, %v4238
  %v4240 = vpop.f32.mrb[0].mxu0
  %v4241 = vadd.f32 0.0, %v4240
  %v4242 = vpop.f32.mrb[0].mxu0
  %v4243 = vpop.f32.mrb[0].mxu0
  %4244 = vdwg.mxu0
  %4245 = vmatprep.subr.bf16.mxu0 %v4143
  %4246 = vmatpush1.bf16.msra.mxu0 %v4142
  %4247 = vmatprep.subr.bf16.mxu0 %v4147
  %4248 = vmatpush1.bf16.msra.mxu0 %v4146
  %4249 = vmatprep.subr.bf16.mxu0 %v4151
  %4250 = vmatpush1.bf16.msra.mxu0 %v4150
  %4251 = vmatprep.subr.bf16.mxu0 %v4155
  %4252 = vmatpush1.bf16.msra.mxu0 %v4154
  %4253 = vmatprep.subr.bf16.mxu0 %v4159
  %4254 = vmatpush1.bf16.msra.mxu0 %v4158
  %4255 = vmatprep.subr.bf16.mxu0 %v4163
  %4256 = vmatpush1.bf16.msra.mxu0 %v4162
  %4257 = vmatprep.subr.bf16.mxu0 %v4167
  %4258 = vmatpush1.bf16.msra.mxu0 %v4166
  %4259 = vmatprep.subr.bf16.mxu0 %v4171
  %4260 = vmatpush1.bf16.msra.mxu0 %v4170
  %4261 = vmatprep.subr.bf16.mxu0 0
  %4262 = vmatpush1.bf16.msra.mxu0 0
  %4263 = vmatprep.subr.bf16.mxu0 0
  %4264 = vmatpush1.bf16.msra.mxu0 0
  %4265 = vmatprep.subr.bf16.mxu0 0
  %4266 = vmatpush1.bf16.msra.mxu0 0
  %4267 = vmatprep.subr.bf16.mxu0 0
  %4268 = vmatpush1.bf16.msra.mxu0 0
  %4269 = vmatprep.subr.bf16.mxu0 0
  %4270 = vmatpush1.bf16.msra.mxu0 0
  %4271 = vmatprep.subr.bf16.mxu0 0
  %4272 = vmatpush1.bf16.msra.mxu0 0
  %4273 = vmatprep.subr.bf16.mxu0 0
  %4274 = vmatpush1.bf16.msra.mxu0 0
  %4275 = vmatprep.subr.bf16.mxu0 0
  %4276 = vmatpush1.bf16.msra.mxu0 0
  %4277 = vmatprep.mubr.bf16.mxu0 0
  %4278 = vmatmul.mubr.bf16.gmra.mrb[0].mxu0 0
  %v4279 = vpop.f32.mrb[0].mxu0
  %v4280 = vadd.f32 0.0, %v4279
  %v4281 = vpop.f32.mrb[0].mxu0
  %v4282 = vadd.f32 0.0, %v4281
  %v4283 = vpop.f32.mrb[0].mxu0
  %v4284 = vpop.f32.mrb[0].mxu0
  %4285 = vdwg.mxu0
  %v4286 = vadd.f32 %v3900, %v4239
  %v4287 = vadd.f32 %v3902, %v4241
  %v4288 = vadd.f32 %v3941, %v4280
  %v4289 = vadd.f32 %v3943, %v4282
  %v4290 = vxor.u32 %v4286, 2147483648
  %v4291 = vmul.f32 %v4290, 1.442695
  %v4292 = vpow.pop %v4291
  %v4293 = vadd.f32 %v4292, 1.0
  %v4294 = vrcp.pop %v4293
  %v4295 = vmul.f32 1.0, %v4294
  %v4296 = vxor.u32 %v4287, 2147483648
  %v4297 = vmul.f32 %v4296, 1.442695
  %v4298 = vpow.pop %v4297
  %v4299 = vadd.f32 %v4298, 1.0
  %v4300 = vrcp.pop %v4299
  %v4301 = vmul.f32 1.0, %v4300
  %v4302 = vtanh.pop %v4288
  %v4303 = vxor.u32 %v4289, 2147483648
  %v4304 = vmul.f32 %v4303, 1.442695
  %v4305 = vpow.pop %v4304
  %v4306 = vadd.f32 %v4305, 1.0
  %v4307 = vrcp.pop %v4306
  %v4308 = vmul.f32 1.0, %v4307
  %v4309 = vmul.f32 %v4301, 0.0
  %v4310 = vmul.f32 %v4295, %v4302
  %v4311 = vadd.f32 %v4309, %v4310
  %v4312 = vtanh.pop %v4311
  %v4313 = vmul.f32 %v4308, %v4312
  %v4314 = vpack.c.bf16 %v4313, %v4313
  %v4315 = vpack.c.bf16 0.0, 0.0
  %v4317 = vlaneseq
  %v4318 = vshrl.u32 %v4317, 7
  %v4319 = vsub.s32 0, %v4318
  %v4320 = vrot.slane %v4043, %v4319
  %v4321 = vlaneseq
  %v4322 = vshrl.u32 %v4321, 7
  %v4323 = vsub.s32 1, %v4322
  %v4324 = vrot.slane %v4043, %v4323
  %v4325 = vlaneseq
  %v4326 = vshrl.u32 %v4325, 7
  %v4327 = vsub.s32 2, %v4326
  %v4328 = vrot.slane %v4043, %v4327
  %v4329 = vlaneseq
  %v4330 = vshrl.u32 %v4329, 7
  %v4331 = vsub.s32 3, %v4330
  %v4332 = vrot.slane %v4043, %v4331
  %v4401 = vunpack.c.l.b16 %v3979
  %v4402 = vunpack.c.h.b16 %v3979
  %v4403 = vunpack.c.l.b16 %v3980
  %v4404 = vunpack.c.h.b16 %v3980
  %v4405 = vunpack.c.l.b16 %v3981
  %v4406 = vunpack.c.h.b16 %v3981
  %v4407 = vunpack.c.l.b16 %v3982
  %v4408 = vunpack.c.h.b16 %v3982
  %v4409 = vunpack.c.l.b16 %v3983
  %v4410 = vunpack.c.h.b16 %v3983
  %v4411 = vunpack.c.l.b16 %v3984
  %v4412 = vunpack.c.h.b16 %v3984
  %v4413 = vunpack.c.l.b16 %v3985
  %v4414 = vunpack.c.h.b16 %v3985
  %v4415 = vunpack.c.l.b16 %v3986
  %v4416 = vunpack.c.h.b16 %v3986
  %v4417 = vunpack.c.l.b16 %v3987
  %v4418 = vunpack.c.h.b16 %v3987
  %v4419 = vunpack.c.l.b16 %v3988
  %v4420 = vunpack.c.h.b16 %v3988
  %v4421 = vunpack.c.l.b16 %v3989
  %v4422 = vunpack.c.h.b16 %v3989
  %v4423 = vunpack.c.l.b16 %v3990
  %v4424 = vunpack.c.h.b16 %v3990
  %v4425 = vunpack.c.l.b16 %v3991
  %v4426 = vunpack.c.h.b16 %v3991
  %v4427 = vunpack.c.l.b16 %v3992
  %v4428 = vunpack.c.h.b16 %v3992
  %v4429 = vunpack.c.l.b16 %v3993
  %v4430 = vunpack.c.h.b16 %v3993
  %v4431 = vunpack.c.l.b16 %v3994
  %v4432 = vunpack.c.h.b16 %v3994
  %v4433 = vunpack.c.l.b16 %v3995
  %v4434 = vunpack.c.h.b16 %v3995
  %v4435 = vunpack.c.l.b16 %v3996
  %v4436 = vunpack.c.h.b16 %v3996
  %v4437 = vunpack.c.l.b16 %v3997
  %v4438 = vunpack.c.h.b16 %v3997
  %v4439 = vunpack.c.l.b16 %v3998
  %v4440 = vunpack.c.h.b16 %v3998
  %v4441 = vunpack.c.l.b16 %v3999
  %v4442 = vunpack.c.h.b16 %v3999
  %v4443 = vunpack.c.l.b16 %v4000
  %v4444 = vunpack.c.h.b16 %v4000
  %v4445 = vunpack.c.l.b16 %v4001
  %v4446 = vunpack.c.h.b16 %v4001
  %v4447 = vunpack.c.l.b16 %v4002
  %v4448 = vunpack.c.h.b16 %v4002
  %v4449 = vunpack.c.l.b16 %v4003
  %v4450 = vunpack.c.h.b16 %v4003
  %v4451 = vunpack.c.l.b16 %v4004
  %v4452 = vunpack.c.h.b16 %v4004
  %v4453 = vunpack.c.l.b16 %v4005
  %v4454 = vunpack.c.h.b16 %v4005
  %v4455 = vunpack.c.l.b16 %v4006
  %v4456 = vunpack.c.h.b16 %v4006
  %v4457 = vunpack.c.l.b16 %v4007
  %v4458 = vunpack.c.h.b16 %v4007
  %v4459 = vunpack.c.l.b16 %v4008
  %v4460 = vunpack.c.h.b16 %v4008
  %v4461 = vunpack.c.l.b16 %v4009
  %v4462 = vunpack.c.h.b16 %v4009
  %v4463 = vunpack.c.l.b16 %v4010
  %v4464 = vunpack.c.h.b16 %v4010
  %v4465 = vunpack.c.l.b16 %v4011
  %v4466 = vunpack.c.h.b16 %v4011
  %v4467 = vunpack.c.l.b16 %v4012
  %v4468 = vunpack.c.h.b16 %v4012
  %v4469 = vunpack.c.l.b16 %v4013
  %v4470 = vunpack.c.h.b16 %v4013
  %v4471 = vunpack.c.l.b16 %v4014
  %v4472 = vunpack.c.h.b16 %v4014
  %v4473 = vunpack.c.l.b16 %v4015
  %v4474 = vunpack.c.h.b16 %v4015
  %v4475 = vunpack.c.l.b16 %v4016
  %v4476 = vunpack.c.h.b16 %v4016
  %v4477 = vunpack.c.l.b16 %v4017
  %v4478 = vunpack.c.h.b16 %v4017
  %v4479 = vunpack.c.l.b16 %v4018
  %v4480 = vunpack.c.h.b16 %v4018
  %v4481 = vunpack.c.l.b16 %v4019
  %v4482 = vunpack.c.h.b16 %v4019
  %v4483 = vunpack.c.l.b16 %v4020
  %v4484 = vunpack.c.h.b16 %v4020
  %v4485 = vunpack.c.l.b16 %v4021
  %v4486 = vunpack.c.h.b16 %v4021
  %v4487 = vunpack.c.l.b16 %v4022
  %v4488 = vunpack.c.h.b16 %v4022
  %v4489 = vunpack.c.l.b16 %v4023
  %v4490 = vunpack.c.h.b16 %v4023
  %v4491 = vunpack.c.l.b16 %v4024
  %v4492 = vunpack.c.h.b16 %v4024
  %v4493 = vunpack.c.l.b16 %v4025
  %v4494 = vunpack.c.h.b16 %v4025
  %v4495 = vunpack.c.l.b16 %v4026
  %v4496 = vunpack.c.h.b16 %v4026
  %v4497 = vunpack.c.l.b16 %v4027
  %v4498 = vunpack.c.h.b16 %v4027
  %v4499 = vunpack.c.l.b16 %v4028
  %v4500 = vunpack.c.h.b16 %v4028
  %v4501 = vunpack.c.l.b16 %v4029
  %v4502 = vunpack.c.h.b16 %v4029
  %v4503 = vunpack.c.l.b16 %v4030
  %v4504 = vunpack.c.h.b16 %v4030
  %v4505 = vunpack.c.l.b16 %v4031
  %v4506 = vunpack.c.h.b16 %v4031
  %v4507 = vunpack.c.l.b16 %v4032
  %v4508 = vunpack.c.h.b16 %v4032
  %v4509 = vunpack.c.l.b16 %v4033
  %v4510 = vunpack.c.h.b16 %v4033
  %v4511 = vunpack.c.l.b16 %v4034
  %v4512 = vunpack.c.h.b16 %v4034
  %v4513 = vunpack.c.l.b16 %v4035
  %v4514 = vunpack.c.h.b16 %v4035
  %v4515 = vunpack.c.l.b16 %v4036
  %v4516 = vunpack.c.h.b16 %v4036
  %v4517 = vunpack.c.l.b16 %v4037
  %v4518 = vunpack.c.h.b16 %v4037
  %v4519 = vunpack.c.l.b16 %v4038
  %v4520 = vunpack.c.h.b16 %v4038
  %v4521 = vunpack.c.l.b16 %v4039
  %v4522 = vunpack.c.h.b16 %v4039
  %v4523 = vunpack.c.l.b16 %v4040
  %v4524 = vunpack.c.h.b16 %v4040
  %v4525 = vunpack.c.l.b16 %v4041
  %v4526 = vunpack.c.h.b16 %v4041
  %v4527 = vunpack.c.l.b16 %v4042
  %v4528 = vunpack.c.h.b16 %v4042
  %v4529 = vpack.c.b16 %v4405, %v4401
  %v4530 = vpack.c.b16 %v4406, %v4402
  %v4531 = vpack.c.b16 %v4407, %v4403
  %v4532 = vpack.c.b16 %v4408, %v4404
  %v4533 = vpack.c.b16 %v4413, %v4409
  %v4534 = vpack.c.b16 %v4414, %v4410
  %v4535 = vpack.c.b16 %v4415, %v4411
  %v4536 = vpack.c.b16 %v4416, %v4412
  %v4537 = vpack.c.b16 %v4421, %v4417
  %v4538 = vpack.c.b16 %v4422, %v4418
  %v4539 = vpack.c.b16 %v4423, %v4419
  %v4540 = vpack.c.b16 %v4424, %v4420
  %v4541 = vpack.c.b16 %v4429, %v4425
  %v4542 = vpack.c.b16 %v4430, %v4426
  %v4543 = vpack.c.b16 %v4431, %v4427
  %v4544 = vpack.c.b16 %v4432, %v4428
  %v4545 = vpack.c.b16 %v4437, %v4433
  %v4546 = vpack.c.b16 %v4438, %v4434
  %v4547 = vpack.c.b16 %v4439, %v4435
  %v4548 = vpack.c.b16 %v4440, %v4436
  %v4549 = vpack.c.b16 %v4445, %v4441
  %v4550 = vpack.c.b16 %v4446, %v4442
  %v4551 = vpack.c.b16 %v4447, %v4443
  %v4552 = vpack.c.b16 %v4448, %v4444
  %v4553 = vpack.c.b16 %v4453, %v4449
  %v4554 = vpack.c.b16 %v4454, %v4450
  %v4555 = vpack.c.b16 %v4455, %v4451
  %v4556 = vpack.c.b16 %v4456, %v4452
  %v4557 = vpack.c.b16 %v4461, %v4457
  %v4558 = vpack.c.b16 %v4462, %v4458
  %v4559 = vpack.c.b16 %v4463, %v4459
  %v4560 = vpack.c.b16 %v4464, %v4460
  %v4561 = vpack.c.b16 %v4469, %v4465
  %v4562 = vpack.c.b16 %v4470, %v4466
  %v4563 = vpack.c.b16 %v4471, %v4467
  %v4564 = vpack.c.b16 %v4472, %v4468
  %v4565 = vpack.c.b16 %v4477, %v4473
  %v4566 = vpack.c.b16 %v4478, %v4474
  %v4567 = vpack.c.b16 %v4479, %v4475
  %v4568 = vpack.c.b16 %v4480, %v4476
  %v4569 = vpack.c.b16 %v4485, %v4481
  %v4570 = vpack.c.b16 %v4486, %v4482
  %v4571 = vpack.c.b16 %v4487, %v4483
  %v4572 = vpack.c.b16 %v4488, %v4484
  %v4573 = vpack.c.b16 %v4493, %v4489
  %v4574 = vpack.c.b16 %v4494, %v4490
  %v4575 = vpack.c.b16 %v4495, %v4491
  %v4576 = vpack.c.b16 %v4496, %v4492
  %v4577 = vpack.c.b16 %v4501, %v4497
  %v4578 = vpack.c.b16 %v4502, %v4498
  %v4579 = vpack.c.b16 %v4503, %v4499
  %v4580 = vpack.c.b16 %v4504, %v4500
  %v4581 = vpack.c.b16 %v4509, %v4505
  %v4582 = vpack.c.b16 %v4510, %v4506
  %v4583 = vpack.c.b16 %v4511, %v4507
  %v4584 = vpack.c.b16 %v4512, %v4508
  %v4585 = vpack.c.b16 %v4517, %v4513
  %v4586 = vpack.c.b16 %v4518, %v4514
  %v4587 = vpack.c.b16 %v4519, %v4515
  %v4588 = vpack.c.b16 %v4520, %v4516
  %v4589 = vpack.c.b16 %v4525, %v4521
  %v4590 = vpack.c.b16 %v4526, %v4522
  %v4591 = vpack.c.b16 %v4527, %v4523
  %v4592 = vpack.c.b16 %v4528, %v4524
  %4657 = vmatprep.subr.bf16.mxu0 %v4530
  %4658 = vmatpush1.bf16.msra.mxu0 %v4529
  %4659 = vmatprep.subr.bf16.mxu0 %v4534
  %4660 = vmatpush1.bf16.msra.mxu0 %v4533
  %4661 = vmatprep.subr.bf16.mxu0 %v4538
  %4662 = vmatpush1.bf16.msra.mxu0 %v4537
  %4663 = vmatprep.subr.bf16.mxu0 %v4542
  %4664 = vmatpush1.bf16.msra.mxu0 %v4541
  %4665 = vmatprep.subr.bf16.mxu0 %v4546
  %4666 = vmatpush1.bf16.msra.mxu0 %v4545
  %4667 = vmatprep.subr.bf16.mxu0 %v4550
  %4668 = vmatpush1.bf16.msra.mxu0 %v4549
  %4669 = vmatprep.subr.bf16.mxu0 %v4554
  %4670 = vmatpush1.bf16.msra.mxu0 %v4553
  %4671 = vmatprep.subr.bf16.mxu0 %v4558
  %4672 = vmatpush1.bf16.msra.mxu0 %v4557
  %4673 = vmatprep.subr.bf16.mxu0 %v4562
  %4674 = vmatpush1.bf16.msra.mxu0 %v4561
  %4675 = vmatprep.subr.bf16.mxu0 %v4566
  %4676 = vmatpush1.bf16.msra.mxu0 %v4565
  %4677 = vmatprep.subr.bf16.mxu0 %v4570
  %4678 = vmatpush1.bf16.msra.mxu0 %v4569
  %4679 = vmatprep.subr.bf16.mxu0 %v4574
  %4680 = vmatpush1.bf16.msra.mxu0 %v4573
  %4681 = vmatprep.subr.bf16.mxu0 %v4578
  %4682 = vmatpush1.bf16.msra.mxu0 %v4577
  %4683 = vmatprep.subr.bf16.mxu0 %v4582
  %4684 = vmatpush1.bf16.msra.mxu0 %v4581
  %4685 = vmatprep.subr.bf16.mxu0 %v4586
  %4686 = vmatpush1.bf16.msra.mxu0 %v4585
  %4687 = vmatprep.subr.bf16.mxu0 %v4590
  %4688 = vmatpush1.bf16.msra.mxu0 %v4589
  %4689 = vmatprep.mubr.bf16.mxu0 %v4315
  %4690 = vmatmul.mubr.bf16.gmra.mrb[0].mxu0 %v4314
  %v4691 = vpop.f32.mrb[0].mxu0
  %v4692 = vadd.f32 %v4320, %v4691
  %v4693 = vpop.f32.mrb[0].mxu0
  %v4694 = vadd.f32 %v4324, %v4693
  %v4695 = vpop.f32.mrb[0].mxu0
  %v4696 = vpop.f32.mrb[0].mxu0
  %4697 = vdwg.mxu0
  %4698 = vmatprep.subr.bf16.mxu0 %v4532
  %4699 = vmatpush1.bf16.msra.mxu0 %v4531
  %4700 = vmatprep.subr.bf16.mxu0 %v4536
  %4701 = vmatpush1.bf16.msra.mxu0 %v4535
  %4702 = vmatprep.subr.bf16.mxu0 %v4540
  %4703 = vmatpush1.bf16.msra.mxu0 %v4539
  %4704 = vmatprep.subr.bf16.mxu0 %v4544
  %4705 = vmatpush1.bf16.msra.mxu0 %v4543
  %4706 = vmatprep.subr.bf16.mxu0 %v4548
  %4707 = vmatpush1.bf16.msra.mxu0 %v4547
  %4708 = vmatprep.subr.bf16.mxu0 %v4552
  %4709 = vmatpush1.bf16.msra.mxu0 %v4551
  %4710 = vmatprep.subr.bf16.mxu0 %v4556
  %4711 = vmatpush1.bf16.msra.mxu0 %v4555
  %4712 = vmatprep.subr.bf16.mxu0 %v4560
  %4713 = vmatpush1.bf16.msra.mxu0 %v4559
  %4714 = vmatprep.subr.bf16.mxu0 %v4564
  %4715 = vmatpush1.bf16.msra.mxu0 %v4563
  %4716 = vmatprep.subr.bf16.mxu0 %v4568
  %4717 = vmatpush1.bf16.msra.mxu0 %v4567
  %4718 = vmatprep.subr.bf16.mxu0 %v4572
  %4719 = vmatpush1.bf16.msra.mxu0 %v4571
  %4720 = vmatprep.subr.bf16.mxu0 %v4576
  %4721 = vmatpush1.bf16.msra.mxu0 %v4575
  %4722 = vmatprep.subr.bf16.mxu0 %v4580
  %4723 = vmatpush1.bf16.msra.mxu0 %v4579
  %4724 = vmatprep.subr.bf16.mxu0 %v4584
  %4725 = vmatpush1.bf16.msra.mxu0 %v4583
  %4726 = vmatprep.subr.bf16.mxu0 %v4588
  %4727 = vmatpush1.bf16.msra.mxu0 %v4587
  %4728 = vmatprep.subr.bf16.mxu0 %v4592
  %4729 = vmatpush1.bf16.msra.mxu0 %v4591
  %4730 = vmatprep.mubr.bf16.mxu0 %v4315
  %4731 = vmatmul.mubr.bf16.gmra.mrb[0].mxu0 %v4314
  %v4732 = vpop.f32.mrb[0].mxu0
  %v4733 = vadd.f32 %v4328, %v4732
  %v4734 = vpop.f32.mrb[0].mxu0
  %v4735 = vadd.f32 %v4332, %v4734
  %v4736 = vpop.f32.mrb[0].mxu0
  %v4737 = vpop.f32.mrb[0].mxu0
  %4738 = vdwg.mxu0
  %v4739 = vxor.u32 %v4692, 2147483648
  %v4740 = vmul.f32 %v4739, 1.442695
  %v4741 = vpow.pop %v4740
  %v4742 = vadd.f32 %v4741, 1.0
  %v4743 = vrcp.pop %v4742
  %v4744 = vmul.f32 1.0, %v4743
  %v4745 = vxor.u32 %v4694, 2147483648
  %v4746 = vmul.f32 %v4745, 1.442695
  %v4747 = vpow.pop %v4746
  %v4748 = vadd.f32 %v4747, 1.0
  %v4749 = vrcp.pop %v4748
  %v4750 = vmul.f32 1.0, %v4749
  %v4751 = vtanh.pop %v4733
  %v4752 = vxor.u32 %v4735, 2147483648
  %v4753 = vmul.f32 %v4752, 1.442695
  %v4754 = vpow.pop %v4753
  %v4755 = vadd.f32 %v4754, 1.0
  %v4756 = vrcp.pop %v4755
  %v4757 = vmul.f32 1.0, %v4756
  %v4758 = vmul.f32 %v4750, 0.0
  %v4759 = vmul.f32 %v4744, %v4751
  %v4760 = vadd.f32 %v4758, %v4759
  %v4761 = vtanh.pop %v4760
  %v4762 = vmul.f32 %v4757, %v4761
  %4763 = vmatprep.subr.bf16.mxu0 %v4141
  %4764 = vmatpush1.bf16.msra.mxu0 %v4140
  %4765 = vmatprep.subr.bf16.mxu0 %v4145
  %4766 = vmatpush1.bf16.msra.mxu0 %v4144
  %4767 = vmatprep.subr.bf16.mxu0 %v4149
  %4768 = vmatpush1.bf16.msra.mxu0 %v4148
  %4769 = vmatprep.subr.bf16.mxu0 %v4153
  %4770 = vmatpush1.bf16.msra.mxu0 %v4152
  %4771 = vmatprep.subr.bf16.mxu0 %v4157
  %4772 = vmatpush1.bf16.msra.mxu0 %v4156
  %4773 = vmatprep.subr.bf16.mxu0 %v4161
  %4774 = vmatpush1.bf16.msra.mxu0 %v4160
  %4775 = vmatprep.subr.bf16.mxu0 %v4165
  %4776 = vmatpush1.bf16.msra.mxu0 %v4164
  %4777 = vmatprep.subr.bf16.mxu0 %v4169
  %4778 = vmatpush1.bf16.msra.mxu0 %v4168
  %4779 = vmatprep.subr.bf16.mxu0 0
  %4780 = vmatpush1.bf16.msra.mxu0 0
  %4781 = vmatprep.subr.bf16.mxu0 0
  %4782 = vmatpush1.bf16.msra.mxu0 0
  %4783 = vmatprep.subr.bf16.mxu0 0
  %4784 = vmatpush1.bf16.msra.mxu0 0
  %4785 = vmatprep.subr.bf16.mxu0 0
  %4786 = vmatpush1.bf16.msra.mxu0 0
  %4787 = vmatprep.subr.bf16.mxu0 0
  %4788 = vmatpush1.bf16.msra.mxu0 0
  %4789 = vmatprep.subr.bf16.mxu0 0
  %4790 = vmatpush1.bf16.msra.mxu0 0
  %4791 = vmatprep.subr.bf16.mxu0 0
  %4792 = vmatpush1.bf16.msra.mxu0 0
  %4793 = vmatprep.subr.bf16.mxu0 0
  %4794 = vmatpush1.bf16.msra.mxu0 0
  %4795 = vmatprep.mubr.bf16.mxu0 0
  %4796 = vmatmul.mubr.bf16.gmra.mrb[0].mxu0 %v4314
  %v4797 = vpop.f32.mrb[0].mxu0
  %v4798 = vadd.f32 0.0, %v4797
  %v4799 = vpop.f32.mrb[0].mxu0
  %v4800 = vadd.f32 0.0, %v4799
  %v4801 = vpop.f32.mrb[0].mxu0
  %v4802 = vpop.f32.mrb[0].mxu0
  %4803 = vdwg.mxu0
  %4804 = vmatprep.subr.bf16.mxu0 %v4143
  %4805 = vmatpush1.bf16.msra.mxu0 %v4142
  %4806 = vmatprep.subr.bf16.mxu0 %v4147
  %4807 = vmatpush1.bf16.msra.mxu0 %v4146
  %4808 = vmatprep.subr.bf16.mxu0 %v4151
  %4809 = vmatpush1.bf16.msra.mxu0 %v4150
  %4810 = vmatprep.subr.bf16.mxu0 %v4155
  %4811 = vmatpush1.bf16.msra.mxu0 %v4154
  %4812 = vmatprep.subr.bf16.mxu0 %v4159
  %4813 = vmatpush1.bf16.msra.mxu0 %v4158
  %4814 = vmatprep.subr.bf16.mxu0 %v4163
  %4815 = vmatpush1.bf16.msra.mxu0 %v4162
  %4816 = vmatprep.subr.bf16.mxu0 %v4167
  %4817 = vmatpush1.bf16.msra.mxu0 %v4166
  %4818 = vmatprep.subr.bf16.mxu0 %v4171
  %4819 = vmatpush1.bf16.msra.mxu0 %v4170
  %4820 = vmatprep.subr.bf16.mxu0 0
  %4821 = vmatpush1.bf16.msra.mxu0 0
  %4822 = vmatprep.subr.bf16.mxu0 0
  %4823 = vmatpush1.bf16.msra.mxu0 0
  %4824 = vmatprep.subr.bf16.mxu0 0
  %4825 = vmatpush1.bf16.msra.mxu0 0
  %4826 = vmatprep.subr.bf16.mxu0 0
  %4827 = vmatpush1.bf16.msra.mxu0 0
  %4828 = vmatprep.subr.bf16.mxu0 0
  %4829 = vmatpush1.bf16.msra.mxu0 0
  %4830 = vmatprep.subr.bf16.mxu0 0
  %4831 = vmatpush1.bf16.msra.mxu0 0
  %4832 = vmatprep.subr.bf16.mxu0 0
  %4833 = vmatpush1.bf16.msra.mxu0 0
  %4834 = vmatprep.subr.bf16.mxu0 0
  %4835 = vmatpush1.bf16.msra.mxu0 0
  %4836 = vmatprep.mubr.bf16.mxu0 0
  %4837 = vmatmul.mubr.bf16.gmra.mrb[0].mxu0 %v4314
  %v4838 = vpop.f32.mrb[0].mxu0
  %v4839 = vadd.f32 0.0, %v4838
  %v4840 = vpop.f32.mrb[0].mxu0
  %v4841 = vadd.f32 0.0, %v4840
  %v4842 = vpop.f32.mrb[0].mxu0
  %v4843 = vpop.f32.mrb[0].mxu0
  %4844 = vdwg.mxu0
  %v4849 = vrot.slane %v4798, 6
  %v4850 = vrot.slane %v4800, 6
  %v4851 = vrot.slane %v4839, 6
  %v4852 = vrot.slane %v4841, 6
  %v4857 = vadd.f32 %v3900, %v4849
  %v4858 = vadd.f32 %v3902, %v4850
  %v4859 = vadd.f32 %v3941, %v4851
  %v4860 = vadd.f32 %v3943, %v4852
  %v4861 = vxor.u32 %v4857, 2147483648
  %v4862 = vmul.f32 %v4861, 1.442695
  %v4863 = vpow.pop %v4862
  %v4864 = vadd.f32 %v4863, 1.0
  %v4865 = vrcp.pop %v4864
  %v4866 = vmul.f32 1.0, %v4865
  %v4867 = vxor.u32 %v4858, 2147483648
  %v4868 = vmul.f32 %v4867, 1.442695
  %v4869 = vpow.pop %v4868
  %v4870 = vadd.f32 %v4869, 1.0
  %v4871 = vrcp.pop %v4870
  %v4872 = vmul.f32 1.0, %v4871
  %v4873 = vtanh.pop %v4859
  %v4874 = vxor.u32 %v4860, 2147483648
  %v4875 = vmul.f32 %v4874, 1.442695
  %v4876 = vpow.pop %v4875
  %v4877 = vadd.f32 %v4876, 1.0
  %v4878 = vrcp.pop %v4877
  %v4879 = vmul.f32 1.0, %v4878
  %v4881 = vrot.slane %v4311, 6
  %v4883 = vmul.f32 %v4872, %v4881
  %v4884 = vmul.f32 %v4866, %v4873
  %v4885 = vadd.f32 %v4883, %v4884
  %v4886 = vtanh.pop %v4885
  %v4887 = vmul.f32 %v4879, %v4886
  %v4889 = vrot.slane %v4762, 6
  %v4891 = vpack.c.bf16 %v4887, %v4887
  %v4892 = vpack.c.bf16 %v4889, %v4889
  %v4895 = vrot.slane %v4891, 1
  %v4896 = vrot.slane %v4892, 1
  %4899 = vmatprep.subr.bf16.mxu0 %v4530
  %4900 = vmatpush1.bf16.msra.mxu0 %v4529
  %4901 = vmatprep.subr.bf16.mxu0 %v4534
  %4902 = vmatpush1.bf16.msra.mxu0 %v4533
  %4903 = vmatprep.subr.bf16.mxu0 %v4538
  %4904 = vmatpush1.bf16.msra.mxu0 %v4537
  %4905 = vmatprep.subr.bf16.mxu0 %v4542
  %4906 = vmatpush1.bf16.msra.mxu0 %v4541
  %4907 = vmatprep.subr.bf16.mxu0 %v4546
  %4908 = vmatpush1.bf16.msra.mxu0 %v4545
  %4909 = vmatprep.subr.bf16.mxu0 %v4550
  %4910 = vmatpush1.bf16.msra.mxu0 %v4549
  %4911 = vmatprep.subr.bf16.mxu0 %v4554
  %4912 = vmatpush1.bf16.msra.mxu0 %v4553
  %4913 = vmatprep.subr.bf16.mxu0 %v4558
  %4914 = vmatpush1.bf16.msra.mxu0 %v4557
  %4915 = vmatprep.subr.bf16.mxu0 %v4562
  %4916 = vmatpush1.bf16.msra.mxu0 %v4561
  %4917 = vmatprep.subr.bf16.mxu0 %v4566
  %4918 = vmatpush1.bf16.msra.mxu0 %v4565
  %4919 = vmatprep.subr.bf16.mxu0 %v4570
  %4920 = vmatpush1.bf16.msra.mxu0 %v4569
  %4921 = vmatprep.subr.bf16.mxu0 %v4574
  %4922 = vmatpush1.bf16.msra.mxu0 %v4573
  %4923 = vmatprep.subr.bf16.mxu0 %v4578
  %4924 = vmatpush1.bf16.msra.mxu0 %v4577
  %4925 = vmatprep.subr.bf16.mxu0 %v4582
  %4926 = vmatpush1.bf16.msra.mxu0 %v4581
  %4927 = vmatprep.subr.bf16.mxu0 %v4586
  %4928 = vmatpush1.bf16.msra.mxu0 %v4585
  %4929 = vmatprep.subr.bf16.mxu0 %v4590
  %4930 = vmatpush1.bf16.msra.mxu0 %v4589
  %4931 = vmatprep.mubr.bf16.mxu0 %v4896
  %4932 = vmatmul.mubr.bf16.gmra.mrb[0].mxu0 %v4895
  %v4933 = vpop.f32.mrb[0].mxu0
  %v4934 = vadd.f32 %v4320, %v4933
  %v4935 = vpop.f32.mrb[0].mxu0
  %v4936 = vadd.f32 %v4324, %v4935
  %v4937 = vpop.f32.mrb[0].mxu0
  %v4938 = vpop.f32.mrb[0].mxu0
  %4939 = vdwg.mxu0
  %4940 = vmatprep.subr.bf16.mxu0 %v4532
  %4941 = vmatpush1.bf16.msra.mxu0 %v4531
  %4942 = vmatprep.subr.bf16.mxu0 %v4536
  %4943 = vmatpush1.bf16.msra.mxu0 %v4535
  %4944 = vmatprep.subr.bf16.mxu0 %v4540
  %4945 = vmatpush1.bf16.msra.mxu0 %v4539
  %4946 = vmatprep.subr.bf16.mxu0 %v4544
  %4947 = vmatpush1.bf16.msra.mxu0 %v4543
  %4948 = vmatprep.subr.bf16.mxu0 %v4548
  %4949 = vmatpush1.bf16.msra.mxu0 %v4547
  %4950 = vmatprep.subr.bf16.mxu0 %v4552
  %4951 = vmatpush1.bf16.msra.mxu0 %v4551
  %4952 = vmatprep.subr.bf16.mxu0 %v4556
  %4953 = vmatpush1.bf16.msra.mxu0 %v4555
  %4954 = vmatprep.subr.bf16.mxu0 %v4560
  %4955 = vmatpush1.bf16.msra.mxu0 %v4559
  %4956 = vmatprep.subr.bf16.mxu0 %v4564
  %4957 = vmatpush1.bf16.msra.mxu0 %v4563
  %4958 = vmatprep.subr.bf16.mxu0 %v4568
  %4959 = vmatpush1.bf16.msra.mxu0 %v4567
  %4960 = vmatprep.subr.bf16.mxu0 %v4572
  %4961 = vmatpush1.bf16.msra.mxu0 %v4571
  %4962 = vmatprep.subr.bf16.mxu0 %v4576
  %4963 = vmatpush1.bf16.msra.mxu0 %v4575
  %4964 = vmatprep.subr.bf16.mxu0 %v4580
  %4965 = vmatpush1.bf16.msra.mxu0 %v4579
  %4966 = vmatprep.subr.bf16.mxu0 %v4584
  %4967 = vmatpush1.bf16.msra.mxu0 %v4583
  %4968 = vmatprep.subr.bf16.mxu0 %v4588
  %4969 = vmatpush1.bf16.msra.mxu0 %v4587
  %4970 = vmatprep.subr.bf16.mxu0 %v4592
  %4971 = vmatpush1.bf16.msra.mxu0 %v4591
  %4972 = vmatprep.mubr.bf16.mxu0 %v4896
  %4973 = vmatmul.mubr.bf16.gmra.mrb[0].mxu0 %v4895
  %v4974 = vpop.f32.mrb[0].mxu0
  %v4975 = vadd.f32 %v4328, %v4974
  %v4976 = vpop.f32.mrb[0].mxu0
  %v4977 = vadd.f32 %v4332, %v4976
  %v4978 = vpop.f32.mrb[0].mxu0
  %v4979 = vpop.f32.mrb[0].mxu0
  %4980 = vdwg.mxu0
  %v4981 = vxor.u32 %v4934, 2147483648
  %v4982 = vmul.f32 %v4981, 1.442695
  %v4983 = vpow.pop %v4982
  %v4984 = vadd.f32 %v4983, 1.0
  %v4985 = vrcp.pop %v4984
  %v4986 = vmul.f32 1.0, %v4985
  %v4987 = vxor.u32 %v4936, 2147483648
  %v4988 = vmul.f32 %v4987, 1.442695
  %v4989 = vpow.pop %v4988
  %v4990 = vadd.f32 %v4989, 1.0
  %v4991 = vrcp.pop %v4990
  %v4992 = vmul.f32 1.0, %v4991
  %v4993 = vtanh.pop %v4975
  %v4994 = vxor.u32 %v4977, 2147483648
  %v4995 = vmul.f32 %v4994, 1.442695
  %v4996 = vpow.pop %v4995
  %v4997 = vadd.f32 %v4996, 1.0
  %v4998 = vrcp.pop %v4997
  %v4999 = vmul.f32 1.0, %v4998
  %v5000 = vmul.f32 %v4992, %v4760
  %v5001 = vmul.f32 %v4986, %v4993
  %v5002 = vadd.f32 %v5000, %v5001
  %v5003 = vtanh.pop %v5002
  %v5004 = vmul.f32 %v4999, %v5003
  %5005 = vmatprep.subr.bf16.mxu0 %v4141
  %5006 = vmatpush1.bf16.msra.mxu0 %v4140
  %5007 = vmatprep.subr.bf16.mxu0 %v4145
  %5008 = vmatpush1.bf16.msra.mxu0 %v4144
  %5009 = vmatprep.subr.bf16.mxu0 %v4149
  %5010 = vmatpush1.bf16.msra.mxu0 %v4148
  %5011 = vmatprep.subr.bf16.mxu0 %v4153
  %5012 = vmatpush1.bf16.msra.mxu0 %v4152
  %5013 = vmatprep.subr.bf16.mxu0 %v4157
  %5014 = vmatpush1.bf16.msra.mxu0 %v4156
  %5015 = vmatprep.subr.bf16.mxu0 %v4161
  %5016 = vmatpush1.bf16.msra.mxu0 %v4160
  %5017 = vmatprep.subr.bf16.mxu0 %v4165
  %5018 = vmatpush1.bf16.msra.mxu0 %v4164
  %5019 = vmatprep.subr.bf16.mxu0 %v4169
  %5020 = vmatpush1.bf16.msra.mxu0 %v4168
  %5021 = vmatprep.subr.bf16.mxu0 0
  %5022 = vmatpush1.bf16.msra.mxu0 0
  %5023 = vmatprep.subr.bf16.mxu0 0
  %5024 = vmatpush1.bf16.msra.mxu0 0
  %5025 = vmatprep.subr.bf16.mxu0 0
  %5026 = vmatpush1.bf16.msra.mxu0 0
  %5027 = vmatprep.subr.bf16.mxu0 0
  %5028 = vmatpush1.bf16.msra.mxu0 0
  %5029 = vmatprep.subr.bf16.mxu0 0
  %5030 = vmatpush1.bf16.msra.mxu0 0
  %5031 = vmatprep.subr.bf16.mxu0 0
  %5032 = vmatpush1.bf16.msra.mxu0 0
  %5033 = vmatprep.subr.bf16.mxu0 0
  %5034 = vmatpush1.bf16.msra.mxu0 0
  %5035 = vmatprep.subr.bf16.mxu0 0
  %5036 = vmatpush1.bf16.msra.mxu0 0
  %5037 = vmatprep.mubr.bf16.mxu0 0
  %5038 = vmatmul.mubr.bf16.gmra.mrb[0].mxu0 %v4895
  %v5039 = vpop.f32.mrb[0].mxu0
  %v5040 = vadd.f32 0.0, %v5039
  %v5041 = vpop.f32.mrb[0].mxu0
  %v5042 = vadd.f32 0.0, %v5041
  %v5043 = vpop.f32.mrb[0].mxu0
  %v5044 = vpop.f32.mrb[0].mxu0
  %5045 = vdwg.mxu0
  %5046 = vmatprep.subr.bf16.mxu0 %v4143
  %5047 = vmatpush1.bf16.msra.mxu0 %v4142
  %5048 = vmatprep.subr.bf16.mxu0 %v4147
  %5049 = vmatpush1.bf16.msra.mxu0 %v4146
  %5050 = vmatprep.subr.bf16.mxu0 %v4151
  %5051 = vmatpush1.bf16.msra.mxu0 %v4150
  %5052 = vmatprep.subr.bf16.mxu0 %v4155
  %5053 = vmatpush1.bf16.msra.mxu0 %v4154
  %5054 = vmatprep.subr.bf16.mxu0 %v4159
  %5055 = vmatpush1.bf16.msra.mxu0 %v4158
  %5056 = vmatprep.subr.bf16.mxu0 %v4163
  %5057 = vmatpush1.bf16.msra.mxu0 %v4162
  %5058 = vmatprep.subr.bf16.mxu0 %v4167
  %5059 = vmatpush1.bf16.msra.mxu0 %v4166
  %5060 = vmatprep.subr.bf16.mxu0 %v4171
  %5061 = vmatpush1.bf16.msra.mxu0 %v4170
  %5062 = vmatprep.subr.bf16.mxu0 0
  %5063 = vmatpush1.bf16.msra.mxu0 0
  %5064 = vmatprep.subr.bf16.mxu0 0
  %5065 = vmatpush1.bf16.msra.mxu0 0
  %5066 = vmatprep.subr.bf16.mxu0 0
  %5067 = vmatpush1.bf16.msra.mxu0 0
  %5068 = vmatprep.subr.bf16.mxu0 0
  %5069 = vmatpush1.bf16.msra.mxu0 0
  %5070 = vmatprep.subr.bf16.mxu0 0
  %5071 = vmatpush1.bf16.msra.mxu0 0
  %5072 = vmatprep.subr.bf16.mxu0 0
  %5073 = vmatpush1.bf16.msra.mxu0 0
  %5074 = vmatprep.subr.bf16.mxu0 0
  %5075 = vmatpush1.bf16.msra.mxu0 0
  %5076 = vmatprep.subr.bf16.mxu0 0
  %5077 = vmatpush1.bf16.msra.mxu0 0
  %5078 = vmatprep.mubr.bf16.mxu0 0
  %5079 = vmatmul.mubr.bf16.gmra.mrb[0].mxu0 %v4895
  %v5080 = vpop.f32.mrb[0].mxu0
  %v5081 = vadd.f32 0.0, %v5080
  %v5082 = vpop.f32.mrb[0].mxu0
  %v5083 = vadd.f32 0.0, %v5082
  %v5084 = vpop.f32.mrb[0].mxu0
  %v5085 = vpop.f32.mrb[0].mxu0
  %5086 = vdwg.mxu0
  %v5091 = vrot.slane %v5040, 4
  %v5092 = vrot.slane %v5042, 4
  %v5093 = vrot.slane %v5081, 4
  %v5094 = vrot.slane %v5083, 4
  %v5099 = vadd.f32 %v3900, %v5091
  %v5100 = vadd.f32 %v3902, %v5092
  %v5101 = vadd.f32 %v3941, %v5093
  %v5102 = vadd.f32 %v3943, %v5094
  %v5103 = vxor.u32 %v5099, 2147483648
  %v5104 = vmul.f32 %v5103, 1.442695
  %v5105 = vpow.pop %v5104
  %v5106 = vadd.f32 %v5105, 1.0
  %v5107 = vrcp.pop %v5106
  %v5108 = vmul.f32 1.0, %v5107
  %v5109 = vxor.u32 %v5100, 2147483648
  %v5110 = vmul.f32 %v5109, 1.442695
  %v5111 = vpow.pop %v5110
  %v5112 = vadd.f32 %v5111, 1.0
  %v5113 = vrcp.pop %v5112
  %v5114 = vmul.f32 1.0, %v5113
  %v5115 = vtanh.pop %v5101
  %v5116 = vxor.u32 %v5102, 2147483648
  %v5117 = vmul.f32 %v5116, 1.442695
  %v5118 = vpow.pop %v5117
  %v5119 = vadd.f32 %v5118, 1.0
  %v5120 = vrcp.pop %v5119
  %v5121 = vmul.f32 1.0, %v5120
  %v5123 = vrot.slane %v4885, 6
  %v5125 = vmul.f32 %v5114, %v5123
  %v5126 = vmul.f32 %v5108, %v5115
  %v5127 = vadd.f32 %v5125, %v5126
  %v5128 = vtanh.pop %v5127
  %v5129 = vmul.f32 %v5121, %v5128
  %v5131 = vrot.slane %v5004, 4
  %v5133 = vpack.c.bf16 %v5129, %v5129
  %v5134 = vpack.c.bf16 %v5131, %v5131
  %v5137 = vrot.slane %v5133, 2
  %v5138 = vrot.slane %v5134, 2
  %5141 = vmatprep.subr.bf16.mxu0 %v4530
  %5142 = vmatpush1.bf16.msra.mxu0 %v4529
  %5143 = vmatprep.subr.bf16.mxu0 %v4534
  %5144 = vmatpush1.bf16.msra.mxu0 %v4533
  %5145 = vmatprep.subr.bf16.mxu0 %v4538
  %5146 = vmatpush1.bf16.msra.mxu0 %v4537
  %5147 = vmatprep.subr.bf16.mxu0 %v4542
  %5148 = vmatpush1.bf16.msra.mxu0 %v4541
  %5149 = vmatprep.subr.bf16.mxu0 %v4546
  %5150 = vmatpush1.bf16.msra.mxu0 %v4545
  %5151 = vmatprep.subr.bf16.mxu0 %v4550
  %5152 = vmatpush1.bf16.msra.mxu0 %v4549
  %5153 = vmatprep.subr.bf16.mxu0 %v4554
  %5154 = vmatpush1.bf16.msra.mxu0 %v4553
  %5155 = vmatprep.subr.bf16.mxu0 %v4558
  %5156 = vmatpush1.bf16.msra.mxu0 %v4557
  %5157 = vmatprep.subr.bf16.mxu0 %v4562
  %5158 = vmatpush1.bf16.msra.mxu0 %v4561
  %5159 = vmatprep.subr.bf16.mxu0 %v4566
  %5160 = vmatpush1.bf16.msra.mxu0 %v4565
  %5161 = vmatprep.subr.bf16.mxu0 %v4570
  %5162 = vmatpush1.bf16.msra.mxu0 %v4569
  %5163 = vmatprep.subr.bf16.mxu0 %v4574
  %5164 = vmatpush1.bf16.msra.mxu0 %v4573
  %5165 = vmatprep.subr.bf16.mxu0 %v4578
  %5166 = vmatpush1.bf16.msra.mxu0 %v4577
  %5167 = vmatprep.subr.bf16.mxu0 %v4582
  %5168 = vmatpush1.bf16.msra.mxu0 %v4581
  %5169 = vmatprep.subr.bf16.mxu0 %v4586
  %5170 = vmatpush1.bf16.msra.mxu0 %v4585
  %5171 = vmatprep.subr.bf16.mxu0 %v4590
  %5172 = vmatpush1.bf16.msra.mxu0 %v4589
  %5173 = vmatprep.mubr.bf16.mxu0 %v5138
  %5174 = vmatmul.mubr.bf16.gmra.mrb[0].mxu0 %v5137
  %v5175 = vpop.f32.mrb[0].mxu0
  %v5176 = vadd.f32 %v4320, %v5175
  %v5177 = vpop.f32.mrb[0].mxu0
  %v5178 = vadd.f32 %v4324, %v5177
  %v5179 = vpop.f32.mrb[0].mxu0
  %v5180 = vpop.f32.mrb[0].mxu0
  %5181 = vdwg.mxu0
  %5182 = vmatprep.subr.bf16.mxu0 %v4532
  %5183 = vmatpush1.bf16.msra.mxu0 %v4531
  %5184 = vmatprep.subr.bf16.mxu0 %v4536
  %5185 = vmatpush1.bf16.msra.mxu0 %v4535
  %5186 = vmatprep.subr.bf16.mxu0 %v4540
  %5187 = vmatpush1.bf16.msra.mxu0 %v4539
  %5188 = vmatprep.subr.bf16.mxu0 %v4544
  %5189 = vmatpush1.bf16.msra.mxu0 %v4543
  %5190 = vmatprep.subr.bf16.mxu0 %v4548
  %5191 = vmatpush1.bf16.msra.mxu0 %v4547
  %5192 = vmatprep.subr.bf16.mxu0 %v4552
  %5193 = vmatpush1.bf16.msra.mxu0 %v4551
  %5194 = vmatprep.subr.bf16.mxu0 %v4556
  %5195 = vmatpush1.bf16.msra.mxu0 %v4555
  %5196 = vmatprep.subr.bf16.mxu0 %v4560
  %5197 = vmatpush1.bf16.msra.mxu0 %v4559
  %5198 = vmatprep.subr.bf16.mxu0 %v4564
  %5199 = vmatpush1.bf16.msra.mxu0 %v4563
  %5200 = vmatprep.subr.bf16.mxu0 %v4568
  %5201 = vmatpush1.bf16.msra.mxu0 %v4567
  %5202 = vmatprep.subr.bf16.mxu0 %v4572
  %5203 = vmatpush1.bf16.msra.mxu0 %v4571
  %5204 = vmatprep.subr.bf16.mxu0 %v4576
  %5205 = vmatpush1.bf16.msra.mxu0 %v4575
  %5206 = vmatprep.subr.bf16.mxu0 %v4580
  %5207 = vmatpush1.bf16.msra.mxu0 %v4579
  %5208 = vmatprep.subr.bf16.mxu0 %v4584
  %5209 = vmatpush1.bf16.msra.mxu0 %v4583
  %5210 = vmatprep.subr.bf16.mxu0 %v4588
  %5211 = vmatpush1.bf16.msra.mxu0 %v4587
  %5212 = vmatprep.subr.bf16.mxu0 %v4592
  %5213 = vmatpush1.bf16.msra.mxu0 %v4591
  %5214 = vmatprep.mubr.bf16.mxu0 %v5138
  %5215 = vmatmul.mubr.bf16.gmra.mrb[0].mxu0 %v5137
  %v5216 = vpop.f32.mrb[0].mxu0
  %v5217 = vadd.f32 %v4328, %v5216
  %v5218 = vpop.f32.mrb[0].mxu0
  %v5219 = vadd.f32 %v4332, %v5218
  %v5220 = vpop.f32.mrb[0].mxu0
  %v5221 = vpop.f32.mrb[0].mxu0
  %5222 = vdwg.mxu0
  %v5223 = vxor.u32 %v5176, 2147483648
  %v5224 = vmul.f32 %v5223, 1.442695
  %v5225 = vpow.pop %v5224
  %v5226 = vadd.f32 %v5225, 1.0
  %v5227 = vrcp.pop %v5226
  %v5228 = vmul.f32 1.0, %v5227
  %v5229 = vxor.u32 %v5178, 2147483648
  %v5230 = vmul.f32 %v5229, 1.442695
  %v5231 = vpow.pop %v5230
  %v5232 = vadd.f32 %v5231, 1.0
  %v5233 = vrcp.pop %v5232
  %v5234 = vmul.f32 1.0, %v5233
  %v5235 = vtanh.pop %v5217
  %v5236 = vxor.u32 %v5219, 2147483648
  %v5237 = vmul.f32 %v5236, 1.442695
  %v5238 = vpow.pop %v5237
  %v5239 = vadd.f32 %v5238, 1.0
  %v5240 = vrcp.pop %v5239
  %v5241 = vmul.f32 1.0, %v5240
  %v5242 = vmul.f32 %v5234, %v5002
  %v5243 = vmul.f32 %v5228, %v5235
  %v5244 = vadd.f32 %v5242, %v5243
  %v5245 = vtanh.pop %v5244
  %v5246 = vmul.f32 %v5241, %v5245
  %5247 = vmatprep.subr.bf16.mxu0 %v4141
  %5248 = vmatpush1.bf16.msra.mxu0 %v4140
  %5249 = vmatprep.subr.bf16.mxu0 %v4145
  %5250 = vmatpush1.bf16.msra.mxu0 %v4144
  %5251 = vmatprep.subr.bf16.mxu0 %v4149
  %5252 = vmatpush1.bf16.msra.mxu0 %v4148
  %5253 = vmatprep.subr.bf16.mxu0 %v4153
  %5254 = vmatpush1.bf16.msra.mxu0 %v4152
  %5255 = vmatprep.subr.bf16.mxu0 %v4157
  %5256 = vmatpush1.bf16.msra.mxu0 %v4156
  %5257 = vmatprep.subr.bf16.mxu0 %v4161
  %5258 = vmatpush1.bf16.msra.mxu0 %v4160
  %5259 = vmatprep.subr.bf16.mxu0 %v4165
  %5260 = vmatpush1.bf16.msra.mxu0 %v4164
  %5261 = vmatprep.subr.bf16.mxu0 %v4169
  %5262 = vmatpush1.bf16.msra.mxu0 %v4168
  %5263 = vmatprep.subr.bf16.mxu0 0
  %5264 = vmatpush1.bf16.msra.mxu0 0
  %5265 = vmatprep.subr.bf16.mxu0 0
  %5266 = vmatpush1.bf16.msra.mxu0 0
  %5267 = vmatprep.subr.bf16.mxu0 0
  %5268 = vmatpush1.bf16.msra.mxu0 0
  %5269 = vmatprep.subr.bf16.mxu0 0
  %5270 = vmatpush1.bf16.msra.mxu0 0
  %5271 = vmatprep.subr.bf16.mxu0 0
  %5272 = vmatpush1.bf16.msra.mxu0 0
  %5273 = vmatprep.subr.bf16.mxu0 0
  %5274 = vmatpush1.bf16.msra.mxu0 0
  %5275 = vmatprep.subr.bf16.mxu0 0
  %5276 = vmatpush1.bf16.msra.mxu0 0
  %5277 = vmatprep.subr.bf16.mxu0 0
  %5278 = vmatpush1.bf16.msra.mxu0 0
  %5279 = vmatprep.mubr.bf16.mxu0 0
  %5280 = vmatmul.mubr.bf16.gmra.mrb[0].mxu0 %v5137
  %v5281 = vpop.f32.mrb[0].mxu0
  %v5282 = vadd.f32 0.0, %v5281
  %v5283 = vpop.f32.mrb[0].mxu0
  %v5284 = vadd.f32 0.0, %v5283
  %v5285 = vpop.f32.mrb[0].mxu0
  %v5286 = vpop.f32.mrb[0].mxu0
  %5287 = vdwg.mxu0
  %5288 = vmatprep.subr.bf16.mxu0 %v4143
  %5289 = vmatpush1.bf16.msra.mxu0 %v4142
  %5290 = vmatprep.subr.bf16.mxu0 %v4147
  %5291 = vmatpush1.bf16.msra.mxu0 %v4146
  %5292 = vmatprep.subr.bf16.mxu0 %v4151
  %5293 = vmatpush1.bf16.msra.mxu0 %v4150
  %5294 = vmatprep.subr.bf16.mxu0 %v4155
  %5295 = vmatpush1.bf16.msra.mxu0 %v4154
  %5296 = vmatprep.subr.bf16.mxu0 %v4159
  %5297 = vmatpush1.bf16.msra.mxu0 %v4158
  %5298 = vmatprep.subr.bf16.mxu0 %v4163
  %5299 = vmatpush1.bf16.msra.mxu0 %v4162
  %5300 = vmatprep.subr.bf16.mxu0 %v4167
  %5301 = vmatpush1.bf16.msra.mxu0 %v4166
  %5302 = vmatprep.subr.bf16.mxu0 %v4171
  %5303 = vmatpush1.bf16.msra.mxu0 %v4170
  %5304 = vmatprep.subr.bf16.mxu0 0
  %5305 = vmatpush1.bf16.msra.mxu0 0
  %5306 = vmatprep.subr.bf16.mxu0 0
  %5307 = vmatpush1.bf16.msra.mxu0 0
  %5308 = vmatprep.subr.bf16.mxu0 0
  %5309 = vmatpush1.bf16.msra.mxu0 0
  %5310 = vmatprep.subr.bf16.mxu0 0
  %5311 = vmatpush1.bf16.msra.mxu0 0
  %5312 = vmatprep.subr.bf16.mxu0 0
  %5313 = vmatpush1.bf16.msra.mxu0 0
  %5314 = vmatprep.subr.bf16.mxu0 0
  %5315 = vmatpush1.bf16.msra.mxu0 0
  %5316 = vmatprep.subr.bf16.mxu0 0
  %5317 = vmatpush1.bf16.msra.mxu0 0
  %5318 = vmatprep.subr.bf16.mxu0 0
  %5319 = vmatpush1.bf16.msra.mxu0 0
  %5320 = vmatprep.mubr.bf16.mxu0 0
  %5321 = vmatmul.mubr.bf16.gmra.mrb[0].mxu0 %v5137
  %v5322 = vpop.f32.mrb[0].mxu0
  %v5323 = vadd.f32 0.0, %v5322
  %v5324 = vpop.f32.mrb[0].mxu0
  %v5325 = vadd.f32 0.0, %v5324
  %v5326 = vpop.f32.mrb[0].mxu0
  %v5327 = vpop.f32.mrb[0].mxu0
  %5328 = vdwg.mxu0
  %v5333 = vrot.slane %v5282, 2
  %v5334 = vrot.slane %v5284, 2
  %v5335 = vrot.slane %v5323, 2
  %v5336 = vrot.slane %v5325, 2
  %v5341 = vadd.f32 %v3900, %v5333
  %v5342 = vadd.f32 %v3902, %v5334
  %v5343 = vadd.f32 %v3941, %v5335
  %v5344 = vadd.f32 %v3943, %v5336
  %v5345 = vxor.u32 %v5341, 2147483648
  %v5346 = vmul.f32 %v5345, 1.442695
  %v5347 = vpow.pop %v5346
  %v5348 = vadd.f32 %v5347, 1.0
  %v5349 = vrcp.pop %v5348
  %v5350 = vmul.f32 1.0, %v5349
  %v5351 = vxor.u32 %v5342, 2147483648
  %v5352 = vmul.f32 %v5351, 1.442695
  %v5353 = vpow.pop %v5352
  %v5354 = vadd.f32 %v5353, 1.0
  %v5355 = vrcp.pop %v5354
  %v5356 = vmul.f32 1.0, %v5355
  %v5357 = vtanh.pop %v5343
  %v5358 = vxor.u32 %v5344, 2147483648
  %v5359 = vmul.f32 %v5358, 1.442695
  %v5360 = vpow.pop %v5359
  %v5361 = vadd.f32 %v5360, 1.0
  %v5362 = vrcp.pop %v5361
  %v5363 = vmul.f32 1.0, %v5362
  %v5365 = vrot.slane %v5127, 6
  %v5367 = vmul.f32 %v5356, %v5365
  %v5368 = vmul.f32 %v5350, %v5357
  %v5369 = vadd.f32 %v5367, %v5368
  %v5370 = vtanh.pop %v5369
  %v5371 = vmul.f32 %v5363, %v5370
  %v5373 = vrot.slane %v5246, 2
  %v5375 = vpack.c.bf16 %v5371, %v5371
  %v5376 = vpack.c.bf16 %v5373, %v5373
  %v5379 = vrot.slane %v5375, 3
  %v5380 = vrot.slane %v5376, 3
  %5383 = vmatprep.subr.bf16.mxu0 %v4530
  %5384 = vmatpush1.bf16.msra.mxu0 %v4529
  %5385 = vmatprep.subr.bf16.mxu0 %v4534
  %5386 = vmatpush1.bf16.msra.mxu0 %v4533
  %5387 = vmatprep.subr.bf16.mxu0 %v4538
  %5388 = vmatpush1.bf16.msra.mxu0 %v4537
  %5389 = vmatprep.subr.bf16.mxu0 %v4542
  %5390 = vmatpush1.bf16.msra.mxu0 %v4541
  %5391 = vmatprep.subr.bf16.mxu0 %v4546
  %5392 = vmatpush1.bf16.msra.mxu0 %v4545
  %5393 = vmatprep.subr.bf16.mxu0 %v4550
  %5394 = vmatpush1.bf16.msra.mxu0 %v4549
  %5395 = vmatprep.subr.bf16.mxu0 %v4554
  %5396 = vmatpush1.bf16.msra.mxu0 %v4553
  %5397 = vmatprep.subr.bf16.mxu0 %v4558
  %5398 = vmatpush1.bf16.msra.mxu0 %v4557
  %5399 = vmatprep.subr.bf16.mxu0 %v4562
  %5400 = vmatpush1.bf16.msra.mxu0 %v4561
  %5401 = vmatprep.subr.bf16.mxu0 %v4566
  %5402 = vmatpush1.bf16.msra.mxu0 %v4565
  %5403 = vmatprep.subr.bf16.mxu0 %v4570
  %5404 = vmatpush1.bf16.msra.mxu0 %v4569
  %5405 = vmatprep.subr.bf16.mxu0 %v4574
  %5406 = vmatpush1.bf16.msra.mxu0 %v4573
  %5407 = vmatprep.subr.bf16.mxu0 %v4578
  %5408 = vmatpush1.bf16.msra.mxu0 %v4577
  %5409 = vmatprep.subr.bf16.mxu0 %v4582
  %5410 = vmatpush1.bf16.msra.mxu0 %v4581
  %5411 = vmatprep.subr.bf16.mxu0 %v4586
  %5412 = vmatpush1.bf16.msra.mxu0 %v4585
  %5413 = vmatprep.subr.bf16.mxu0 %v4590
  %5414 = vmatpush1.bf16.msra.mxu0 %v4589
  %5415 = vmatprep.mubr.bf16.mxu0 %v5380
  %5416 = vmatmul.mubr.bf16.gmra.mrb[0].mxu0 %v5379
  %v5417 = vpop.f32.mrb[0].mxu0
  %v5418 = vadd.f32 %v4320, %v5417
  %v5419 = vpop.f32.mrb[0].mxu0
  %v5420 = vadd.f32 %v4324, %v5419
  %v5421 = vpop.f32.mrb[0].mxu0
  %v5422 = vpop.f32.mrb[0].mxu0
  %5423 = vdwg.mxu0
  %5424 = vmatprep.subr.bf16.mxu0 %v4532
  %5425 = vmatpush1.bf16.msra.mxu0 %v4531
  %5426 = vmatprep.subr.bf16.mxu0 %v4536
  %5427 = vmatpush1.bf16.msra.mxu0 %v4535
  %5428 = vmatprep.subr.bf16.mxu0 %v4540
  %5429 = vmatpush1.bf16.msra.mxu0 %v4539
  %5430 = vmatprep.subr.bf16.mxu0 %v4544
  %5431 = vmatpush1.bf16.msra.mxu0 %v4543
  %5432 = vmatprep.subr.bf16.mxu0 %v4548
  %5433 = vmatpush1.bf16.msra.mxu0 %v4547
  %5434 = vmatprep.subr.bf16.mxu0 %v4552
  %5435 = vmatpush1.bf16.msra.mxu0 %v4551
  %5436 = vmatprep.subr.bf16.mxu0 %v4556
  %5437 = vmatpush1.bf16.msra.mxu0 %v4555
  %5438 = vmatprep.subr.bf16.mxu0 %v4560
  %5439 = vmatpush1.bf16.msra.mxu0 %v4559
  %5440 = vmatprep.subr.bf16.mxu0 %v4564
  %5441 = vmatpush1.bf16.msra.mxu0 %v4563
  %5442 = vmatprep.subr.bf16.mxu0 %v4568
  %5443 = vmatpush1.bf16.msra.mxu0 %v4567
  %5444 = vmatprep.subr.bf16.mxu0 %v4572
  %5445 = vmatpush1.bf16.msra.mxu0 %v4571
  %5446 = vmatprep.subr.bf16.mxu0 %v4576
  %5447 = vmatpush1.bf16.msra.mxu0 %v4575
  %5448 = vmatprep.subr.bf16.mxu0 %v4580
  %5449 = vmatpush1.bf16.msra.mxu0 %v4579
  %5450 = vmatprep.subr.bf16.mxu0 %v4584
  %5451 = vmatpush1.bf16.msra.mxu0 %v4583
  %5452 = vmatprep.subr.bf16.mxu0 %v4588
  %5453 = vmatpush1.bf16.msra.mxu0 %v4587
  %5454 = vmatprep.subr.bf16.mxu0 %v4592
  %5455 = vmatpush1.bf16.msra.mxu0 %v4591
  %5456 = vmatprep.mubr.bf16.mxu0 %v5380
  %5457 = vmatmul.mubr.bf16.gmra.mrb[0].mxu0 %v5379
  %v5458 = vpop.f32.mrb[0].mxu0
  %v5459 = vadd.f32 %v4328, %v5458
  %v5460 = vpop.f32.mrb[0].mxu0
  %v5461 = vadd.f32 %v4332, %v5460
  %v5462 = vpop.f32.mrb[0].mxu0
  %v5463 = vpop.f32.mrb[0].mxu0
  %5464 = vdwg.mxu0
  %v5465 = vxor.u32 %v5418, 2147483648
  %v5466 = vmul.f32 %v5465, 1.442695
  %v5467 = vpow.pop %v5466
  %v5468 = vadd.f32 %v5467, 1.0
  %v5469 = vrcp.pop %v5468
  %v5470 = vmul.f32 1.0, %v5469
  %v5471 = vxor.u32 %v5420, 2147483648
  %v5472 = vmul.f32 %v5471, 1.442695
  %v5473 = vpow.pop %v5472
  %v5474 = vadd.f32 %v5473, 1.0
  %v5475 = vrcp.pop %v5474
  %v5476 = vmul.f32 1.0, %v5475
  %v5477 = vtanh.pop %v5459
  %v5478 = vxor.u32 %v5461, 2147483648
  %v5479 = vmul.f32 %v5478, 1.442695
  %v5480 = vpow.pop %v5479
  %v5481 = vadd.f32 %v5480, 1.0
  %v5482 = vrcp.pop %v5481
  %v5483 = vmul.f32 1.0, %v5482
  %v5484 = vmul.f32 %v5476, %v5244
  %v5485 = vmul.f32 %v5470, %v5477
  %v5486 = vadd.f32 %v5484, %v5485
  %v5487 = vtanh.pop %v5486
  %v5488 = vmul.f32 %v5483, %v5487
  %v5489 = vpack.c.bf16 %v5488, %v5488
  %v5490 = vld [vmem:[%s10] sm:$0xf]
  %v5491 = vld [vmem:[%s10 + $0x4] sm:$0xf]
  %v5492 = vld [vmem:[%s10 + $0x8] sm:$0xf]
  %v5493 = vld [vmem:[%s10 + $0xc] sm:$0xf]
  %v5494 = vld [vmem:[%s10 + $0x10] sm:$0xf]
  %v5495 = vld [vmem:[%s10 + $0x14] sm:$0xf]
  %v5496 = vld [vmem:[%s10 + $0x18] sm:$0xf]
  %v5497 = vld [vmem:[%s10 + $0x1c] sm:$0xf]
  %v5498 = vld [vmem:[%s10 + $0x20] sm:$0xf]
  %v5499 = vld [vmem:[%s10 + $0x24] sm:$0xf]
  %v5500 = vld [vmem:[%s10 + $0x28] sm:$0xf]
  %v5501 = vld [vmem:[%s10 + $0x2c] sm:$0xf]
  %v5502 = vld [vmem:[%s10 + $0x30] sm:$0xf]
  %v5503 = vld [vmem:[%s10 + $0x34] sm:$0xf]
  %v5504 = vld [vmem:[%s10 + $0x38] sm:$0xf]
  %v5505 = vld [vmem:[%s10 + $0x3c] sm:$0xf]
  %v5506 = vld [vmem:[%s11] sm:$0x1]
  %v5508 = vlaneseq
  %v5509 = vshrl.u32 %v5508, 7
  %v5510 = vsub.s32 0, %v5509
  %v5511 = vrot.slane %v5506, %v5510
  %v5529 = vunpack.c.l.b16 %v5490
  %v5530 = vunpack.c.l.b16 %v5491
  %v5531 = vunpack.c.l.b16 %v5492
  %v5532 = vunpack.c.l.b16 %v5493
  %v5533 = vunpack.c.l.b16 %v5494
  %v5534 = vunpack.c.l.b16 %v5495
  %v5535 = vunpack.c.l.b16 %v5496
  %v5536 = vunpack.c.l.b16 %v5497
  %v5537 = vunpack.c.l.b16 %v5498
  %v5538 = vunpack.c.l.b16 %v5499
  %v5539 = vunpack.c.l.b16 %v5500
  %v5540 = vunpack.c.l.b16 %v5501
  %v5541 = vunpack.c.l.b16 %v5502
  %v5542 = vunpack.c.l.b16 %v5503
  %v5543 = vunpack.c.l.b16 %v5504
  %v5544 = vunpack.c.l.b16 %v5505
  %v5545 = vpack.c.b16 %v5530, %v5529
  %v5546 = vpack.c.b16 %v5532, %v5531
  %v5547 = vpack.c.b16 %v5534, %v5533
  %v5548 = vpack.c.b16 %v5536, %v5535
  %v5549 = vpack.c.b16 %v5538, %v5537
  %v5550 = vpack.c.b16 %v5540, %v5539
  %v5551 = vpack.c.b16 %v5542, %v5541
  %v5552 = vpack.c.b16 %v5544, %v5543
  %5561 = vmatprep.subr.bf16.mxu0 0
  %5562 = vmatpush1.bf16.msra.mxu0 %v5545
  %5563 = vmatprep.subr.bf16.mxu0 0
  %5564 = vmatpush1.bf16.msra.mxu0 %v5546
  %5565 = vmatprep.subr.bf16.mxu0 0
  %5566 = vmatpush1.bf16.msra.mxu0 %v5547
  %5567 = vmatprep.subr.bf16.mxu0 0
  %5568 = vmatpush1.bf16.msra.mxu0 %v5548
  %5569 = vmatprep.subr.bf16.mxu0 0
  %5570 = vmatpush1.bf16.msra.mxu0 %v5549
  %5571 = vmatprep.subr.bf16.mxu0 0
  %5572 = vmatpush1.bf16.msra.mxu0 %v5550
  %5573 = vmatprep.subr.bf16.mxu0 0
  %5574 = vmatpush1.bf16.msra.mxu0 %v5551
  %5575 = vmatprep.subr.bf16.mxu0 0
  %5576 = vmatpush1.bf16.msra.mxu0 %v5552
  %5577 = vmatprep.subr.bf16.mxu0 0
  %5578 = vmatpush1.bf16.msra.mxu0 0
  %5579 = vmatprep.subr.bf16.mxu0 0
  %5580 = vmatpush1.bf16.msra.mxu0 0
  %5581 = vmatprep.subr.bf16.mxu0 0
  %5582 = vmatpush1.bf16.msra.mxu0 0
  %5583 = vmatprep.subr.bf16.mxu0 0
  %5584 = vmatpush1.bf16.msra.mxu0 0
  %5585 = vmatprep.subr.bf16.mxu0 0
  %5586 = vmatpush1.bf16.msra.mxu0 0
  %5587 = vmatprep.subr.bf16.mxu0 0
  %5588 = vmatpush1.bf16.msra.mxu0 0
  %5589 = vmatprep.subr.bf16.mxu0 0
  %5590 = vmatpush1.bf16.msra.mxu0 0
  %5591 = vmatprep.subr.bf16.mxu0 0
  %5592 = vmatpush1.bf16.msra.mxu0 0
  %5593 = vmatprep.mubr.bf16.mxu0 0
  %5594 = vmatmul.mubr.bf16.gmra.mrb[0].mxu0 %v5489
  %v5595 = vpop.f32.mrb[0].mxu0
  %v5596 = vadd.f32 %v5511, %v5595
  %v5597 = vpop.f32.mrb[0].mxu0
  %v5598 = vpop.f32.mrb[0].mxu0
  %v5599 = vpop.f32.mrb[0].mxu0
  %5600 = vdwg.mxu0
  %v5601 = vmax.f32 %v5596, 0.0
  %v5602 = vpack.c.bf16 %v5601, %v5601
  %v5603 = vld [vmem:[%s12] sm:$0xf]
  %v5604 = vld [vmem:[%s12 + $0x4] sm:$0xf]
  %v5605 = vld [vmem:[%s12 + $0x8] sm:$0xf]
  %v5606 = vld [vmem:[%s12 + $0xc] sm:$0xf]
  %v5607 = vld [vmem:[%s12 + $0x10] sm:$0xf]
  %v5608 = vld [vmem:[%s12 + $0x14] sm:$0xf]
  %v5609 = vld [vmem:[%s12 + $0x18] sm:$0xf]
  %v5610 = vld [vmem:[%s12 + $0x1c] sm:$0xf]
  %v5611 = vld [vmem:[%s12 + $0x20] sm:$0xf]
  %v5612 = vld [vmem:[%s12 + $0x24] sm:$0xf]
  %v5613 = vld [vmem:[%s12 + $0x28] sm:$0xf]
  %v5614 = vld [vmem:[%s12 + $0x2c] sm:$0xf]
  %v5615 = vld [vmem:[%s12 + $0x30] sm:$0xf]
  %v5616 = vld [vmem:[%s12 + $0x34] sm:$0xf]
  %v5617 = vld [vmem:[%s12 + $0x38] sm:$0xf]
  %v5618 = vld [vmem:[%s12 + $0x3c] sm:$0xf]
  %v5619 = vld [vmem:[%s13] sm:$0x1]
  %v5621 = vlaneseq
  %v5622 = vshrl.u32 %v5621, 7
  %v5623 = vsub.s32 0, %v5622
  %v5624 = vrot.slane %v5619, %v5623
  %v5642 = vunpack.c.l.b16 %v5603
  %v5643 = vunpack.c.l.b16 %v5604
  %v5644 = vunpack.c.l.b16 %v5605
  %v5645 = vunpack.c.l.b16 %v5606
  %v5646 = vunpack.c.l.b16 %v5607
  %v5647 = vunpack.c.l.b16 %v5608
  %v5648 = vunpack.c.l.b16 %v5609
  %v5649 = vunpack.c.l.b16 %v5610
  %v5650 = vunpack.c.l.b16 %v5611
  %v5651 = vunpack.c.l.b16 %v5612
  %v5652 = vunpack.c.l.b16 %v5613
  %v5653 = vunpack.c.l.b16 %v5614
  %v5654 = vunpack.c.l.b16 %v5615
  %v5655 = vunpack.c.l.b16 %v5616
  %v5656 = vunpack.c.l.b16 %v5617
  %v5657 = vunpack.c.l.b16 %v5618
  %v5658 = vpack.c.b16 %v5643, %v5642
  %v5659 = vpack.c.b16 %v5645, %v5644
  %v5660 = vpack.c.b16 %v5647, %v5646
  %v5661 = vpack.c.b16 %v5649, %v5648
  %v5662 = vpack.c.b16 %v5651, %v5650
  %v5663 = vpack.c.b16 %v5653, %v5652
  %v5664 = vpack.c.b16 %v5655, %v5654
  %v5665 = vpack.c.b16 %v5657, %v5656
  %5674 = vmatprep.subr.bf16.mxu0 0
  %5675 = vmatpush1.bf16.msra.mxu0 %v5658
  %5676 = vmatprep.subr.bf16.mxu0 0
  %5677 = vmatpush1.bf16.msra.mxu0 %v5659
  %5678 = vmatprep.subr.bf16.mxu0 0
  %5679 = vmatpush1.bf16.msra.mxu0 %v5660
  %5680 = vmatprep.subr.bf16.mxu0 0
  %5681 = vmatpush1.bf16.msra.mxu0 %v5661
  %5682 = vmatprep.subr.bf16.mxu0 0
  %5683 = vmatpush1.bf16.msra.mxu0 %v5662
  %5684 = vmatprep.subr.bf16.mxu0 0
  %5685 = vmatpush1.bf16.msra.mxu0 %v5663
  %5686 = vmatprep.subr.bf16.mxu0 0
  %5687 = vmatpush1.bf16.msra.mxu0 %v5664
  %5688 = vmatprep.subr.bf16.mxu0 0
  %5689 = vmatpush1.bf16.msra.mxu0 %v5665
  %5690 = vmatprep.subr.bf16.mxu0 0
  %5691 = vmatpush1.bf16.msra.mxu0 0
  %5692 = vmatprep.subr.bf16.mxu0 0
  %5693 = vmatpush1.bf16.msra.mxu0 0
  %5694 = vmatprep.subr.bf16.mxu0 0
  %5695 = vmatpush1.bf16.msra.mxu0 0
  %5696 = vmatprep.subr.bf16.mxu0 0
  %5697 = vmatpush1.bf16.msra.mxu0 0
  %5698 = vmatprep.subr.bf16.mxu0 0
  %5699 = vmatpush1.bf16.msra.mxu0 0
  %5700 = vmatprep.subr.bf16.mxu0 0
  %5701 = vmatpush1.bf16.msra.mxu0 0
  %5702 = vmatprep.subr.bf16.mxu0 0
  %5703 = vmatpush1.bf16.msra.mxu0 0
  %5704 = vmatprep.subr.bf16.mxu0 0
  %5705 = vmatpush1.bf16.msra.mxu0 0
  %5706 = vmatprep.mubr.bf16.mxu0 0
  %5707 = vmatmul.mubr.bf16.gmra.mrb[0].mxu0 %v5602
  %v5708 = vpop.f32.mrb[0].mxu0
  %v5709 = vadd.f32 %v5624, %v5708
  %v5710 = vpop.f32.mrb[0].mxu0
  %v5711 = vpop.f32.mrb[0].mxu0
  %v5712 = vpop.f32.mrb[0].mxu0
  %5713 = vdwg.mxu0
  %5714 = vst [vmem:[%s14] sm:$0x3] %v5709
  // Predicated region
  $region58: #{forward.1} parent=0 // pred_check
    _
  $region59: #{forward.1} parent=0 // pred_check_branch
    %5716 = sbr.rel (0) target = $region61
  $region60: #{forward.1} parent=0 // pred_region
    _
  $region61: #{forward.1} parent=0 // pred_fallthru
    _
  // Predicated region
  $region62: #{forward.1} parent=0 // pred_check
    _
  $region63: #{forward.1} parent=0 // pred_check_branch
    %5718 = sbr.rel (0) target = $region65
  $region64: #{forward.1} parent=0 // pred_region
    _
  $region65: #{forward.1} parent=0 // pred_fallthru
    _

</llo_original>
